<compile_context>
chip_gen: v6e
topology: v6e:2x2x1
jax: 0.10.0
libtpu: 0.0.40
codegen_flags: <defaults>
</compile_context>

<pallas_src>
import functools

import jax
import jax.numpy as jnp
from jax.experimental import pallas as pl
from jax.experimental.pallas import tpu as pltpu

BATCH_SIZE = 1
LATENT_DIM = 5      # encoder nn2 emits 5 features; decoder latent_dim matches
HIDDEN = 100        # true feature width of every hidden layer
PAD = 128           # lane-padded feature width
IN_PAD = 8          # padded width of the concatenated (x, pos) input
LN_EPS = 1e-5


# --------------------------------------------------------------------------
# Kernel
# --------------------------------------------------------------------------
def _ae_kernel(xp_ref, w_in_ref, w_sq_ref, vec_ref,      # inputs
               recon_ref, latent_ref,                    # outputs
               acc_ref, latb_ref,                        # VMEM scratch
               *, n_points, tile_n):
    phase = pl.program_id(0)          # 0 = encoder pass, 1 = decoder pass
    tile = pl.program_id(1)
    n_tiles = pl.num_programs(1)

    lane_idx = jax.lax.broadcasted_iota(jnp.int32, (1, PAD), 1)
    lane_mask = (lane_idx < HIDDEN).astype(jnp.float32)
    inv_h = 1.0 / HIDDEN

    def layernorm(h, g, b):
        # PyTorch nn.LayerNorm over the real 100 features (padded lanes of h
        # are exactly zero, so sum over 128 lanes == sum over 100).
        mu = jnp.sum(h, axis=-1, keepdims=True) * inv_h
        diff = (h - mu) * lane_mask                      # drop padded lanes
        var = jnp.sum(diff * diff, axis=-1, keepdims=True) * inv_h
        # gamma/beta are zero on padded lanes -> output padded lanes stay 0.
        return (h - mu) * jax.lax.rsqrt(var + LN_EPS) * g + b

    # ------------------------- phase 0: encoder --------------------------
    @pl.when(phase == 0)
    def _encoder():
        @pl.when(tile == 0)
        def _init():
            acc_ref[...] = jnp.zeros_like(acc_ref)

        V = vec_ref[...]                                  # (24, 128)
        xp = xp_ref[...]                                  # (tile_n, 8)

        h = jnp.dot(xp, w_in_ref[0], preferred_element_type=jnp.float32) + V[0:1]
        h = jnp.maximum(layernorm(h, V[1:2], V[2:3]), 0.0)
        h = jnp.dot(h, w_sq_ref[0], preferred_element_type=jnp.float32) + V[3:4]
        h = jnp.maximum(layernorm(h, V[4:5], V[5:6]), 0.0)
        h = jnp.dot(h, w_sq_ref[1], preferred_element_type=jnp.float32) + V[6:7]

        # Masked partial sum over points via a (1, tile_n) @ (tile_n, 128)
        # matmul on the MXU; the mask also excludes zero-padded rows.
        row_idx = jax.lax.broadcasted_iota(jnp.int32, (1, tile_n), 1) + tile * tile_n
        row_mask = (row_idx < n_points).astype(jnp.float32)
        acc_ref[...] += jnp.dot(row_mask, h, preferred_element_type=jnp.float32)

        # Tiny nn2 branch: only on the last encoder tile, on the (1,128) mean.
        @pl.when(tile == n_tiles - 1)
        def _nn2():
            z = acc_ref[...] * (1.0 / n_points)           # point mean, (1, 128)
            z = jnp.dot(z, w_sq_ref[2], preferred_element_type=jnp.float32) + V[7:8]
            z = jnp.maximum(layernorm(z, V[8:9], V[9:10]), 0.0)
            z = jnp.dot(z, w_sq_ref[3], preferred_element_type=jnp.float32) + V[10:11]
            z = jnp.maximum(layernorm(z, V[11:12], V[12:13]), 0.0)
            z = jnp.dot(z, w_sq_ref[4], preferred_element_type=jnp.float32) + V[13:14]
            latent_ref[...] = z                            # lanes 5..127 are 0
            # Fold the latent into the decoder's first-layer bias:
            #   lat_bias = z @ W_d1[latent rows] + b_d1
            latb_ref[...] = (jnp.dot(z, w_sq_ref[5],
                                     preferred_element_type=jnp.float32) + V[14:15])

    # ------------------------- phase 1: decoder --------------------------
    @pl.when(phase == 1)
    def _decoder():
        V = vec_ref[...]
        xp = xp_ref[...]                                  # (tile_n, 8)

        # pos @ W_d1[pos rows] + (latent-folded bias)
        d = jnp.dot(xp, w_in_ref[1], preferred_element_type=jnp.float32) + latb_ref[...]
        d = jnp.maximum(layernorm(d, V[15:16], V[16:17]), 0.0)
        d = jnp.dot(d, w_sq_ref[6], preferred_element_type=jnp.float32) + V[17:18]
        d = jnp.maximum(layernorm(d, V[18:19], V[19:20]), 0.0)
        d = jnp.dot(d, w_sq_ref[7], preferred_element_type=jnp.float32) + V[20:21]
        recon_ref[...] = d[:, :3]


# --------------------------------------------------------------------------
# Parameters (raw, PyTorch-layout) and packing into padded slabs
# --------------------------------------------------------------------------
def init_raw_params(key):
    """Deterministic synthetic parameters; Linear weights stored (in, out)."""
    def lin(k, fin, fout, scale=0.1):
        kw, kb = jax.random.split(k)
        return (scale * jax.random.normal(kw, (fin, fout), jnp.float32),
                scale * jax.random.normal(kb, (fout,), jnp.float32))

    def ln(k, f):
        kg, kb = jax.random.split(k)
        return (1.0 + 0.1 * jax.random.normal(kg, (f,), jnp.float32),
                0.1 * jax.random.normal(kb, (f,), jnp.float32))

    ks = jax.random.split(key, 16)
    p = {}
    # encoder nn1: Linear(6,100) LN ReLU Linear(100,100) LN ReLU Linear(100,100)
    p['e1w'], p['e1b'] = lin(ks[0], 6, HIDDEN)
    p['e1g'], p['e1be'] = ln(ks[1], HIDDEN)
    p['e2w'], p['e2b'] = lin(ks[2], HIDDEN, HIDDEN)
    p['e2g'], p['e2be'] = ln(ks[3], HIDDEN)
    p['e3w'], p['e3b'] = lin(ks[4], HIDDEN, HIDDEN)
    # encoder nn2: Linear(100,100) LN ReLU Linear(100,100) LN ReLU Linear(100,5)
    p['f1w'], p['f1b'] = lin(ks[5], HIDDEN, HIDDEN)
    p['f1g'], p['f1be'] = ln(ks[6], HIDDEN)
    p['f2w'], p['f2b'] = lin(ks[7], HIDDEN, HIDDEN)
    p['f2g'], p['f2be'] = ln(ks[8], HIDDEN)
    p['f3w'], p['f3b'] = lin(ks[9], HIDDEN, LATENT_DIM)
    # decoder: Linear(3+latent,100) LN ReLU Linear(100,100) LN ReLU Linear(100,3)
    p['d1w'], p['d1b'] = lin(ks[10], 3 + LATENT_DIM, HIDDEN)
    p['d1g'], p['d1be'] = ln(ks[11], HIDDEN)
    p['d2w'], p['d2b'] = lin(ks[12], HIDDEN, HIDDEN)
    p['d2g'], p['d2be'] = ln(ks[13], HIDDEN)
    p['d3w'], p['d3b'] = lin(ks[14], HIDDEN, 3)
    return p


def pack_params(p):
    """Pack the 30 raw tensors into 3 lane-padded slabs for the kernel."""
    def pad2(w):
        out = jnp.zeros((PAD, PAD), jnp.float32)
        return out.at[: w.shape[0], : w.shape[1]].set(w)

    def pad1(v):
        out = jnp.zeros((PAD,), jnp.float32)
        return out.at[: v.shape[0]].set(v)

    # First-layer weights act on the packed input xp = [x(0:3), pos(3:6), 0, 0].
    w_in = jnp.zeros((2, IN_PAD, PAD), jnp.float32)
    w_in = w_in.at[0, :6, :HIDDEN].set(p['e1w'])                       # encoder L1
    w_in = w_in.at[1, 3:6, :HIDDEN].set(p['d1w'][LATENT_DIM:, :])      # decoder L1 (pos part)

    w_sq = jnp.stack([
        pad2(p['e2w']), pad2(p['e3w']),                  # 0,1 encoder nn1
        pad2(p['f1w']), pad2(p['f2w']), pad2(p['f3w']),  # 2,3,4 encoder nn2
        pad2(p['d1w'][:LATENT_DIM, :]),                  # 5   decoder L1 (latent part)
        pad2(p['d2w']), pad2(p['d3w']),                  # 6,7 decoder
    ])

    vec_rows = [
        p['e1b'], p['e1g'], p['e1be'],      # 0-2
        p['e2b'], p['e2g'], p['e2be'],      # 3-5
        p['e3b'],                           # 6
        p['f1b'], p['f1g'], p['f1be'],      # 7-9
        p['f2b'], p['f2g'], p['f2be'],      # 10-12
        p['f3b'],                           # 13
        p['d1b'], p['d1g'], p['d1be'],      # 14-16
        p['d2b'], p['d2g'], p['d2be'],      # 17-19
        p['d3b'],                           # 20
    ]
    vecs = jnp.stack([pad1(v) for v in vec_rows]
                     + [jnp.zeros((PAD,), jnp.float32)] * 3)           # (24, 128)
    return w_in, w_sq, vecs


# --------------------------------------------------------------------------
# Wrapper
# --------------------------------------------------------------------------
@functools.partial(jax.jit, static_argnames=("tile_n",))
def autoencoder_forward(x, pos, w_in, w_sq, vecs, *, tile_n=256):
    """x, pos: (B, N, 3), B == 1. Returns (recon (B,N,3), latent (B,5))."""
    B, N, _ = x.shape
    assert B == BATCH_SIZE
    n_tiles = int(pl.cdiv(N, tile_n))
    n_pad = n_tiles * tile_n

    # Single packed, row-padded input: [x | pos | 0 0]  -> (N_pad, 8)
    xp = jnp.zeros((n_pad, IN_PAD), jnp.float32)
    xp = xp.at[:N, 0:3].set(x.reshape(N, 3))
    xp = xp.at[:N, 3:6].set(pos.reshape(N, 3))

    kernel = functools.partial(_ae_kernel, n_points=N, tile_n=tile_n)

    recon_pad, latent_pad = pl.pallas_call(
        kernel,
        out_shape=(
            jax.ShapeDtypeStruct((n_pad, 3), jnp.float32),
            jax.ShapeDtypeStruct((1, PAD), jnp.float32),
        ),
        grid_spec=pltpu.PrefetchScalarGridSpec(
            num_scalar_prefetch=0,
            grid=(2, n_tiles),                            # (phase, N-tile)
            in_specs=[
                pl.BlockSpec((tile_n, IN_PAD), lambda p, i: (i, 0)),
                pl.BlockSpec((2, IN_PAD, PAD), lambda p, i: (0, 0, 0)),   # resident
                pl.BlockSpec((8, PAD, PAD),   lambda p, i: (0, 0, 0)),    # resident
                pl.BlockSpec((24, PAD),       lambda p, i: (0, 0)),       # resident
            ],
            out_specs=(
                # Parked on block 0 through the encoder phase (p=0), streams
                # over tiles during the decoder phase (p=1).
                pl.BlockSpec((tile_n, 3), lambda p, i: (i * p, 0)),
                pl.BlockSpec((1, PAD),    lambda p, i: (0, 0)),
            ),
            scratch_shapes=[
                pltpu.VMEM((1, PAD), jnp.float32),   # running point-sum of nn1 output
                pltpu.VMEM((1, PAD), jnp.float32),   # latent-folded decoder L1 bias
            ],
        ),
        compiler_params=pltpu.CompilerParams(
            # phase axis is a hard dependency (decoder needs the latent);
            # tile axis carries the mean accumulator -> both sequential.
            dimension_semantics=("arbitrary", "arbitrary"),
            vmem_limit_bytes=32 * 1024 * 1024,
        ),
    )(xp, w_in, w_sq, vecs)

    recon = recon_pad[:N].reshape(B, N, 3)
    latent = latent_pad[:, :LATENT_DIM]
    return recon, latent


# --------------------------------------------------------------------------
# Pure-JAX reference (mirrors the PyTorch module semantics exactly)
# --------------------------------------------------------------------------
def _layernorm_ref(h, g, b, eps=LN_EPS):
    mu = jnp.mean(h, axis=-1, keepdims=True)
    var = jnp.mean((h - mu) ** 2, axis=-1, keepdims=True)
    return (h - mu) * jax.lax.rsqrt(var + eps) * g + b


def reference_forward(x, pos, p):
    B, N, _ = x.shape
    h = jnp.concatenate([x, pos], axis=2).reshape(-1, 6)
    h = jnp.maximum(_layernorm_ref(h @ p['e1w'] + p['e1b'], p['e1g'], p['e1be']), 0.0)
    h = jnp.maximum(_layernorm_ref(h @ p['e2w'] + p['e2b'], p['e2g'], p['e2be']), 0.0)
    h = (h @ p['e3w'] + p['e3b']).reshape(B, N, HIDDEN)
    z = jnp.mean(h, axis=1)
    z = jnp.maximum(_layernorm_ref(z @ p['f1w'] + p['f1b'], p['f1g'], p['f1be']), 0.0)
    z = jnp.maximum(_layernorm_ref(z @ p['f2w'] + p['f2b'], p['f2g'], p['f2be']), 0.0)
    latent = z @ p['f3w'] + p['f3b']
    lat = jnp.repeat(latent.reshape(B, 1, LATENT_DIM), N, axis=1)
    d = jnp.concatenate([lat, pos], axis=2).reshape(-1, 3 + LATENT_DIM)
    d = jnp.maximum(_layernorm_ref(d @ p['d1w'] + p['d1b'], p['d1g'], p['d1be']), 0.0)
    d = jnp.maximum(_layernorm_ref(d @ p['d2w'] + p['d2b'], p['d2g'], p['d2be']), 0.0)
    recon = (d @ p['d3w'] + p['d3b']).reshape(B, N, 3)
    return recon, latent


if __name__ == "__main__":
    key = jax.random.PRNGKey(0)
    kx, kp, kparam = jax.random.split(key, 3)

    B, N = BATCH_SIZE, 600     # N deliberately NOT a multiple of the tile size
    x = jax.random.normal(kx, (B, N, 3), jnp.float32)
    pos = jax.random.normal(kp, (B, N, 3), jnp.float32)
    pos = 0.9 * pos / jnp.max(pos)     # mimic "0.9 * points / max(points)"

    raw = init_raw_params(kparam)
    w_in, w_sq, vecs = pack_params(raw)

    recon, latent = autoencoder_forward(x, pos, w_in, w_sq, vecs)
    jax.block_until_ready((recon, latent))

    recon_ref, latent_ref = reference_forward(x, pos, raw)
    assert recon.shape == (B, N, 3) and latent.shape == (B, LATENT_DIM)
    assert jnp.allclose(latent, latent_ref, atol=1e-4, rtol=1e-4), \
        float(jnp.max(jnp.abs(latent - latent_ref)))
    assert jnp.allclose(recon, recon_ref, atol=1e-4, rtol=1e-4), \
        float(jnp.max(jnp.abs(recon - recon_ref)))

    print("KERNEL_OK")
</pallas_src>

<mosaic_0001>
module attributes {stable_mosaic.version = 11 : i64} {
  func.func @_ae_kernel(%arg0: i32, %arg1: i32, %arg2: memref<256x8xf32, #tpu.memory_space<vmem>>, %arg3: memref<2x8x128xf32, #tpu.memory_space<vmem>>, %arg4: memref<8x128x128xf32, #tpu.memory_space<vmem>>, %arg5: memref<24x128xf32, #tpu.memory_space<vmem>>, %arg6: memref<256x3xf32, #tpu.memory_space<vmem>>, %arg7: memref<1x128xf32, #tpu.memory_space<vmem>>, %arg8: memref<1x128xf32, #tpu.memory_space<vmem>>, %arg9: memref<1x128xf32, #tpu.memory_space<vmem>>) attributes {dimension_semantics = [#tpu.dimension_semantics<arbitrary>, #tpu.dimension_semantics<arbitrary>], iteration_bounds = array<i64: 2, 3>, scalar_prefetch = 0 : i64, scratch_operands = 2 : i64, tpu.core_type = #tpu.core_type<tc>, window_params = [{transform_indices = @transform_0, window_bounds = array<i64: 256, 8>}, {pipeline_mode = #tpu.pipeline_mode<synchronous>, transform_indices = @transform_1, window_bounds = array<i64: 2, 8, 128>}, {pipeline_mode = #tpu.pipeline_mode<synchronous>, transform_indices = @transform_2, window_bounds = array<i64: 8, 128, 128>}, {pipeline_mode = #tpu.pipeline_mode<synchronous>, transform_indices = @transform_3, window_bounds = array<i64: 24, 128>}, {transform_indices = @transform_4, window_bounds = array<i64: 256, 3>}, {pipeline_mode = #tpu.pipeline_mode<synchronous>, transform_indices = @transform_5, window_bounds = array<i64: 1, 128>}]} {
    %0 = tpu.iota {dimensions = array<i32: 1>} : vector<1x128xi32>
    %c100_i32 = arith.constant 100 : i32
    %1 = vector.broadcast %c100_i32 : i32 to vector<1x128xi32>
    %2 = arith.cmpi slt, %0, %1 : vector<1x128xi32>
    %3 = arith.extui %2 : vector<1x128xi1> to vector<1x128xi32>
    %4 = arith.sitofp %3 : vector<1x128xi32> to vector<1x128xf32>
    %c0_i32 = arith.constant 0 : i32
    %5 = arith.cmpi eq, %arg0, %c0_i32 : i32
    %6 = arith.extui %5 : i1 to i32
    %c0_i32_0 = arith.constant 0 : i32
    %7 = arith.cmpi ne, %6, %c0_i32_0 : i32
    scf.if %7 {
      %c0_i32_2 = arith.constant 0 : i32
      %11 = arith.cmpi eq, %arg1, %c0_i32_2 : i32
      %12 = arith.extui %11 : i1 to i32
      %c0_i32_3 = arith.constant 0 : i32
      %13 = arith.cmpi ne, %12, %c0_i32_3 : i32
      scf.if %13 {
        %cst_35 = arith.constant 0.000000e+00 : f32
        %105 = vector.broadcast %cst_35 : f32 to vector<1x128xf32>
        %c0_36 = arith.constant 0 : index
        %c0_37 = arith.constant 0 : index
        %106 = vector.load %arg8[%c0_36, %c0_37] : memref<1x128xf32, #tpu.memory_space<vmem>>, vector<1x128xf32>
        tpu.vector_store %arg8[%c0_36, %c0_37], %105 {strides = array<i32>} : memref<1x128xf32, #tpu.memory_space<vmem>>, vector<1x128xf32>,
      } else {
      }
      %c0 = arith.constant 0 : index
      %c0_4 = arith.constant 0 : index
      %14 = vector.load %arg5[%c0, %c0_4] : memref<24x128xf32, #tpu.memory_space<vmem>>, vector<24x128xf32>
      %c0_5 = arith.constant 0 : index
      %c0_6 = arith.constant 0 : index
      %15 = vector.load %arg2[%c0_5, %c0_6] : memref<256x8xf32, #tpu.memory_space<vmem>>, vector<256x8xf32>
      %c0_7 = arith.constant 0 : index
      %c0_8 = arith.constant 0 : index
      %c0_9 = arith.constant 0 : index
      %16 = vector.load %arg3[%c0_7, %c0_8, %c0_9] : memref<2x8x128xf32, #tpu.memory_space<vmem>>, vector<1x8x128xf32>
      %17 = vector.shape_cast %16 : vector<1x8x128xf32> to vector<8x128xf32>
      %cst = arith.constant dense<0.000000e+00> : vector<256x128xf32>
      %18 = tpu.matmul %15, %17, %cst {dimension_numbers = #tpu.dot_dimension_numbers<[1], [0], [0], [1], [0, 0, 1, 1], [], []>} : vector<256x8xf32>, vector<8x128xf32>, vector<256x128xf32> -> vector<256x128xf32>
      %19 = vector.extract_strided_slice %14 {offsets = [0, 0], sizes = [1, 128], strides = [1, 1]} : vector<24x128xf32> to vector<1x128xf32>
      %20 = vector.broadcast %19 : vector<1x128xf32> to vector<256x128xf32>
      %21 = arith.addf %18, %20 : vector<256x128xf32>
      %22 = vector.extract_strided_slice %14 {offsets = [1, 0], sizes = [1, 128], strides = [1, 1]} : vector<24x128xf32> to vector<1x128xf32>
      %23 = vector.extract_strided_slice %14 {offsets = [2, 0], sizes = [1, 128], strides = [1, 1]} : vector<24x128xf32> to vector<1x128xf32>
      %cst_10 = arith.constant dense<0.000000e+00> : vector<256xf32>
      %24 = vector.multi_reduction <add>, %21, %cst_10 [1] : vector<256x128xf32> to vector<256xf32>
      %25 = vector.shape_cast %24 : vector<256xf32> to vector<256x1xf32>
      %cst_11 = arith.constant 0.00999999977 : f32
      %26 = vector.broadcast %cst_11 : f32 to vector<256x1xf32>
      %27 = arith.mulf %25, %26 : vector<256x1xf32>
      %28 = vector.broadcast %27 : vector<256x1xf32> to vector<256x128xf32>
      %29 = arith.subf %21, %28 : vector<256x128xf32>
      %30 = vector.broadcast %4 : vector<1x128xf32> to vector<256x128xf32>
      %31 = arith.mulf %29, %30 : vector<256x128xf32>
      %32 = arith.mulf %31, %31 : vector<256x128xf32>
      %cst_12 = arith.constant dense<0.000000e+00> : vector<256xf32>
      %33 = vector.multi_reduction <add>, %32, %cst_12 [1] : vector<256x128xf32> to vector<256xf32>
      %34 = vector.shape_cast %33 : vector<256xf32> to vector<256x1xf32>
      %cst_13 = arith.constant 0.00999999977 : f32
      %35 = vector.broadcast %cst_13 : f32 to vector<256x1xf32>
      %36 = arith.mulf %34, %35 : vector<256x1xf32>
      %37 = vector.broadcast %27 : vector<256x1xf32> to vector<256x128xf32>
      %38 = arith.subf %21, %37 : vector<256x128xf32>
      %cst_14 = arith.constant 9.99999974E-6 : f32
      %39 = vector.broadcast %cst_14 : f32 to vector<256x1xf32>
      %40 = arith.addf %36, %39 : vector<256x1xf32>
      %41 = math.rsqrt %40 : vector<256x1xf32>
      %42 = vector.broadcast %41 : vector<256x1xf32> to vector<256x128xf32>
      %43 = arith.mulf %38, %42 : vector<256x128xf32>
      %44 = vector.broadcast %22 : vector<1x128xf32> to vector<256x128xf32>
      %45 = arith.mulf %43, %44 : vector<256x128xf32>
      %46 = vector.broadcast %23 : vector<1x128xf32> to vector<256x128xf32>
      %47 = arith.addf %45, %46 : vector<256x128xf32>
      %cst_15 = arith.constant 0.000000e+00 : f32
      %48 = vector.broadcast %cst_15 : f32 to vector<256x128xf32>
      %49 = arith.maximumf %47, %48 : vector<256x128xf32>
      %c0_16 = arith.constant 0 : index
      %c0_17 = arith.constant 0 : index
      %c0_18 = arith.constant 0 : index
      %50 = vector.load %arg4[%c0_16, %c0_17, %c0_18] : memref<8x128x128xf32, #tpu.memory_space<vmem>>, vector<1x128x128xf32>
      %51 = vector.shape_cast %50 : vector<1x128x128xf32> to vector<128x128xf32>
      %cst_19 = arith.constant dense<0.000000e+00> : vector<256x128xf32>
      %52 = tpu.matmul %49, %51, %cst_19 {dimension_numbers = #tpu.dot_dimension_numbers<[1], [0], [0], [1], [0, 0, 1, 1], [], []>} : vector<256x128xf32>, vector<128x128xf32>, vector<256x128xf32> -> vector<256x128xf32>
      %53 = vector.extract_strided_slice %14 {offsets = [3, 0], sizes = [1, 128], strides = [1, 1]} : vector<24x128xf32> to vector<1x128xf32>
      %54 = vector.broadcast %53 : vector<1x128xf32> to vector<256x128xf32>
      %55 = arith.addf %52, %54 : vector<256x128xf32>
      %56 = vector.extract_strided_slice %14 {offsets = [4, 0], sizes = [1, 128], strides = [1, 1]} : vector<24x128xf32> to vector<1x128xf32>
      %57 = vector.extract_strided_slice %14 {offsets = [5, 0], sizes = [1, 128], strides = [1, 1]} : vector<24x128xf32> to vector<1x128xf32>
      %cst_20 = arith.constant dense<0.000000e+00> : vector<256xf32>
      %58 = vector.multi_reduction <add>, %55, %cst_20 [1] : vector<256x128xf32> to vector<256xf32>
      %59 = vector.shape_cast %58 : vector<256xf32> to vector<256x1xf32>
      %cst_21 = arith.constant 0.00999999977 : f32
      %60 = vector.broadcast %cst_21 : f32 to vector<256x1xf32>
      %61 = arith.mulf %59, %60 : vector<256x1xf32>
      %62 = vector.broadcast %61 : vector<256x1xf32> to vector<256x128xf32>
      %63 = arith.subf %55, %62 : vector<256x128xf32>
      %64 = vector.broadcast %4 : vector<1x128xf32> to vector<256x128xf32>
      %65 = arith.mulf %63, %64 : vector<256x128xf32>
      %66 = arith.mulf %65, %65 : vector<256x128xf32>
      %cst_22 = arith.constant dense<0.000000e+00> : vector<256xf32>
      %67 = vector.multi_reduction <add>, %66, %cst_22 [1] : vector<256x128xf32> to vector<256xf32>
      %68 = vector.shape_cast %67 : vector<256xf32> to vector<256x1xf32>
      %cst_23 = arith.constant 0.00999999977 : f32
      %69 = vector.broadcast %cst_23 : f32 to vector<256x1xf32>
      %70 = arith.mulf %68, %69 : vector<256x1xf32>
      %71 = vector.broadcast %61 : vector<256x1xf32> to vector<256x128xf32>
      %72 = arith.subf %55, %71 : vector<256x128xf32>
      %cst_24 = arith.constant 9.99999974E-6 : f32
      %73 = vector.broadcast %cst_24 : f32 to vector<256x1xf32>
      %74 = arith.addf %70, %73 : vector<256x1xf32>
      %75 = math.rsqrt %74 : vector<256x1xf32>
      %76 = vector.broadcast %75 : vector<256x1xf32> to vector<256x128xf32>
      %77 = arith.mulf %72, %76 : vector<256x128xf32>
      %78 = vector.broadcast %56 : vector<1x128xf32> to vector<256x128xf32>
      %79 = arith.mulf %77, %78 : vector<256x128xf32>
      %80 = vector.broadcast %57 : vector<1x128xf32> to vector<256x128xf32>
      %81 = arith.addf %79, %80 : vector<256x128xf32>
      %cst_25 = arith.constant 0.000000e+00 : f32
      %82 = vector.broadcast %cst_25 : f32 to vector<256x128xf32>
      %83 = arith.maximumf %81, %82 : vector<256x128xf32>
      %c1 = arith.constant 1 : index
      %c0_26 = arith.constant 0 : index
      %c0_27 = arith.constant 0 : index
      %84 = vector.load %arg4[%c1, %c0_26, %c0_27] : memref<8x128x128xf32, #tpu.memory_space<vmem>>, vector<1x128x128xf32>
      %85 = vector.shape_cast %84 : vector<1x128x128xf32> to vector<128x128xf32>
      %cst_28 = arith.constant dense<0.000000e+00> : vector<256x128xf32>
      %86 = tpu.matmul %83, %85, %cst_28 {dimension_numbers = #tpu.dot_dimension_numbers<[1], [0], [0], [1], [0, 0, 1, 1], [], []>} : vector<256x128xf32>, vector<128x128xf32>, vector<256x128xf32> -> vector<256x128xf32>
      %87 = vector.extract_strided_slice %14 {offsets = [6, 0], sizes = [1, 128], strides = [1, 1]} : vector<24x128xf32> to vector<1x128xf32>
      %88 = vector.broadcast %87 : vector<1x128xf32> to vector<256x128xf32>
      %89 = arith.addf %86, %88 : vector<256x128xf32>
      %90 = tpu.iota {dimensions = array<i32: 1>} : vector<1x256xi32>
      %c256_i32 = arith.constant 256 : i32
      %91 = arith.muli %arg1, %c256_i32 : i32
      %92 = vector.broadcast %91 : i32 to vector<1x256xi32>
      %93 = arith.addi %90, %92 : vector<1x256xi32>
      %c600_i32 = arith.constant 600 : i32
      %94 = vector.broadcast %c600_i32 : i32 to vector<1x256xi32>
      %95 = arith.cmpi slt, %93, %94 : vector<1x256xi32>
      %96 = arith.extui %95 : vector<1x256xi1> to vector<1x256xi32>
      %97 = arith.sitofp %96 : vector<1x256xi32> to vector<1x256xf32>
      %c0_29 = arith.constant 0 : index
      %c0_30 = arith.constant 0 : index
      %98 = vector.load %arg8[%c0_29, %c0_30] : memref<1x128xf32, #tpu.memory_space<vmem>>, vector<1x128xf32>
      %cst_31 = arith.constant dense<0.000000e+00> : vector<1x128xf32>
      %99 = tpu.matmul %97, %89, %cst_31 {dimension_numbers = #tpu.dot_dimension_numbers<[1], [0], [0], [1], [0, 0, 1, 1], [], []>} : vector<1x256xf32>, vector<256x128xf32>, vector<1x128xf32> -> vector<1x128xf32>
      %100 = arith.addf %98, %99 : vector<1x128xf32>
      %c0_32 = arith.constant 0 : index
      %c0_33 = arith.constant 0 : index
      %101 = vector.load %arg8[%c0_32, %c0_33] : memref<1x128xf32, #tpu.memory_space<vmem>>, vector<1x128xf32>
      tpu.vector_store %arg8[%c0_32, %c0_33], %100 {strides = array<i32>} : memref<1x128xf32, #tpu.memory_space<vmem>>, vector<1x128xf32>,
      %c2_i32 = arith.constant 2 : i32
      %102 = arith.cmpi eq, %arg1, %c2_i32 : i32
      %103 = arith.extui %102 : i1 to i32
      %c0_i32_34 = arith.constant 0 : i32
      %104 = arith.cmpi ne, %103, %c0_i32_34 : i32
      scf.if %104 {
        %c0_35 = arith.constant 0 : index
        %c0_36 = arith.constant 0 : index
        %105 = vector.load %arg8[%c0_35, %c0_36] : memref<1x128xf32, #tpu.memory_space<vmem>>, vector<1x128xf32>
        %cst_37 = arith.constant 0.00166666671 : f32
        %106 = vector.broadcast %cst_37 : f32 to vector<1x128xf32>
        %107 = arith.mulf %105, %106 : vector<1x128xf32>
        %c2 = arith.constant 2 : index
        %c0_38 = arith.constant 0 : index
        %c0_39 = arith.constant 0 : index
        %108 = vector.load %arg4[%c2, %c0_38, %c0_39] : memref<8x128x128xf32, #tpu.memory_space<vmem>>, vector<1x128x128xf32>
        %109 = vector.shape_cast %108 : vector<1x128x128xf32> to vector<128x128xf32>
        %cst_40 = arith.constant dense<0.000000e+00> : vector<1x128xf32>
        %110 = tpu.matmul %107, %109, %cst_40 {dimension_numbers = #tpu.dot_dimension_numbers<[1], [0], [0], [1], [0, 0, 1, 1], [], []>} : vector<1x128xf32>, vector<128x128xf32>, vector<1x128xf32> -> vector<1x128xf32>
        %111 = vector.extract_strided_slice %14 {offsets = [7, 0], sizes = [1, 128], strides = [1, 1]} : vector<24x128xf32> to vector<1x128xf32>
        %112 = arith.addf %110, %111 : vector<1x128xf32>
        %113 = vector.extract_strided_slice %14 {offsets = [8, 0], sizes = [1, 128], strides = [1, 1]} : vector<24x128xf32> to vector<1x128xf32>
        %114 = vector.extract_strided_slice %14 {offsets = [9, 0], sizes = [1, 128], strides = [1, 1]} : vector<24x128xf32> to vector<1x128xf32>
        %cst_41 = arith.constant dense<0.000000e+00> : vector<1xf32>
        %115 = vector.multi_reduction <add>, %112, %cst_41 [1] : vector<1x128xf32> to vector<1xf32>
        %116 = vector.shape_cast %115 : vector<1xf32> to vector<1x1xf32>
        %cst_42 = arith.constant 0.00999999977 : f32
        %117 = vector.broadcast %cst_42 : f32 to vector<1x1xf32>
        %118 = arith.mulf %116, %117 : vector<1x1xf32>
        %119 = vector.broadcast %118 : vector<1x1xf32> to vector<1x128xf32>
        %120 = arith.subf %112, %119 : vector<1x128xf32>
        %121 = arith.mulf %120, %4 : vector<1x128xf32>
        %122 = arith.mulf %121, %121 : vector<1x128xf32>
        %cst_43 = arith.constant dense<0.000000e+00> : vector<1xf32>
        %123 = vector.multi_reduction <add>, %122, %cst_43 [1] : vector<1x128xf32> to vector<1xf32>
        %124 = vector.shape_cast %123 : vector<1xf32> to vector<1x1xf32>
        %cst_44 = arith.constant 0.00999999977 : f32
        %125 = vector.broadcast %cst_44 : f32 to vector<1x1xf32>
        %126 = arith.mulf %124, %125 : vector<1x1xf32>
        %127 = vector.broadcast %118 : vector<1x1xf32> to vector<1x128xf32>
        %128 = arith.subf %112, %127 : vector<1x128xf32>
        %cst_45 = arith.constant 9.99999974E-6 : f32
        %129 = vector.broadcast %cst_45 : f32 to vector<1x1xf32>
        %130 = arith.addf %126, %129 : vector<1x1xf32>
        %131 = math.rsqrt %130 : vector<1x1xf32>
        %132 = vector.broadcast %131 : vector<1x1xf32> to vector<1x128xf32>
        %133 = arith.mulf %128, %132 : vector<1x128xf32>
        %134 = arith.mulf %133, %113 : vector<1x128xf32>
        %135 = arith.addf %134, %114 : vector<1x128xf32>
        %cst_46 = arith.constant 0.000000e+00 : f32
        %136 = vector.broadcast %cst_46 : f32 to vector<1x128xf32>
        %137 = arith.maximumf %135, %136 : vector<1x128xf32>
        %c3 = arith.constant 3 : index
        %c0_47 = arith.constant 0 : index
        %c0_48 = arith.constant 0 : index
        %138 = vector.load %arg4[%c3, %c0_47, %c0_48] : memref<8x128x128xf32, #tpu.memory_space<vmem>>, vector<1x128x128xf32>
        %139 = vector.shape_cast %138 : vector<1x128x128xf32> to vector<128x128xf32>
        %cst_49 = arith.constant dense<0.000000e+00> : vector<1x128xf32>
        %140 = tpu.matmul %137, %139, %cst_49 {dimension_numbers = #tpu.dot_dimension_numbers<[1], [0], [0], [1], [0, 0, 1, 1], [], []>} : vector<1x128xf32>, vector<128x128xf32>, vector<1x128xf32> -> vector<1x128xf32>
        %141 = vector.extract_strided_slice %14 {offsets = [10, 0], sizes = [1, 128], strides = [1, 1]} : vector<24x128xf32> to vector<1x128xf32>
        %142 = arith.addf %140, %141 : vector<1x128xf32>
        %143 = vector.extract_strided_slice %14 {offsets = [11, 0], sizes = [1, 128], strides = [1, 1]} : vector<24x128xf32> to vector<1x128xf32>
        %144 = vector.extract_strided_slice %14 {offsets = [12, 0], sizes = [1, 128], strides = [1, 1]} : vector<24x128xf32> to vector<1x128xf32>
        %cst_50 = arith.constant dense<0.000000e+00> : vector<1xf32>
        %145 = vector.multi_reduction <add>, %142, %cst_50 [1] : vector<1x128xf32> to vector<1xf32>
        %146 = vector.shape_cast %145 : vector<1xf32> to vector<1x1xf32>
        %cst_51 = arith.constant 0.00999999977 : f32
        %147 = vector.broadcast %cst_51 : f32 to vector<1x1xf32>
        %148 = arith.mulf %146, %147 : vector<1x1xf32>
        %149 = vector.broadcast %148 : vector<1x1xf32> to vector<1x128xf32>
        %150 = arith.subf %142, %149 : vector<1x128xf32>
        %151 = arith.mulf %150, %4 : vector<1x128xf32>
        %152 = arith.mulf %151, %151 : vector<1x128xf32>
        %cst_52 = arith.constant dense<0.000000e+00> : vector<1xf32>
        %153 = vector.multi_reduction <add>, %152, %cst_52 [1] : vector<1x128xf32> to vector<1xf32>
        %154 = vector.shape_cast %153 : vector<1xf32> to vector<1x1xf32>
        %cst_53 = arith.constant 0.00999999977 : f32
        %155 = vector.broadcast %cst_53 : f32 to vector<1x1xf32>
        %156 = arith.mulf %154, %155 : vector<1x1xf32>
        %157 = vector.broadcast %148 : vector<1x1xf32> to vector<1x128xf32>
        %158 = arith.subf %142, %157 : vector<1x128xf32>
        %cst_54 = arith.constant 9.99999974E-6 : f32
        %159 = vector.broadcast %cst_54 : f32 to vector<1x1xf32>
        %160 = arith.addf %156, %159 : vector<1x1xf32>
        %161 = math.rsqrt %160 : vector<1x1xf32>
        %162 = vector.broadcast %161 : vector<1x1xf32> to vector<1x128xf32>
        %163 = arith.mulf %158, %162 : vector<1x128xf32>
        %164 = arith.mulf %163, %143 : vector<1x128xf32>
        %165 = arith.addf %164, %144 : vector<1x128xf32>
        %cst_55 = arith.constant 0.000000e+00 : f32
        %166 = vector.broadcast %cst_55 : f32 to vector<1x128xf32>
        %167 = arith.maximumf %165, %166 : vector<1x128xf32>
        %c4 = arith.constant 4 : index
        %c0_56 = arith.constant 0 : index
        %c0_57 = arith.constant 0 : index
        %168 = vector.load %arg4[%c4, %c0_56, %c0_57] : memref<8x128x128xf32, #tpu.memory_space<vmem>>, vector<1x128x128xf32>
        %169 = vector.shape_cast %168 : vector<1x128x128xf32> to vector<128x128xf32>
        %cst_58 = arith.constant dense<0.000000e+00> : vector<1x128xf32>
        %170 = tpu.matmul %167, %169, %cst_58 {dimension_numbers = #tpu.dot_dimension_numbers<[1], [0], [0], [1], [0, 0, 1, 1], [], []>} : vector<1x128xf32>, vector<128x128xf32>, vector<1x128xf32> -> vector<1x128xf32>
        %171 = vector.extract_strided_slice %14 {offsets = [13, 0], sizes = [1, 128], strides = [1, 1]} : vector<24x128xf32> to vector<1x128xf32>
        %172 = arith.addf %170, %171 : vector<1x128xf32>
        %c0_59 = arith.constant 0 : index
        %c0_60 = arith.constant 0 : index
        %173 = vector.load %arg7[%c0_59, %c0_60] : memref<1x128xf32, #tpu.memory_space<vmem>>, vector<1x128xf32>
        tpu.vector_store %arg7[%c0_59, %c0_60], %172 {strides = array<i32>} : memref<1x128xf32, #tpu.memory_space<vmem>>, vector<1x128xf32>,
        %c5 = arith.constant 5 : index
        %c0_61 = arith.constant 0 : index
        %c0_62 = arith.constant 0 : index
        %174 = vector.load %arg4[%c5, %c0_61, %c0_62] : memref<8x128x128xf32, #tpu.memory_space<vmem>>, vector<1x128x128xf32>
        %175 = vector.shape_cast %174 : vector<1x128x128xf32> to vector<128x128xf32>
        %cst_63 = arith.constant dense<0.000000e+00> : vector<1x128xf32>
        %176 = tpu.matmul %172, %175, %cst_63 {dimension_numbers = #tpu.dot_dimension_numbers<[1], [0], [0], [1], [0, 0, 1, 1], [], []>} : vector<1x128xf32>, vector<128x128xf32>, vector<1x128xf32> -> vector<1x128xf32>
        %177 = vector.extract_strided_slice %14 {offsets = [14, 0], sizes = [1, 128], strides = [1, 1]} : vector<24x128xf32> to vector<1x128xf32>
        %178 = arith.addf %176, %177 : vector<1x128xf32>
        %c0_64 = arith.constant 0 : index
        %c0_65 = arith.constant 0 : index
        %179 = vector.load %arg9[%c0_64, %c0_65] : memref<1x128xf32, #tpu.memory_space<vmem>>, vector<1x128xf32>
        tpu.vector_store %arg9[%c0_64, %c0_65], %178 {strides = array<i32>} : memref<1x128xf32, #tpu.memory_space<vmem>>, vector<1x128xf32>,
      } else {
      }
    } else {
    }
    %c1_i32 = arith.constant 1 : i32
    %8 = arith.cmpi eq, %arg0, %c1_i32 : i32
    %9 = arith.extui %8 : i1 to i32
    %c0_i32_1 = arith.constant 0 : i32
    %10 = arith.cmpi ne, %9, %c0_i32_1 : i32
    scf.if %10 {
      %c0 = arith.constant 0 : index
      %c0_2 = arith.constant 0 : index
      %11 = vector.load %arg5[%c0, %c0_2] : memref<24x128xf32, #tpu.memory_space<vmem>>, vector<24x128xf32>
      %c0_3 = arith.constant 0 : index
      %c0_4 = arith.constant 0 : index
      %12 = vector.load %arg2[%c0_3, %c0_4] : memref<256x8xf32, #tpu.memory_space<vmem>>, vector<256x8xf32>
      %c1 = arith.constant 1 : index
      %c0_5 = arith.constant 0 : index
      %c0_6 = arith.constant 0 : index
      %13 = vector.load %arg3[%c1, %c0_5, %c0_6] : memref<2x8x128xf32, #tpu.memory_space<vmem>>, vector<1x8x128xf32>
      %14 = vector.shape_cast %13 : vector<1x8x128xf32> to vector<8x128xf32>
      %cst = arith.constant dense<0.000000e+00> : vector<256x128xf32>
      %15 = tpu.matmul %12, %14, %cst {dimension_numbers = #tpu.dot_dimension_numbers<[1], [0], [0], [1], [0, 0, 1, 1], [], []>} : vector<256x8xf32>, vector<8x128xf32>, vector<256x128xf32> -> vector<256x128xf32>
      %c0_7 = arith.constant 0 : index
      %c0_8 = arith.constant 0 : index
      %16 = vector.load %arg9[%c0_7, %c0_8] : memref<1x128xf32, #tpu.memory_space<vmem>>, vector<1x128xf32>
      %17 = vector.broadcast %16 : vector<1x128xf32> to vector<256x128xf32>
      %18 = arith.addf %15, %17 : vector<256x128xf32>
      %19 = vector.extract_strided_slice %11 {offsets = [15, 0], sizes = [1, 128], strides = [1, 1]} : vector<24x128xf32> to vector<1x128xf32>
      %20 = vector.extract_strided_slice %11 {offsets = [16, 0], sizes = [1, 128], strides = [1, 1]} : vector<24x128xf32> to vector<1x128xf32>
      %cst_9 = arith.constant dense<0.000000e+00> : vector<256xf32>
      %21 = vector.multi_reduction <add>, %18, %cst_9 [1] : vector<256x128xf32> to vector<256xf32>
      %22 = vector.shape_cast %21 : vector<256xf32> to vector<256x1xf32>
      %cst_10 = arith.constant 0.00999999977 : f32
      %23 = vector.broadcast %cst_10 : f32 to vector<256x1xf32>
      %24 = arith.mulf %22, %23 : vector<256x1xf32>
      %25 = vector.broadcast %24 : vector<256x1xf32> to vector<256x128xf32>
      %26 = arith.subf %18, %25 : vector<256x128xf32>
      %27 = vector.broadcast %4 : vector<1x128xf32> to vector<256x128xf32>
      %28 = arith.mulf %26, %27 : vector<256x128xf32>
      %29 = arith.mulf %28, %28 : vector<256x128xf32>
      %cst_11 = arith.constant dense<0.000000e+00> : vector<256xf32>
      %30 = vector.multi_reduction <add>, %29, %cst_11 [1] : vector<256x128xf32> to vector<256xf32>
      %31 = vector.shape_cast %30 : vector<256xf32> to vector<256x1xf32>
      %cst_12 = arith.constant 0.00999999977 : f32
      %32 = vector.broadcast %cst_12 : f32 to vector<256x1xf32>
      %33 = arith.mulf %31, %32 : vector<256x1xf32>
      %34 = vector.broadcast %24 : vector<256x1xf32> to vector<256x128xf32>
      %35 = arith.subf %18, %34 : vector<256x128xf32>
      %cst_13 = arith.constant 9.99999974E-6 : f32
      %36 = vector.broadcast %cst_13 : f32 to vector<256x1xf32>
      %37 = arith.addf %33, %36 : vector<256x1xf32>
      %38 = math.rsqrt %37 : vector<256x1xf32>
      %39 = vector.broadcast %38 : vector<256x1xf32> to vector<256x128xf32>
      %40 = arith.mulf %35, %39 : vector<256x128xf32>
      %41 = vector.broadcast %19 : vector<1x128xf32> to vector<256x128xf32>
      %42 = arith.mulf %40, %41 : vector<256x128xf32>
      %43 = vector.broadcast %20 : vector<1x128xf32> to vector<256x128xf32>
      %44 = arith.addf %42, %43 : vector<256x128xf32>
      %cst_14 = arith.constant 0.000000e+00 : f32
      %45 = vector.broadcast %cst_14 : f32 to vector<256x128xf32>
      %46 = arith.maximumf %44, %45 : vector<256x128xf32>
      %c6 = arith.constant 6 : index
      %c0_15 = arith.constant 0 : index
      %c0_16 = arith.constant 0 : index
      %47 = vector.load %arg4[%c6, %c0_15, %c0_16] : memref<8x128x128xf32, #tpu.memory_space<vmem>>, vector<1x128x128xf32>
      %48 = vector.shape_cast %47 : vector<1x128x128xf32> to vector<128x128xf32>
      %cst_17 = arith.constant dense<0.000000e+00> : vector<256x128xf32>
      %49 = tpu.matmul %46, %48, %cst_17 {dimension_numbers = #tpu.dot_dimension_numbers<[1], [0], [0], [1], [0, 0, 1, 1], [], []>} : vector<256x128xf32>, vector<128x128xf32>, vector<256x128xf32> -> vector<256x128xf32>
      %50 = vector.extract_strided_slice %11 {offsets = [17, 0], sizes = [1, 128], strides = [1, 1]} : vector<24x128xf32> to vector<1x128xf32>
      %51 = vector.broadcast %50 : vector<1x128xf32> to vector<256x128xf32>
      %52 = arith.addf %49, %51 : vector<256x128xf32>
      %53 = vector.extract_strided_slice %11 {offsets = [18, 0], sizes = [1, 128], strides = [1, 1]} : vector<24x128xf32> to vector<1x128xf32>
      %54 = vector.extract_strided_slice %11 {offsets = [19, 0], sizes = [1, 128], strides = [1, 1]} : vector<24x128xf32> to vector<1x128xf32>
      %cst_18 = arith.constant dense<0.000000e+00> : vector<256xf32>
      %55 = vector.multi_reduction <add>, %52, %cst_18 [1] : vector<256x128xf32> to vector<256xf32>
      %56 = vector.shape_cast %55 : vector<256xf32> to vector<256x1xf32>
      %cst_19 = arith.constant 0.00999999977 : f32
      %57 = vector.broadcast %cst_19 : f32 to vector<256x1xf32>
      %58 = arith.mulf %56, %57 : vector<256x1xf32>
      %59 = vector.broadcast %58 : vector<256x1xf32> to vector<256x128xf32>
      %60 = arith.subf %52, %59 : vector<256x128xf32>
      %61 = vector.broadcast %4 : vector<1x128xf32> to vector<256x128xf32>
      %62 = arith.mulf %60, %61 : vector<256x128xf32>
      %63 = arith.mulf %62, %62 : vector<256x128xf32>
      %cst_20 = arith.constant dense<0.000000e+00> : vector<256xf32>
      %64 = vector.multi_reduction <add>, %63, %cst_20 [1] : vector<256x128xf32> to vector<256xf32>
      %65 = vector.shape_cast %64 : vector<256xf32> to vector<256x1xf32>
      %cst_21 = arith.constant 0.00999999977 : f32
      %66 = vector.broadcast %cst_21 : f32 to vector<256x1xf32>
      %67 = arith.mulf %65, %66 : vector<256x1xf32>
      %68 = vector.broadcast %58 : vector<256x1xf32> to vector<256x128xf32>
      %69 = arith.subf %52, %68 : vector<256x128xf32>
      %cst_22 = arith.constant 9.99999974E-6 : f32
      %70 = vector.broadcast %cst_22 : f32 to vector<256x1xf32>
      %71 = arith.addf %67, %70 : vector<256x1xf32>
      %72 = math.rsqrt %71 : vector<256x1xf32>
      %73 = vector.broadcast %72 : vector<256x1xf32> to vector<256x128xf32>
      %74 = arith.mulf %69, %73 : vector<256x128xf32>
      %75 = vector.broadcast %53 : vector<1x128xf32> to vector<256x128xf32>
      %76 = arith.mulf %74, %75 : vector<256x128xf32>
      %77 = vector.broadcast %54 : vector<1x128xf32> to vector<256x128xf32>
      %78 = arith.addf %76, %77 : vector<256x128xf32>
      %cst_23 = arith.constant 0.000000e+00 : f32
      %79 = vector.broadcast %cst_23 : f32 to vector<256x128xf32>
      %80 = arith.maximumf %78, %79 : vector<256x128xf32>
      %c7 = arith.constant 7 : index
      %c0_24 = arith.constant 0 : index
      %c0_25 = arith.constant 0 : index
      %81 = vector.load %arg4[%c7, %c0_24, %c0_25] : memref<8x128x128xf32, #tpu.memory_space<vmem>>, vector<1x128x128xf32>
      %82 = vector.shape_cast %81 : vector<1x128x128xf32> to vector<128x128xf32>
      %cst_26 = arith.constant dense<0.000000e+00> : vector<256x128xf32>
      %83 = tpu.matmul %80, %82, %cst_26 {dimension_numbers = #tpu.dot_dimension_numbers<[1], [0], [0], [1], [0, 0, 1, 1], [], []>} : vector<256x128xf32>, vector<128x128xf32>, vector<256x128xf32> -> vector<256x128xf32>
      %84 = vector.extract_strided_slice %11 {offsets = [20, 0], sizes = [1, 128], strides = [1, 1]} : vector<24x128xf32> to vector<1x128xf32>
      %85 = vector.broadcast %84 : vector<1x128xf32> to vector<256x128xf32>
      %86 = arith.addf %83, %85 : vector<256x128xf32>
      %87 = vector.extract_strided_slice %86 {offsets = [0, 0], sizes = [256, 3], strides = [1, 1]} : vector<256x128xf32> to vector<256x3xf32>
      %c0_27 = arith.constant 0 : index
      %c0_28 = arith.constant 0 : index
      %88 = vector.load %arg6[%c0_27, %c0_28] : memref<256x3xf32, #tpu.memory_space<vmem>>, vector<256x3xf32>
      tpu.vector_store %arg6[%c0_27, %c0_28], %87 {strides = array<i32>} : memref<256x3xf32, #tpu.memory_space<vmem>>, vector<256x3xf32>,
    } else {
    }
    return
  }
  func.func @transform_0(%arg0: i32, %arg1: i32) -> (i32, i32) {
    %c0_i32 = arith.constant 0 : i32
    %c0_i32_0 = arith.constant 0 : i32
    return %arg1, %c0_i32 : i32, i32
  }
  func.func @transform_1(%arg0: i32, %arg1: i32) -> (i32, i32, i32) {
    %c0_i32 = arith.constant 0 : i32
    %c0_i32_0 = arith.constant 0 : i32
    %c0_i32_1 = arith.constant 0 : i32
    %c0_i32_2 = arith.constant 0 : i32
    return %c0_i32, %c0_i32_0, %c0_i32_1 : i32, i32, i32
  }
  func.func @transform_2(%arg0: i32, %arg1: i32) -> (i32, i32, i32) {
    %c0_i32 = arith.constant 0 : i32
    %c0_i32_0 = arith.constant 0 : i32
    %c0_i32_1 = arith.constant 0 : i32
    %c0_i32_2 = arith.constant 0 : i32
    return %c0_i32, %c0_i32_0, %c0_i32_1 : i32, i32, i32
  }
  func.func @transform_3(%arg0: i32, %arg1: i32) -> (i32, i32) {
    %c0_i32 = arith.constant 0 : i32
    %c0_i32_0 = arith.constant 0 : i32
    %c0_i32_1 = arith.constant 0 : i32
    return %c0_i32, %c0_i32_0 : i32, i32
  }
  func.func @transform_4(%arg0: i32, %arg1: i32) -> (i32, i32) {
    %0 = arith.muli %arg1, %arg0 : i32
    %c0_i32 = arith.constant 0 : i32
    %c0_i32_0 = arith.constant 0 : i32
    return %0, %c0_i32 : i32, i32
  }
  func.func @transform_5(%arg0: i32, %arg1: i32) -> (i32, i32) {
    %c0_i32 = arith.constant 0 : i32
    %c0_i32_0 = arith.constant 0 : i32
    %c0_i32_1 = arith.constant 0 : i32
    return %c0_i32, %c0_i32_0 : i32, i32
  }
}

</mosaic_0001>

<llo_original>
// kernel: autoencoder_forward.1
$region0: #{autoencoder_forward.1}
  #allocation0 [shape = 'u32[]', space=smem, size = 0x4, offset = 0x4, fixed_abs, tag = 'smem constant byte address 0x4 - core index']
  #allocation1 [shape = 'u32[144,128]{1,0:T(1,128)}', space=vmem, size = 0x12000, scoped, tag = 'internal scratch']
  #allocation2 [shape = 'f32[1,128]{1,0:T(1,128)}', space=vmem, size = 0x200, scoped, tag = 'scratch operand']
  #allocation3 [shape = 'f32[1,128]{1,0:T(1,128)}', space=vmem, size = 0x200, scoped, tag = 'scratch operand']
  %s0 = inlined_call_operand.vmem [shape: f32[768,8], index: 0, kind: input, shape index: {}]
  %s1 = inlined_call_operand.vmem [shape: f32[2,8,128], index: 1, kind: input, shape index: {}]
  %s2 = inlined_call_operand.vmem [shape: f32[8,128,128], index: 2, kind: input, shape index: {}]
  %s3 = inlined_call_operand.vmem [shape: f32[24,128], index: 3, kind: input, shape index: {}]
  %s4 = inlined_call_operand.vmem [shape: f32[768,3], index: 4, kind: output, shape index: {0}]
  %s5 = inlined_call_operand.hbm [shape: f32[1,128], index: 5, kind: output, shape index: {1}]
  %6 = xla_tuple %s4, %s5
  %s7 = sld [smem:[#allocation0]]
  $region73: #{autoencoder_forward.1} parent=0
    _
  %s9 = ssub.s32 1, %s7
  %s10 = scalar_select 0, %s9, %s7
  $region1: #{autoencoder_forward.1} parent=0
    #allocation4 [shape = 'u8[512]{0}', space=vmem, size = 0x400, scoped, tag = 'output window, operand 1, single buffered']
    #allocation5 [shape = 's32[2]{0}', space=sflag, size = 0x8, scoped, tag = 'scoped memory for autoencoder_forward.1']
    %11 = vsyncpa [#allocation5], 0
    loop: start=0, step=1, limit=8
    $region2: #{autoencoder_forward.1} parent=1 // loop_pre_header
      _
    $region3: #{autoencoder_forward.1} parent=1 // loop_header
      %s13 = sphi 0, %s17
      %p14 = scmp.ge.s32.totalorder %s13, 8
      %s20 = sphi 0, %s32
      %s21 = sphi 0, %s28
      %s22 = sphi 0, %s20
      %s23 = sphi 0, %s21
      %s24 = sphi 0, %s22
      %s25 = sphi 0, %s23
      %s35 = sphi 0, %s37
      %s38 = sphi 0, %s35
      %s39 = sphi 0, %s38
      %s55 = sphi 0, %s39
      %s59 = sphi 0, %s59
      %s61 = sphi 0, %s59
      %s62 = sphi 0, %s61
      %s76 = sphi 0, %s62
      %s80 = sphi 0, %s80
      %s82 = sphi 0, %s80
      %s83 = sphi 0, %s82
      %s97 = sphi 0, %s83
      %s101 = sphi 0, %s101
      %s103 = sphi 0, %s101
      %s104 = sphi 0, %s103
      %s118 = sphi 0, %s104
      %s126 = sphi 0, %s128
      %s129 = sphi 0, %s126
      %s130 = sphi 0, %s129
      %s146 = sphi 0, %s130
      %s150 = sphi 0, %s150
      %s152 = sphi 0, %s150
      %s153 = sphi 0, %s152
      %s167 = sphi 0, %s153
    $region4: #{autoencoder_forward.1} parent=1 // loop_header_branch
      %16 = sbr.rel (%p14) target = $region8
    $region5: #{autoencoder_forward.1} parent=1 // loop_body
      %s18 = ssub.s32 %s13, 1
      %s19 = ssub.s32 %s13, 2
      %s26 = sadd.s32 1, %s21
      %p27 = scmp.ge.s32.totalorder %s26, 3
      %s28 = scalar_select %p27, 0, %s26
      %s29 = sadd.s32 1, %s20
      %s30 = scalar_select %p27, %s29, %s20
      %p31 = scmp.ge.s32.totalorder %s30, 2
      %s32 = scalar_select %p31, 0, %s30
      %s33 = ssub.s32 %s21, %s28
      %p34 = scmp.eq.s32.totalorder %s33, 0
      %s36 = sadd.s32 %s35, 1
      %s37 = scalar_select %p34, %s35, %s36
      %p40 = pneg %p34
      %p41 = scmp.eq.s32.totalorder %s13, 5
      %p42 = por %p40, %p41
      %p43 = scmp.ne.s32.totalorder %s35, %s38
      %p44 = scmp.eq.s32.totalorder %s13, 0
      %p45 = por %p43, %p44
      %p46 = scmp.ne.s32.totalorder %s35, %s38
      %p47 = scmp.eq.s32.totalorder %s18, 5
      %p48 = por %p46, %p47
      %p49 = scmp.ne.s32.totalorder %s38, %s39
      %p50 = scmp.eq.s32.totalorder %s18, 0
      %p51 = por %p49, %p50
      %p52 = scmp.ne.s32.totalorder %s38, %s39
      %p53 = scmp.eq.s32.totalorder %s19, 5
      %p54 = por %p52, %p53
      %p56 = scmp.ne.s32.totalorder %s39, %s55
      %p57 = scmp.eq.s32.totalorder %s19, 0
      %p58 = por %p56, %p57
      %s60 = sadd.s32 %s59, 1
      %p63 = scmp.eq.s32.totalorder %s13, 5
      %p64 = scmp.ne.s32.totalorder %s59, %s61
      %p65 = scmp.eq.s32.totalorder %s13, 0
      %p66 = por %p64, %p65
      %p67 = scmp.ne.s32.totalorder %s59, %s61
      %p68 = scmp.eq.s32.totalorder %s18, 5
      %p69 = por %p67, %p68
      %p70 = scmp.ne.s32.totalorder %s61, %s62
      %p71 = scmp.eq.s32.totalorder %s18, 0
      %p72 = por %p70, %p71
      %p73 = scmp.ne.s32.totalorder %s61, %s62
      %p74 = scmp.eq.s32.totalorder %s19, 5
      %p75 = por %p73, %p74
      %p77 = scmp.ne.s32.totalorder %s62, %s76
      %p78 = scmp.eq.s32.totalorder %s19, 0
      %p79 = por %p77, %p78
      %s81 = sadd.s32 %s80, 1
      %p84 = scmp.eq.s32.totalorder %s13, 5
      %p85 = scmp.ne.s32.totalorder %s80, %s82
      %p86 = scmp.eq.s32.totalorder %s13, 0
      %p87 = por %p85, %p86
      %p88 = scmp.ne.s32.totalorder %s80, %s82
      %p89 = scmp.eq.s32.totalorder %s18, 5
      %p90 = por %p88, %p89
      %p91 = scmp.ne.s32.totalorder %s82, %s83
      %p92 = scmp.eq.s32.totalorder %s18, 0
      %p93 = por %p91, %p92
      %p94 = scmp.ne.s32.totalorder %s82, %s83
      %p95 = scmp.eq.s32.totalorder %s19, 5
      %p96 = por %p94, %p95
      %p98 = scmp.ne.s32.totalorder %s83, %s97
      %p99 = scmp.eq.s32.totalorder %s19, 0
      %p100 = por %p98, %p99
      %s102 = sadd.s32 %s101, 1
      %p105 = scmp.eq.s32.totalorder %s13, 5
      %p106 = scmp.ne.s32.totalorder %s101, %s103
      %p107 = scmp.eq.s32.totalorder %s13, 0
      %p108 = por %p106, %p107
      %p109 = scmp.ne.s32.totalorder %s101, %s103
      %p110 = scmp.eq.s32.totalorder %s18, 5
      %p111 = por %p109, %p110
      %p112 = scmp.ne.s32.totalorder %s103, %s104
      %p113 = scmp.eq.s32.totalorder %s18, 0
      %p114 = por %p112, %p113
      %p115 = scmp.ne.s32.totalorder %s103, %s104
      %p116 = scmp.eq.s32.totalorder %s19, 5
      %p117 = por %p115, %p116
      %p119 = scmp.ne.s32.totalorder %s104, %s118
      %p120 = scmp.eq.s32.totalorder %s19, 0
      %p121 = por %p119, %p120
      %s122 = smul.u32 %s21, %s20
      %s123 = smul.u32 %s28, %s32
      %s124 = ssub.s32 %s122, %s123
      %p125 = scmp.eq.s32.totalorder %s124, 0
      %s127 = sadd.s32 %s126, 1
      %s128 = scalar_select %p125, %s126, %s127
      %p131 = pneg %p125
      %p132 = scmp.eq.s32.totalorder %s13, 5
      %p133 = por %p131, %p132
      %p134 = scmp.ne.s32.totalorder %s126, %s129
      %p135 = scmp.eq.s32.totalorder %s13, 0
      %p136 = por %p134, %p135
      %p137 = scmp.ne.s32.totalorder %s126, %s129
      %p138 = scmp.eq.s32.totalorder %s18, 5
      %p139 = por %p137, %p138
      %p140 = scmp.ne.s32.totalorder %s129, %s130
      %p141 = scmp.eq.s32.totalorder %s18, 0
      %p142 = por %p140, %p141
      %p143 = scmp.ne.s32.totalorder %s129, %s130
      %p144 = scmp.eq.s32.totalorder %s19, 5
      %p145 = por %p143, %p144
      %p147 = scmp.ne.s32.totalorder %s130, %s146
      %p148 = scmp.eq.s32.totalorder %s19, 0
      %p149 = por %p147, %p148
      %s151 = sadd.s32 %s150, 1
      %p154 = scmp.eq.s32.totalorder %s13, 5
      %p155 = scmp.ne.s32.totalorder %s150, %s152
      %p156 = scmp.eq.s32.totalorder %s13, 0
      %p157 = por %p155, %p156
      %p158 = scmp.ne.s32.totalorder %s150, %s152
      %p159 = scmp.eq.s32.totalorder %s18, 5
      %p160 = por %p158, %p159
      %p161 = scmp.ne.s32.totalorder %s152, %s153
      %p162 = scmp.eq.s32.totalorder %s18, 0
      %p163 = por %p161, %p162
      %p164 = scmp.ne.s32.totalorder %s152, %s153
      %p165 = scmp.eq.s32.totalorder %s19, 5
      %p166 = por %p164, %p165
      %p168 = scmp.ne.s32.totalorder %s153, %s167
      %p169 = scmp.eq.s32.totalorder %s19, 0
      %p170 = por %p168, %p169
      %p171 = scmp.le.s32.totalorder 1, %s13
      %p172 = scmp.lt.s32.totalorder %s13, 7
      %p173 = pnand %p171, %p172
      %p174 = pneg %p173
      // Predicated region
      $region9: #{autoencoder_forward.1} parent=5 // pred_check
        _
      $region10: #{autoencoder_forward.1} parent=5 // pred_check_branch
        %176 = sbr.rel (%p173) target = $region12
      $region11: #{autoencoder_forward.1} parent=5 // pred_region
        %s177 = ssub.s32 %s13, 1
        // Predicated region
        $region13: #{autoencoder_forward.1} parent=11 // pred_check
          %p178 = pneg %p72
        $region14: #{autoencoder_forward.1} parent=11 // pred_check_branch
          %180 = sbr.rel (%p178) target = $region16
        $region15: #{autoencoder_forward.1} parent=11 // pred_region
          _
        $region16: #{autoencoder_forward.1} parent=11 // pred_fallthru
          _
        // Predicated region
        $region17: #{autoencoder_forward.1} parent=11 // pred_check
          %p181 = pneg %p93
        $region18: #{autoencoder_forward.1} parent=11 // pred_check_branch
          %183 = sbr.rel (%p181) target = $region20
        $region19: #{autoencoder_forward.1} parent=11 // pred_region
          _
        $region20: #{autoencoder_forward.1} parent=11 // pred_fallthru
          _
        // Predicated region
        $region21: #{autoencoder_forward.1} parent=11 // pred_check
          %p184 = pneg %p114
        $region22: #{autoencoder_forward.1} parent=11 // pred_check_branch
          %186 = sbr.rel (%p184) target = $region24
        $region23: #{autoencoder_forward.1} parent=11 // pred_region
          _
        $region24: #{autoencoder_forward.1} parent=11 // pred_fallthru
          _
      $region12: #{autoencoder_forward.1} parent=5 // pred_fallthru
        _
      %p187 = scmp.lt.s32.totalorder %s13, 6
      // Predicated region
      $region25: #{autoencoder_forward.1} parent=5 // pred_check
        %p188 = pneg %p187
      $region26: #{autoencoder_forward.1} parent=5 // pred_check_branch
        %190 = sbr.rel (%p188) target = $region28
      $region27: #{autoencoder_forward.1} parent=5 // pred_region
        // Predicated region
        $region29: #{autoencoder_forward.1} parent=27 // pred_check
          %p191 = pneg %p45
        $region30: #{autoencoder_forward.1} parent=27 // pred_check_branch
          %193 = sbr.rel (%p191) target = $region32
        $region31: #{autoencoder_forward.1} parent=27 // pred_region
          %s194 = smul.u32 32, %s21
          %p195 = scmp.lt.s32.totalorder %s194, 95
          %s196 = scalar_select %p195, %s194, 95
          %s197 = smul.addr %s196, 8
          %s198 = scalar_lea.vmem %s0, %s197
          %s199 = smul.u32 32, %s21
        $region32: #{autoencoder_forward.1} parent=27 // pred_fallthru
          _
      $region28: #{autoencoder_forward.1} parent=5 // pred_fallthru
        _
      %p200 = scmp.le.s32.totalorder 1, %s13
      %p201 = scmp.lt.s32.totalorder %s13, 7
      %p202 = pnand %p200, %p201
      %p203 = pneg %p202
      // Predicated region
      $region33: #{autoencoder_forward.1} parent=5 // pred_check
        _
      $region34: #{autoencoder_forward.1} parent=5 // pred_check_branch
        %205 = sbr.rel (%p202) target = $region36
      $region35: #{autoencoder_forward.1} parent=5 // pred_region
        %s206 = ssub.s32 %s13, 1
        %s207 = smul.u32 32, %s23
        %p208 = scmp.lt.s32.totalorder %s207, 95
        %s209 = scalar_select %p208, %s207, 95
        %s210 = smul.addr %s209, 8
        %s211 = scalar_lea.vmem %s0, %s210
        %p212 = pneg %p51
        %p213 = pneg %p48
        %p214 = pneg %p72
        %p215 = pneg %p69
        %p216 = pneg %p93
        %p217 = pneg %p90
        %p218 = pneg %p114
        %p219 = pneg %p111
        %p220 = pneg %p142
        %p221 = pneg %p139
        %s222 = smul.u32 %s23, %s22
        %s223 = smul.u32 32, %s222
        %p224 = scmp.lt.s32.totalorder %s223, 95
        %s225 = scalar_select %p224, %s223, 95
        %s226 = smul.addr %s225, 8
        %s227 = scalar_lea.vmem %s4, %s226
        %p228 = pneg %p163
        %p229 = pneg %p160
        %s230 = smul.u32 32, %s23
        %p231 = scmp.lt.s32.totalorder %s230, 95
        %s232 = scalar_select %p231, %s230, 95
        %s233 = smul.addr %s232, 8
        %s234 = scalar_lea.vmem %s0, %s233
        %s235 = smul.u32 32, %s23
        %s236 = smul.u32 %s23, %s22
        %s237 = smul.u32 32, %s236
        %p238 = scmp.lt.s32.totalorder %s237, 95
        %s239 = scalar_select %p238, %s237, 95
        %s240 = smul.addr %s239, 8
        %s241 = scalar_lea.vmem %s4, %s240
        %s242 = smul.u32 %s23, %s22
        %s243 = smul.u32 32, %s242
        %v244 = vlaneseq
        %v245 = vand.u32 %v244, 127
        %vm246 = vcmp.lt.s32.totalorder %v245, 100
        %v247 = vsel %vm246, 1, 0
        %v248 = vcvt.s32.f32 %v247
        %p249 = scmp.eq.s32.totalorder %s22, 0
        // Predicated region
        $region37: #{autoencoder_forward.1} parent=35 // pred_check
          %p250 = pneg %p249
        $region38: #{autoencoder_forward.1} parent=35 // pred_check_branch
          %252 = sbr.rel (%p250) target = $region40
        $region39: #{autoencoder_forward.1} parent=35 // pred_region
          %p253 = scmp.eq.s32.totalorder %s23, 0
          // Predicated region
          $region41: #{autoencoder_forward.1} parent=39 // pred_check
            %p254 = pneg %p253
          $region42: #{autoencoder_forward.1} parent=39 // pred_check_branch
            %256 = sbr.rel (%p254) target = $region44
          $region43: #{autoencoder_forward.1} parent=39 // pred_region
            %257 = vst [vmem:[#allocation2] sm:$0x1] 0.0
          $region44: #{autoencoder_forward.1} parent=39 // pred_fallthru
            _
          %v258 = vld [vmem:[%s3] sm:$0xff]
          %v259 = vld [vmem:[%s3 + $0x8] sm:$0xff]
          %v260 = vld [vmem:[%s234] sm:$0xff]
          %v261 = vld [vmem:[%s234 + $0x8] sm:$0xff]
          %v262 = vld [vmem:[%s234 + $0x10] sm:$0xff]
          %v263 = vld [vmem:[%s234 + $0x18] sm:$0xff]
          %v264 = vld [vmem:[%s234 + $0x20] sm:$0xff]
          %v265 = vld [vmem:[%s234 + $0x28] sm:$0xff]
          %v266 = vld [vmem:[%s234 + $0x30] sm:$0xff]
          %v267 = vld [vmem:[%s234 + $0x38] sm:$0xff]
          %v268 = vld [vmem:[%s234 + $0x40] sm:$0xff]
          %v269 = vld [vmem:[%s234 + $0x48] sm:$0xff]
          %v270 = vld [vmem:[%s234 + $0x50] sm:$0xff]
          %v271 = vld [vmem:[%s234 + $0x58] sm:$0xff]
          %v272 = vld [vmem:[%s234 + $0x60] sm:$0xff]
          %v273 = vld [vmem:[%s234 + $0x68] sm:$0xff]
          %v274 = vld [vmem:[%s234 + $0x70] sm:$0xff]
          %v275 = vld [vmem:[%s234 + $0x78] sm:$0xff]
          %v276 = vld [vmem:[%s234 + $0x80] sm:$0xff]
          %v277 = vld [vmem:[%s234 + $0x88] sm:$0xff]
          %v278 = vld [vmem:[%s234 + $0x90] sm:$0xff]
          %v279 = vld [vmem:[%s234 + $0x98] sm:$0xff]
          %v280 = vld [vmem:[%s234 + $0xa0] sm:$0xff]
          %v281 = vld [vmem:[%s234 + $0xa8] sm:$0xff]
          %v282 = vld [vmem:[%s234 + $0xb0] sm:$0xff]
          %v283 = vld [vmem:[%s234 + $0xb8] sm:$0xff]
          %v284 = vld [vmem:[%s234 + $0xc0] sm:$0xff]
          %v285 = vld [vmem:[%s234 + $0xc8] sm:$0xff]
          %v286 = vld [vmem:[%s234 + $0xd0] sm:$0xff]
          %v287 = vld [vmem:[%s234 + $0xd8] sm:$0xff]
          %v288 = vld [vmem:[%s234 + $0xe0] sm:$0xff]
          %v289 = vld [vmem:[%s234 + $0xe8] sm:$0xff]
          %v290 = vld [vmem:[%s234 + $0xf0] sm:$0xff]
          %v291 = vld [vmem:[%s234 + $0xf8] sm:$0xff]
          %v292 = vld [vmem:[%s1] sm:$0xff]
          %v293 = vlaneseq
          %v294 = vshrl.u32 %v293, 7
          %v295 = vsub.s32 0, %v294
          %v296 = vrot.slane %v258, %v295
          %vm297 = vcmask 64512
          %v299 = vsel %vm297, %v260, 0
          %v302 = vsel %vm297, %v261, 0
          %v305 = vsel %vm297, %v262, 0
          %v308 = vsel %vm297, %v263, 0
          %v311 = vsel %vm297, %v264, 0
          %v314 = vsel %vm297, %v265, 0
          %v317 = vsel %vm297, %v266, 0
          %v320 = vsel %vm297, %v267, 0
          %v323 = vsel %vm297, %v268, 0
          %v326 = vsel %vm297, %v269, 0
          %v329 = vsel %vm297, %v270, 0
          %v332 = vsel %vm297, %v271, 0
          %v335 = vsel %vm297, %v272, 0
          %v338 = vsel %vm297, %v273, 0
          %v341 = vsel %vm297, %v274, 0
          %v344 = vsel %vm297, %v275, 0
          %v347 = vsel %vm297, %v276, 0
          %v350 = vsel %vm297, %v277, 0
          %v353 = vsel %vm297, %v278, 0
          %v356 = vsel %vm297, %v279, 0
          %v359 = vsel %vm297, %v280, 0
          %v362 = vsel %vm297, %v281, 0
          %v365 = vsel %vm297, %v282, 0
          %v368 = vsel %vm297, %v283, 0
          %v371 = vsel %vm297, %v284, 0
          %v374 = vsel %vm297, %v285, 0
          %v377 = vsel %vm297, %v286, 0
          %v380 = vsel %vm297, %v287, 0
          %v383 = vsel %vm297, %v288, 0
          %v386 = vsel %vm297, %v289, 0
          %v389 = vsel %vm297, %v290, 0
          %v392 = vsel %vm297, %v291, 0
          %394 = vmatprep.subr.mxu0 0.0
          %395 = vmatpush1.msra.mxu0 0.0
          %396 = vmatprep.subr.mxu0 0.0
          %397 = vmatpush1.msra.mxu0 0.0
          %398 = vmatprep.subr.mxu0 0.0
          %399 = vmatpush1.msra.mxu0 0.0
          %400 = vmatprep.subr.mxu0 0.0
          %401 = vmatpush1.msra.mxu0 0.0
          %402 = vmatprep.subr.mxu0 0.0
          %403 = vmatpush1.msra.mxu0 0.0
          %404 = vmatprep.subr.mxu0 0.0
          %405 = vmatpush1.msra.mxu0 0.0
          %406 = vmatprep.subr.mxu0 0.0
          %407 = vmatpush1.msra.mxu0 0.0
          %408 = vmatprep.subr.mxu0 0.0
          %409 = vmatpush1.msra.mxu0 0.0
          %410 = vmatprep.subr.mxu0 0.0
          %411 = vmatpush1.msra.mxu0 0.0
          %412 = vmatprep.subr.mxu0 0.0
          %413 = vmatpush1.msra.mxu0 0.0
          %414 = vmatprep.subr.mxu0 0.0
          %415 = vmatpush1.msra.mxu0 0.0
          %416 = vmatprep.subr.mxu0 0.0
          %417 = vmatpush1.msra.mxu0 0.0
          %418 = vmatprep.subr.mxu0 0.0
          %419 = vmatpush1.msra.mxu0 0.0
          %420 = vmatprep.subr.mxu0 0.0
          %421 = vmatpush1.msra.mxu0 0.0
          %422 = vmatprep.subr.mxu0 0.0
          %423 = vmatpush1.msra.mxu0 0.0
          %424 = vmatprep.subr.mxu0 0.0
          %425 = vmatpush1.msra.mxu0 %v292
          %426 = vmatprep.subr.mxu0 0.0
          %427 = vmatpush2.msra.mxu0 0.0
          %428 = vmatprep.subr.mxu0 0.0
          %429 = vmatpush2.msra.mxu0 0.0
          %430 = vmatprep.subr.mxu0 0.0
          %431 = vmatpush2.msra.mxu0 0.0
          %432 = vmatprep.subr.mxu0 0.0
          %433 = vmatpush2.msra.mxu0 0.0
          %434 = vmatprep.subr.mxu0 0.0
          %435 = vmatpush2.msra.mxu0 0.0
          %436 = vmatprep.subr.mxu0 0.0
          %437 = vmatpush2.msra.mxu0 0.0
          %438 = vmatprep.subr.mxu0 0.0
          %439 = vmatpush2.msra.mxu0 0.0
          %440 = vmatprep.subr.mxu0 0.0
          %441 = vmatpush2.msra.mxu0 0.0
          %442 = vmatprep.subr.mxu0 0.0
          %443 = vmatpush2.msra.mxu0 0.0
          %444 = vmatprep.subr.mxu0 0.0
          %445 = vmatpush2.msra.mxu0 0.0
          %446 = vmatprep.subr.mxu0 0.0
          %447 = vmatpush2.msra.mxu0 0.0
          %448 = vmatprep.subr.mxu0 0.0
          %449 = vmatpush2.msra.mxu0 0.0
          %450 = vmatprep.subr.mxu0 0.0
          %451 = vmatpush2.msra.mxu0 0.0
          %452 = vmatprep.subr.mxu0 0.0
          %453 = vmatpush2.msra.mxu0 0.0
          %454 = vmatprep.subr.mxu0 0.0
          %455 = vmatpush2.msra.mxu0 0.0
          %456 = vmatprep.subr.mxu0 0.0
          %457 = vmatpush2.msra.mxu0 0.0
          %458 = vmatprep.mubr.f32.mxu0 0.0
          %459 = vmatmul.mubr.f32.gmra.mxu0 %v299
          %v460 = vpop.f32.mrf.mxu0
          %v461 = vadd.f32 %v296, %v460
          %v462 = vpop.f32.mrf.mxu0
          %463 = vmatprep.mubr.f32.mxu0 0.0
          %464 = vmatmul.mubr.f32.gmra.mxu0 %v302
          %v465 = vpop.f32.mrf.mxu0
          %v466 = vadd.f32 %v296, %v465
          %v467 = vpop.f32.mrf.mxu0
          %468 = vmatprep.mubr.f32.mxu0 0.0
          %469 = vmatmul.mubr.f32.gmra.mxu0 %v305
          %v470 = vpop.f32.mrf.mxu0
          %v471 = vadd.f32 %v296, %v470
          %v472 = vpop.f32.mrf.mxu0
          %473 = vmatprep.mubr.f32.mxu0 0.0
          %474 = vmatmul.mubr.f32.gmra.mxu0 %v308
          %v475 = vpop.f32.mrf.mxu0
          %v476 = vadd.f32 %v296, %v475
          %v477 = vpop.f32.mrf.mxu0
          %478 = vmatprep.mubr.f32.mxu0 0.0
          %479 = vmatmul.mubr.f32.gmra.mxu0 %v311
          %v480 = vpop.f32.mrf.mxu0
          %v481 = vadd.f32 %v296, %v480
          %v482 = vpop.f32.mrf.mxu0
          %483 = vmatprep.mubr.f32.mxu0 0.0
          %484 = vmatmul.mubr.f32.gmra.mxu0 %v314
          %v485 = vpop.f32.mrf.mxu0
          %v486 = vadd.f32 %v296, %v485
          %v487 = vpop.f32.mrf.mxu0
          %488 = vmatprep.mubr.f32.mxu0 0.0
          %489 = vmatmul.mubr.f32.gmra.mxu0 %v317
          %v490 = vpop.f32.mrf.mxu0
          %v491 = vadd.f32 %v296, %v490
          %v492 = vpop.f32.mrf.mxu0
          %493 = vmatprep.mubr.f32.mxu0 0.0
          %494 = vmatmul.mubr.f32.gmra.mxu0 %v320
          %v495 = vpop.f32.mrf.mxu0
          %v496 = vadd.f32 %v296, %v495
          %v497 = vpop.f32.mrf.mxu0
          %498 = vmatprep.mubr.f32.mxu0 0.0
          %499 = vmatmul.mubr.f32.gmra.mxu0 %v323
          %v500 = vpop.f32.mrf.mxu0
          %v501 = vadd.f32 %v296, %v500
          %v502 = vpop.f32.mrf.mxu0
          %503 = vmatprep.mubr.f32.mxu0 0.0
          %504 = vmatmul.mubr.f32.gmra.mxu0 %v326
          %v505 = vpop.f32.mrf.mxu0
          %v506 = vadd.f32 %v296, %v505
          %v507 = vpop.f32.mrf.mxu0
          %508 = vmatprep.mubr.f32.mxu0 0.0
          %509 = vmatmul.mubr.f32.gmra.mxu0 %v329
          %v510 = vpop.f32.mrf.mxu0
          %v511 = vadd.f32 %v296, %v510
          %v512 = vpop.f32.mrf.mxu0
          %513 = vmatprep.mubr.f32.mxu0 0.0
          %514 = vmatmul.mubr.f32.gmra.mxu0 %v332
          %v515 = vpop.f32.mrf.mxu0
          %v516 = vadd.f32 %v296, %v515
          %v517 = vpop.f32.mrf.mxu0
          %518 = vmatprep.mubr.f32.mxu0 0.0
          %519 = vmatmul.mubr.f32.gmra.mxu0 %v335
          %v520 = vpop.f32.mrf.mxu0
          %v521 = vadd.f32 %v296, %v520
          %v522 = vpop.f32.mrf.mxu0
          %523 = vmatprep.mubr.f32.mxu0 0.0
          %524 = vmatmul.mubr.f32.gmra.mxu0 %v338
          %v525 = vpop.f32.mrf.mxu0
          %v526 = vadd.f32 %v296, %v525
          %v527 = vpop.f32.mrf.mxu0
          %528 = vmatprep.mubr.f32.mxu0 0.0
          %529 = vmatmul.mubr.f32.gmra.mxu0 %v341
          %v530 = vpop.f32.mrf.mxu0
          %v531 = vadd.f32 %v296, %v530
          %v532 = vpop.f32.mrf.mxu0
          %533 = vmatprep.mubr.f32.mxu0 0.0
          %534 = vmatmul.mubr.f32.gmra.mxu0 %v344
          %v535 = vpop.f32.mrf.mxu0
          %v536 = vadd.f32 %v296, %v535
          %v537 = vpop.f32.mrf.mxu0
          %538 = vmatprep.mubr.f32.mxu0 0.0
          %539 = vmatmul.mubr.f32.gmra.mxu0 %v347
          %v540 = vpop.f32.mrf.mxu0
          %v541 = vadd.f32 %v296, %v540
          %v542 = vpop.f32.mrf.mxu0
          %543 = vmatprep.mubr.f32.mxu0 0.0
          %544 = vmatmul.mubr.f32.gmra.mxu0 %v350
          %v545 = vpop.f32.mrf.mxu0
          %v546 = vadd.f32 %v296, %v545
          %v547 = vpop.f32.mrf.mxu0
          %548 = vmatprep.mubr.f32.mxu0 0.0
          %549 = vmatmul.mubr.f32.gmra.mxu0 %v353
          %v550 = vpop.f32.mrf.mxu0
          %v551 = vadd.f32 %v296, %v550
          %v552 = vpop.f32.mrf.mxu0
          %553 = vmatprep.mubr.f32.mxu0 0.0
          %554 = vmatmul.mubr.f32.gmra.mxu0 %v356
          %v555 = vpop.f32.mrf.mxu0
          %v556 = vadd.f32 %v296, %v555
          %v557 = vpop.f32.mrf.mxu0
          %558 = vmatprep.mubr.f32.mxu0 0.0
          %559 = vmatmul.mubr.f32.gmra.mxu0 %v359
          %v560 = vpop.f32.mrf.mxu0
          %v561 = vadd.f32 %v296, %v560
          %v562 = vpop.f32.mrf.mxu0
          %563 = vmatprep.mubr.f32.mxu0 0.0
          %564 = vmatmul.mubr.f32.gmra.mxu0 %v362
          %v565 = vpop.f32.mrf.mxu0
          %v566 = vadd.f32 %v296, %v565
          %v567 = vpop.f32.mrf.mxu0
          %568 = vmatprep.mubr.f32.mxu0 0.0
          %569 = vmatmul.mubr.f32.gmra.mxu0 %v365
          %v570 = vpop.f32.mrf.mxu0
          %v571 = vadd.f32 %v296, %v570
          %v572 = vpop.f32.mrf.mxu0
          %573 = vmatprep.mubr.f32.mxu0 0.0
          %574 = vmatmul.mubr.f32.gmra.mxu0 %v368
          %v575 = vpop.f32.mrf.mxu0
          %v576 = vadd.f32 %v296, %v575
          %v577 = vpop.f32.mrf.mxu0
          %578 = vmatprep.mubr.f32.mxu0 0.0
          %579 = vmatmul.mubr.f32.gmra.mxu0 %v371
          %v580 = vpop.f32.mrf.mxu0
          %v581 = vadd.f32 %v296, %v580
          %v582 = vpop.f32.mrf.mxu0
          %583 = vmatprep.mubr.f32.mxu0 0.0
          %584 = vmatmul.mubr.f32.gmra.mxu0 %v374
          %v585 = vpop.f32.mrf.mxu0
          %v586 = vadd.f32 %v296, %v585
          %v587 = vpop.f32.mrf.mxu0
          %588 = vmatprep.mubr.f32.mxu0 0.0
          %589 = vmatmul.mubr.f32.gmra.mxu0 %v377
          %v590 = vpop.f32.mrf.mxu0
          %v591 = vadd.f32 %v296, %v590
          %v592 = vpop.f32.mrf.mxu0
          %593 = vmatprep.mubr.f32.mxu0 0.0
          %594 = vmatmul.mubr.f32.gmra.mxu0 %v380
          %v595 = vpop.f32.mrf.mxu0
          %v596 = vadd.f32 %v296, %v595
          %v597 = vpop.f32.mrf.mxu0
          %598 = vmatprep.mubr.f32.mxu0 0.0
          %599 = vmatmul.mubr.f32.gmra.mxu0 %v383
          %v600 = vpop.f32.mrf.mxu0
          %v601 = vadd.f32 %v296, %v600
          %v602 = vpop.f32.mrf.mxu0
          %603 = vmatprep.mubr.f32.mxu0 0.0
          %604 = vmatmul.mubr.f32.gmra.mxu0 %v386
          %v605 = vpop.f32.mrf.mxu0
          %v606 = vadd.f32 %v296, %v605
          %v607 = vpop.f32.mrf.mxu0
          %608 = vmatprep.mubr.f32.mxu0 0.0
          %609 = vmatmul.mubr.f32.gmra.mxu0 %v389
          %v610 = vpop.f32.mrf.mxu0
          %v611 = vadd.f32 %v296, %v610
          %v612 = vpop.f32.mrf.mxu0
          %613 = vmatprep.mubr.f32.mxu0 0.0
          %614 = vmatmul.mubr.f32.gmra.mxu0 %v392
          %v615 = vpop.f32.mrf.mxu0
          %v616 = vadd.f32 %v296, %v615
          %v617 = vpop.f32.mrf.mxu0
          %618 = vdwg.mxu0
          %619 = vadd.xlane.f32.xlu0 %v461
          %v620 = vpop.xlane.xlu0 %619
          %621 = vadd.xlane.f32.xlu0 %v466
          %v622 = vpop.xlane.xlu0 %621
          %623 = vadd.xlane.f32.xlu0 %v471
          %v624 = vpop.xlane.xlu0 %623
          %625 = vadd.xlane.f32.xlu0 %v476
          %v626 = vpop.xlane.xlu0 %625
          %627 = vadd.xlane.f32.xlu0 %v481
          %v628 = vpop.xlane.xlu0 %627
          %629 = vadd.xlane.f32.xlu0 %v486
          %v630 = vpop.xlane.xlu0 %629
          %631 = vadd.xlane.f32.xlu0 %v491
          %v632 = vpop.xlane.xlu0 %631
          %633 = vadd.xlane.f32.xlu0 %v496
          %v634 = vpop.xlane.xlu0 %633
          %635 = vadd.xlane.f32.xlu0 %v501
          %v636 = vpop.xlane.xlu0 %635
          %637 = vadd.xlane.f32.xlu0 %v506
          %v638 = vpop.xlane.xlu0 %637
          %639 = vadd.xlane.f32.xlu0 %v511
          %v640 = vpop.xlane.xlu0 %639
          %641 = vadd.xlane.f32.xlu0 %v516
          %v642 = vpop.xlane.xlu0 %641
          %643 = vadd.xlane.f32.xlu0 %v521
          %v644 = vpop.xlane.xlu0 %643
          %645 = vadd.xlane.f32.xlu0 %v526
          %v646 = vpop.xlane.xlu0 %645
          %647 = vadd.xlane.f32.xlu0 %v531
          %v648 = vpop.xlane.xlu0 %647
          %649 = vadd.xlane.f32.xlu0 %v536
          %v650 = vpop.xlane.xlu0 %649
          %651 = vadd.xlane.f32.xlu0 %v541
          %v652 = vpop.xlane.xlu0 %651
          %653 = vadd.xlane.f32.xlu0 %v546
          %v654 = vpop.xlane.xlu0 %653
          %655 = vadd.xlane.f32.xlu0 %v551
          %v656 = vpop.xlane.xlu0 %655
          %657 = vadd.xlane.f32.xlu0 %v556
          %v658 = vpop.xlane.xlu0 %657
          %659 = vadd.xlane.f32.xlu0 %v561
          %v660 = vpop.xlane.xlu0 %659
          %661 = vadd.xlane.f32.xlu0 %v566
          %v662 = vpop.xlane.xlu0 %661
          %663 = vadd.xlane.f32.xlu0 %v571
          %v664 = vpop.xlane.xlu0 %663
          %665 = vadd.xlane.f32.xlu0 %v576
          %v666 = vpop.xlane.xlu0 %665
          %667 = vadd.xlane.f32.xlu0 %v581
          %v668 = vpop.xlane.xlu0 %667
          %669 = vadd.xlane.f32.xlu0 %v586
          %v670 = vpop.xlane.xlu0 %669
          %671 = vadd.xlane.f32.xlu0 %v591
          %v672 = vpop.xlane.xlu0 %671
          %673 = vadd.xlane.f32.xlu0 %v596
          %v674 = vpop.xlane.xlu0 %673
          %675 = vadd.xlane.f32.xlu0 %v601
          %v676 = vpop.xlane.xlu0 %675
          %677 = vadd.xlane.f32.xlu0 %v606
          %v678 = vpop.xlane.xlu0 %677
          %679 = vadd.xlane.f32.xlu0 %v611
          %v680 = vpop.xlane.xlu0 %679
          %681 = vadd.xlane.f32.xlu0 %v616
          %v682 = vpop.xlane.xlu0 %681
          %v683 = vmul.f32 %v620, 0.01
          %v684 = vmul.f32 %v622, 0.01
          %v685 = vmul.f32 %v624, 0.01
          %v686 = vmul.f32 %v626, 0.01
          %v687 = vmul.f32 %v628, 0.01
          %v688 = vmul.f32 %v630, 0.01
          %v689 = vmul.f32 %v632, 0.01
          %v690 = vmul.f32 %v634, 0.01
          %v691 = vmul.f32 %v636, 0.01
          %v692 = vmul.f32 %v638, 0.01
          %v693 = vmul.f32 %v640, 0.01
          %v694 = vmul.f32 %v642, 0.01
          %v695 = vmul.f32 %v644, 0.01
          %v696 = vmul.f32 %v646, 0.01
          %v697 = vmul.f32 %v648, 0.01
          %v698 = vmul.f32 %v650, 0.01
          %v699 = vmul.f32 %v652, 0.01
          %v700 = vmul.f32 %v654, 0.01
          %v701 = vmul.f32 %v656, 0.01
          %v702 = vmul.f32 %v658, 0.01
          %v703 = vmul.f32 %v660, 0.01
          %v704 = vmul.f32 %v662, 0.01
          %v705 = vmul.f32 %v664, 0.01
          %v706 = vmul.f32 %v666, 0.01
          %v707 = vmul.f32 %v668, 0.01
          %v708 = vmul.f32 %v670, 0.01
          %v709 = vmul.f32 %v672, 0.01
          %v710 = vmul.f32 %v674, 0.01
          %v711 = vmul.f32 %v676, 0.01
          %v712 = vmul.f32 %v678, 0.01
          %v713 = vmul.f32 %v680, 0.01
          %v714 = vmul.f32 %v682, 0.01
          %v715 = vsub.f32 %v461, %v683
          %v716 = vsub.f32 %v466, %v684
          %v717 = vsub.f32 %v471, %v685
          %v718 = vsub.f32 %v476, %v686
          %v719 = vsub.f32 %v481, %v687
          %v720 = vsub.f32 %v486, %v688
          %v721 = vsub.f32 %v491, %v689
          %v722 = vsub.f32 %v496, %v690
          %v723 = vsub.f32 %v501, %v691
          %v724 = vsub.f32 %v506, %v692
          %v725 = vsub.f32 %v511, %v693
          %v726 = vsub.f32 %v516, %v694
          %v727 = vsub.f32 %v521, %v695
          %v728 = vsub.f32 %v526, %v696
          %v729 = vsub.f32 %v531, %v697
          %v730 = vsub.f32 %v536, %v698
          %v731 = vsub.f32 %v541, %v699
          %v732 = vsub.f32 %v546, %v700
          %v733 = vsub.f32 %v551, %v701
          %v734 = vsub.f32 %v556, %v702
          %v735 = vsub.f32 %v561, %v703
          %v736 = vsub.f32 %v566, %v704
          %v737 = vsub.f32 %v571, %v705
          %v738 = vsub.f32 %v576, %v706
          %v739 = vsub.f32 %v581, %v707
          %v740 = vsub.f32 %v586, %v708
          %v741 = vsub.f32 %v591, %v709
          %v742 = vsub.f32 %v596, %v710
          %v743 = vsub.f32 %v601, %v711
          %v744 = vsub.f32 %v606, %v712
          %v745 = vsub.f32 %v611, %v713
          %v746 = vsub.f32 %v616, %v714
          %v747 = vmul.f32 %v715, %v248
          %v748 = vmul.f32 %v716, %v248
          %v749 = vmul.f32 %v717, %v248
          %v750 = vmul.f32 %v718, %v248
          %v751 = vmul.f32 %v719, %v248
          %v752 = vmul.f32 %v720, %v248
          %v753 = vmul.f32 %v721, %v248
          %v754 = vmul.f32 %v722, %v248
          %v755 = vmul.f32 %v723, %v248
          %v756 = vmul.f32 %v724, %v248
          %v757 = vmul.f32 %v725, %v248
          %v758 = vmul.f32 %v726, %v248
          %v759 = vmul.f32 %v727, %v248
          %v760 = vmul.f32 %v728, %v248
          %v761 = vmul.f32 %v729, %v248
          %v762 = vmul.f32 %v730, %v248
          %v763 = vmul.f32 %v731, %v248
          %v764 = vmul.f32 %v732, %v248
          %v765 = vmul.f32 %v733, %v248
          %v766 = vmul.f32 %v734, %v248
          %v767 = vmul.f32 %v735, %v248
          %v768 = vmul.f32 %v736, %v248
          %v769 = vmul.f32 %v737, %v248
          %v770 = vmul.f32 %v738, %v248
          %v771 = vmul.f32 %v739, %v248
          %v772 = vmul.f32 %v740, %v248
          %v773 = vmul.f32 %v741, %v248
          %v774 = vmul.f32 %v742, %v248
          %v775 = vmul.f32 %v743, %v248
          %v776 = vmul.f32 %v744, %v248
          %v777 = vmul.f32 %v745, %v248
          %v778 = vmul.f32 %v746, %v248
          %v779 = vmul.f32 %v747, %v747
          %v780 = vmul.f32 %v748, %v748
          %v781 = vmul.f32 %v749, %v749
          %v782 = vmul.f32 %v750, %v750
          %v783 = vmul.f32 %v751, %v751
          %v784 = vmul.f32 %v752, %v752
          %v785 = vmul.f32 %v753, %v753
          %v786 = vmul.f32 %v754, %v754
          %v787 = vmul.f32 %v755, %v755
          %v788 = vmul.f32 %v756, %v756
          %v789 = vmul.f32 %v757, %v757
          %v790 = vmul.f32 %v758, %v758
          %v791 = vmul.f32 %v759, %v759
          %v792 = vmul.f32 %v760, %v760
          %v793 = vmul.f32 %v761, %v761
          %v794 = vmul.f32 %v762, %v762
          %v795 = vmul.f32 %v763, %v763
          %v796 = vmul.f32 %v764, %v764
          %v797 = vmul.f32 %v765, %v765
          %v798 = vmul.f32 %v766, %v766
          %v799 = vmul.f32 %v767, %v767
          %v800 = vmul.f32 %v768, %v768
          %v801 = vmul.f32 %v769, %v769
          %v802 = vmul.f32 %v770, %v770
          %v803 = vmul.f32 %v771, %v771
          %v804 = vmul.f32 %v772, %v772
          %v805 = vmul.f32 %v773, %v773
          %v806 = vmul.f32 %v774, %v774
          %v807 = vmul.f32 %v775, %v775
          %v808 = vmul.f32 %v776, %v776
          %v809 = vmul.f32 %v777, %v777
          %v810 = vmul.f32 %v778, %v778
          %811 = vadd.xlane.f32.xlu0 %v779
          %v812 = vpop.xlane.xlu0 %811
          %813 = vadd.xlane.f32.xlu0 %v780
          %v814 = vpop.xlane.xlu0 %813
          %815 = vadd.xlane.f32.xlu0 %v781
          %v816 = vpop.xlane.xlu0 %815
          %817 = vadd.xlane.f32.xlu0 %v782
          %v818 = vpop.xlane.xlu0 %817
          %819 = vadd.xlane.f32.xlu0 %v783
          %v820 = vpop.xlane.xlu0 %819
          %821 = vadd.xlane.f32.xlu0 %v784
          %v822 = vpop.xlane.xlu0 %821
          %823 = vadd.xlane.f32.xlu0 %v785
          %v824 = vpop.xlane.xlu0 %823
          %825 = vadd.xlane.f32.xlu0 %v786
          %v826 = vpop.xlane.xlu0 %825
          %827 = vadd.xlane.f32.xlu0 %v787
          %v828 = vpop.xlane.xlu0 %827
          %829 = vadd.xlane.f32.xlu0 %v788
          %v830 = vpop.xlane.xlu0 %829
          %831 = vadd.xlane.f32.xlu0 %v789
          %v832 = vpop.xlane.xlu0 %831
          %833 = vadd.xlane.f32.xlu0 %v790
          %v834 = vpop.xlane.xlu0 %833
          %835 = vadd.xlane.f32.xlu0 %v791
          %v836 = vpop.xlane.xlu0 %835
          %837 = vadd.xlane.f32.xlu0 %v792
          %v838 = vpop.xlane.xlu0 %837
          %839 = vadd.xlane.f32.xlu0 %v793
          %v840 = vpop.xlane.xlu0 %839
          %841 = vadd.xlane.f32.xlu0 %v794
          %v842 = vpop.xlane.xlu0 %841
          %843 = vadd.xlane.f32.xlu0 %v795
          %v844 = vpop.xlane.xlu0 %843
          %845 = vadd.xlane.f32.xlu0 %v796
          %v846 = vpop.xlane.xlu0 %845
          %847 = vadd.xlane.f32.xlu0 %v797
          %v848 = vpop.xlane.xlu0 %847
          %849 = vadd.xlane.f32.xlu0 %v798
          %v850 = vpop.xlane.xlu0 %849
          %851 = vadd.xlane.f32.xlu0 %v799
          %v852 = vpop.xlane.xlu0 %851
          %853 = vadd.xlane.f32.xlu0 %v800
          %v854 = vpop.xlane.xlu0 %853
          %855 = vadd.xlane.f32.xlu0 %v801
          %v856 = vpop.xlane.xlu0 %855
          %857 = vadd.xlane.f32.xlu0 %v802
          %v858 = vpop.xlane.xlu0 %857
          %859 = vadd.xlane.f32.xlu0 %v803
          %v860 = vpop.xlane.xlu0 %859
          %861 = vadd.xlane.f32.xlu0 %v804
          %v862 = vpop.xlane.xlu0 %861
          %863 = vadd.xlane.f32.xlu0 %v805
          %v864 = vpop.xlane.xlu0 %863
          %865 = vadd.xlane.f32.xlu0 %v806
          %v866 = vpop.xlane.xlu0 %865
          %867 = vadd.xlane.f32.xlu0 %v807
          %v868 = vpop.xlane.xlu0 %867
          %869 = vadd.xlane.f32.xlu0 %v808
          %v870 = vpop.xlane.xlu0 %869
          %871 = vadd.xlane.f32.xlu0 %v809
          %v872 = vpop.xlane.xlu0 %871
          %873 = vadd.xlane.f32.xlu0 %v810
          %v874 = vpop.xlane.xlu0 %873
          %v875 = vmul.f32 %v812, 0.01
          %v876 = vmul.f32 %v814, 0.01
          %v877 = vmul.f32 %v816, 0.01
          %v878 = vmul.f32 %v818, 0.01
          %v879 = vmul.f32 %v820, 0.01
          %v880 = vmul.f32 %v822, 0.01
          %v881 = vmul.f32 %v824, 0.01
          %v882 = vmul.f32 %v826, 0.01
          %v883 = vmul.f32 %v828, 0.01
          %v884 = vmul.f32 %v830, 0.01
          %v885 = vmul.f32 %v832, 0.01
          %v886 = vmul.f32 %v834, 0.01
          %v887 = vmul.f32 %v836, 0.01
          %v888 = vmul.f32 %v838, 0.01
          %v889 = vmul.f32 %v840, 0.01
          %v890 = vmul.f32 %v842, 0.01
          %v891 = vmul.f32 %v844, 0.01
          %v892 = vmul.f32 %v846, 0.01
          %v893 = vmul.f32 %v848, 0.01
          %v894 = vmul.f32 %v850, 0.01
          %v895 = vmul.f32 %v852, 0.01
          %v896 = vmul.f32 %v854, 0.01
          %v897 = vmul.f32 %v856, 0.01
          %v898 = vmul.f32 %v858, 0.01
          %v899 = vmul.f32 %v860, 0.01
          %v900 = vmul.f32 %v862, 0.01
          %v901 = vmul.f32 %v864, 0.01
          %v902 = vmul.f32 %v866, 0.01
          %v903 = vmul.f32 %v868, 0.01
          %v904 = vmul.f32 %v870, 0.01
          %v905 = vmul.f32 %v872, 0.01
          %v906 = vmul.f32 %v874, 0.01
          %v907 = vadd.f32 %v875, 1e-05
          %v908 = vadd.f32 %v876, 1e-05
          %v909 = vadd.f32 %v877, 1e-05
          %v910 = vadd.f32 %v878, 1e-05
          %v911 = vadd.f32 %v879, 1e-05
          %v912 = vadd.f32 %v880, 1e-05
          %v913 = vadd.f32 %v881, 1e-05
          %v914 = vadd.f32 %v882, 1e-05
          %v915 = vadd.f32 %v883, 1e-05
          %v916 = vadd.f32 %v884, 1e-05
          %v917 = vadd.f32 %v885, 1e-05
          %v918 = vadd.f32 %v886, 1e-05
          %v919 = vadd.f32 %v887, 1e-05
          %v920 = vadd.f32 %v888, 1e-05
          %v921 = vadd.f32 %v889, 1e-05
          %v922 = vadd.f32 %v890, 1e-05
          %v923 = vadd.f32 %v891, 1e-05
          %v924 = vadd.f32 %v892, 1e-05
          %v925 = vadd.f32 %v893, 1e-05
          %v926 = vadd.f32 %v894, 1e-05
          %v927 = vadd.f32 %v895, 1e-05
          %v928 = vadd.f32 %v896, 1e-05
          %v929 = vadd.f32 %v897, 1e-05
          %v930 = vadd.f32 %v898, 1e-05
          %v931 = vadd.f32 %v899, 1e-05
          %v932 = vadd.f32 %v900, 1e-05
          %v933 = vadd.f32 %v901, 1e-05
          %v934 = vadd.f32 %v902, 1e-05
          %v935 = vadd.f32 %v903, 1e-05
          %v936 = vadd.f32 %v904, 1e-05
          %v937 = vadd.f32 %v905, 1e-05
          %v938 = vadd.f32 %v906, 1e-05
          %v939 = vrsqrt.pop %v907
          %v940 = vrsqrt.pop %v908
          %v941 = vrsqrt.pop %v909
          %v942 = vrsqrt.pop %v910
          %v943 = vrsqrt.pop %v911
          %v944 = vrsqrt.pop %v912
          %v945 = vrsqrt.pop %v913
          %v946 = vrsqrt.pop %v914
          %v947 = vrsqrt.pop %v915
          %v948 = vrsqrt.pop %v916
          %v949 = vrsqrt.pop %v917
          %v950 = vrsqrt.pop %v918
          %v951 = vrsqrt.pop %v919
          %v952 = vrsqrt.pop %v920
          %v953 = vrsqrt.pop %v921
          %v954 = vrsqrt.pop %v922
          %v955 = vrsqrt.pop %v923
          %v956 = vrsqrt.pop %v924
          %v957 = vrsqrt.pop %v925
          %v958 = vrsqrt.pop %v926
          %v959 = vrsqrt.pop %v927
          %v960 = vrsqrt.pop %v928
          %v961 = vrsqrt.pop %v929
          %v962 = vrsqrt.pop %v930
          %v963 = vrsqrt.pop %v931
          %v964 = vrsqrt.pop %v932
          %v965 = vrsqrt.pop %v933
          %v966 = vrsqrt.pop %v934
          %v967 = vrsqrt.pop %v935
          %v968 = vrsqrt.pop %v936
          %v969 = vrsqrt.pop %v937
          %v970 = vrsqrt.pop %v938
          %v971 = vmul.f32 %v715, %v939
          %v972 = vmul.f32 %v716, %v940
          %v973 = vmul.f32 %v717, %v941
          %v974 = vmul.f32 %v718, %v942
          %v975 = vmul.f32 %v719, %v943
          %v976 = vmul.f32 %v720, %v944
          %v977 = vmul.f32 %v721, %v945
          %v978 = vmul.f32 %v722, %v946
          %v979 = vmul.f32 %v723, %v947
          %v980 = vmul.f32 %v724, %v948
          %v981 = vmul.f32 %v725, %v949
          %v982 = vmul.f32 %v726, %v950
          %v983 = vmul.f32 %v727, %v951
          %v984 = vmul.f32 %v728, %v952
          %v985 = vmul.f32 %v729, %v953
          %v986 = vmul.f32 %v730, %v954
          %v987 = vmul.f32 %v731, %v955
          %v988 = vmul.f32 %v732, %v956
          %v989 = vmul.f32 %v733, %v957
          %v990 = vmul.f32 %v734, %v958
          %v991 = vmul.f32 %v735, %v959
          %v992 = vmul.f32 %v736, %v960
          %v993 = vmul.f32 %v737, %v961
          %v994 = vmul.f32 %v738, %v962
          %v995 = vmul.f32 %v739, %v963
          %v996 = vmul.f32 %v740, %v964
          %v997 = vmul.f32 %v741, %v965
          %v998 = vmul.f32 %v742, %v966
          %v999 = vmul.f32 %v743, %v967
          %v1000 = vmul.f32 %v744, %v968
          %v1001 = vmul.f32 %v745, %v969
          %v1002 = vmul.f32 %v746, %v970
          %v1003 = vlaneseq
          %v1004 = vshrl.u32 %v1003, 7
          %v1005 = vsub.s32 1, %v1004
          %v1006 = vrot.slane %v258, %v1005
          %v1007 = vmul.f32 %v971, %v1006
          %v1008 = vmul.f32 %v972, %v1006
          %v1009 = vmul.f32 %v973, %v1006
          %v1010 = vmul.f32 %v974, %v1006
          %v1011 = vmul.f32 %v975, %v1006
          %v1012 = vmul.f32 %v976, %v1006
          %v1013 = vmul.f32 %v977, %v1006
          %v1014 = vmul.f32 %v978, %v1006
          %v1015 = vmul.f32 %v979, %v1006
          %v1016 = vmul.f32 %v980, %v1006
          %v1017 = vmul.f32 %v981, %v1006
          %v1018 = vmul.f32 %v982, %v1006
          %v1019 = vmul.f32 %v983, %v1006
          %v1020 = vmul.f32 %v984, %v1006
          %v1021 = vmul.f32 %v985, %v1006
          %v1022 = vmul.f32 %v986, %v1006
          %v1023 = vmul.f32 %v987, %v1006
          %v1024 = vmul.f32 %v988, %v1006
          %v1025 = vmul.f32 %v989, %v1006
          %v1026 = vmul.f32 %v990, %v1006
          %v1027 = vmul.f32 %v991, %v1006
          %v1028 = vmul.f32 %v992, %v1006
          %v1029 = vmul.f32 %v993, %v1006
          %v1030 = vmul.f32 %v994, %v1006
          %v1031 = vmul.f32 %v995, %v1006
          %v1032 = vmul.f32 %v996, %v1006
          %v1033 = vmul.f32 %v997, %v1006
          %v1034 = vmul.f32 %v998, %v1006
          %v1035 = vmul.f32 %v999, %v1006
          %v1036 = vmul.f32 %v1000, %v1006
          %v1037 = vmul.f32 %v1001, %v1006
          %v1038 = vmul.f32 %v1002, %v1006
          %v1039 = vlaneseq
          %v1040 = vshrl.u32 %v1039, 7
          %v1041 = vsub.s32 2, %v1040
          %v1042 = vrot.slane %v258, %v1041
          %v1043 = vadd.f32 %v1007, %v1042
          %v1044 = vadd.f32 %v1008, %v1042
          %v1045 = vadd.f32 %v1009, %v1042
          %v1046 = vadd.f32 %v1010, %v1042
          %v1047 = vadd.f32 %v1011, %v1042
          %v1048 = vadd.f32 %v1012, %v1042
          %v1049 = vadd.f32 %v1013, %v1042
          %v1050 = vadd.f32 %v1014, %v1042
          %v1051 = vadd.f32 %v1015, %v1042
          %v1052 = vadd.f32 %v1016, %v1042
          %v1053 = vadd.f32 %v1017, %v1042
          %v1054 = vadd.f32 %v1018, %v1042
          %v1055 = vadd.f32 %v1019, %v1042
          %v1056 = vadd.f32 %v1020, %v1042
          %v1057 = vadd.f32 %v1021, %v1042
          %v1058 = vadd.f32 %v1022, %v1042
          %v1059 = vadd.f32 %v1023, %v1042
          %v1060 = vadd.f32 %v1024, %v1042
          %v1061 = vadd.f32 %v1025, %v1042
          %v1062 = vadd.f32 %v1026, %v1042
          %v1063 = vadd.f32 %v1027, %v1042
          %v1064 = vadd.f32 %v1028, %v1042
          %v1065 = vadd.f32 %v1029, %v1042
          %v1066 = vadd.f32 %v1030, %v1042
          %v1067 = vadd.f32 %v1031, %v1042
          %v1068 = vadd.f32 %v1032, %v1042
          %v1069 = vadd.f32 %v1033, %v1042
          %v1070 = vadd.f32 %v1034, %v1042
          %v1071 = vadd.f32 %v1035, %v1042
          %v1072 = vadd.f32 %v1036, %v1042
          %v1073 = vadd.f32 %v1037, %v1042
          %v1074 = vadd.f32 %v1038, %v1042
          %v1075 = vmax.f32 %v1043, 0.0
          %v1076 = vmax.f32 %v1044, 0.0
          %v1077 = vmax.f32 %v1045, 0.0
          %v1078 = vmax.f32 %v1046, 0.0
          %v1079 = vmax.f32 %v1047, 0.0
          %v1080 = vmax.f32 %v1048, 0.0
          %v1081 = vmax.f32 %v1049, 0.0
          %v1082 = vmax.f32 %v1050, 0.0
          %v1083 = vmax.f32 %v1051, 0.0
          %v1084 = vmax.f32 %v1052, 0.0
          %v1085 = vmax.f32 %v1053, 0.0
          %v1086 = vmax.f32 %v1054, 0.0
          %v1087 = vmax.f32 %v1055, 0.0
          %v1088 = vmax.f32 %v1056, 0.0
          %v1089 = vmax.f32 %v1057, 0.0
          %v1090 = vmax.f32 %v1058, 0.0
          %v1091 = vmax.f32 %v1059, 0.0
          %v1092 = vmax.f32 %v1060, 0.0
          %v1093 = vmax.f32 %v1061, 0.0
          %v1094 = vmax.f32 %v1062, 0.0
          %v1095 = vmax.f32 %v1063, 0.0
          %v1096 = vmax.f32 %v1064, 0.0
          %v1097 = vmax.f32 %v1065, 0.0
          %v1098 = vmax.f32 %v1066, 0.0
          %v1099 = vmax.f32 %v1067, 0.0
          %v1100 = vmax.f32 %v1068, 0.0
          %v1101 = vmax.f32 %v1069, 0.0
          %v1102 = vmax.f32 %v1070, 0.0
          %v1103 = vmax.f32 %v1071, 0.0
          %v1104 = vmax.f32 %v1072, 0.0
          %v1105 = vmax.f32 %v1073, 0.0
          %v1106 = vmax.f32 %v1074, 0.0
          %v1107 = vld [vmem:[%s2] sm:$0xff]
          %v1108 = vld [vmem:[%s2 + $0x8] sm:$0xff]
          %v1109 = vld [vmem:[%s2 + $0x10] sm:$0xff]
          %v1110 = vld [vmem:[%s2 + $0x18] sm:$0xff]
          %v1111 = vld [vmem:[%s2 + $0x20] sm:$0xff]
          %v1112 = vld [vmem:[%s2 + $0x28] sm:$0xff]
          %v1113 = vld [vmem:[%s2 + $0x30] sm:$0xff]
          %v1114 = vld [vmem:[%s2 + $0x38] sm:$0xff]
          %v1115 = vld [vmem:[%s2 + $0x40] sm:$0xff]
          %v1116 = vld [vmem:[%s2 + $0x48] sm:$0xff]
          %v1117 = vld [vmem:[%s2 + $0x50] sm:$0xff]
          %v1118 = vld [vmem:[%s2 + $0x58] sm:$0xff]
          %v1119 = vld [vmem:[%s2 + $0x60] sm:$0xff]
          %v1120 = vld [vmem:[%s2 + $0x68] sm:$0xff]
          %v1121 = vld [vmem:[%s2 + $0x70] sm:$0xff]
          %v1122 = vld [vmem:[%s2 + $0x78] sm:$0xff]
          %v1123 = vlaneseq
          %v1124 = vshrl.u32 %v1123, 7
          %v1125 = vsub.s32 3, %v1124
          %v1126 = vrot.slane %v258, %v1125
          %1127 = vmatprep.subr.mxu0 0.0
          %1128 = vmatpush1.msra.mxu0 %v1122
          %1129 = vmatprep.subr.mxu0 0.0
          %1130 = vmatpush1.msra.mxu0 %v1121
          %1131 = vmatprep.subr.mxu0 0.0
          %1132 = vmatpush1.msra.mxu0 %v1120
          %1133 = vmatprep.subr.mxu0 0.0
          %1134 = vmatpush1.msra.mxu0 %v1119
          %1135 = vmatprep.subr.mxu0 0.0
          %1136 = vmatpush1.msra.mxu0 %v1118
          %1137 = vmatprep.subr.mxu0 0.0
          %1138 = vmatpush1.msra.mxu0 %v1117
          %1139 = vmatprep.subr.mxu0 0.0
          %1140 = vmatpush1.msra.mxu0 %v1116
          %1141 = vmatprep.subr.mxu0 0.0
          %1142 = vmatpush1.msra.mxu0 %v1115
          %1143 = vmatprep.subr.mxu0 0.0
          %1144 = vmatpush1.msra.mxu0 %v1114
          %1145 = vmatprep.subr.mxu0 0.0
          %1146 = vmatpush1.msra.mxu0 %v1113
          %1147 = vmatprep.subr.mxu0 0.0
          %1148 = vmatpush1.msra.mxu0 %v1112
          %1149 = vmatprep.subr.mxu0 0.0
          %1150 = vmatpush1.msra.mxu0 %v1111
          %1151 = vmatprep.subr.mxu0 0.0
          %1152 = vmatpush1.msra.mxu0 %v1110
          %1153 = vmatprep.subr.mxu0 0.0
          %1154 = vmatpush1.msra.mxu0 %v1109
          %1155 = vmatprep.subr.mxu0 0.0
          %1156 = vmatpush1.msra.mxu0 %v1108
          %1157 = vmatprep.subr.mxu0 0.0
          %1158 = vmatpush1.msra.mxu0 %v1107
          %1159 = vmatprep.subr.mxu0 0.0
          %1160 = vmatpush2.msra.mxu0 0.0
          %1161 = vmatprep.subr.mxu0 0.0
          %1162 = vmatpush2.msra.mxu0 0.0
          %1163 = vmatprep.subr.mxu0 0.0
          %1164 = vmatpush2.msra.mxu0 0.0
          %1165 = vmatprep.subr.mxu0 0.0
          %1166 = vmatpush2.msra.mxu0 0.0
          %1167 = vmatprep.subr.mxu0 0.0
          %1168 = vmatpush2.msra.mxu0 0.0
          %1169 = vmatprep.subr.mxu0 0.0
          %1170 = vmatpush2.msra.mxu0 0.0
          %1171 = vmatprep.subr.mxu0 0.0
          %1172 = vmatpush2.msra.mxu0 0.0
          %1173 = vmatprep.subr.mxu0 0.0
          %1174 = vmatpush2.msra.mxu0 0.0
          %1175 = vmatprep.subr.mxu0 0.0
          %1176 = vmatpush2.msra.mxu0 0.0
          %1177 = vmatprep.subr.mxu0 0.0
          %1178 = vmatpush2.msra.mxu0 0.0
          %1179 = vmatprep.subr.mxu0 0.0
          %1180 = vmatpush2.msra.mxu0 0.0
          %1181 = vmatprep.subr.mxu0 0.0
          %1182 = vmatpush2.msra.mxu0 0.0
          %1183 = vmatprep.subr.mxu0 0.0
          %1184 = vmatpush2.msra.mxu0 0.0
          %1185 = vmatprep.subr.mxu0 0.0
          %1186 = vmatpush2.msra.mxu0 0.0
          %1187 = vmatprep.subr.mxu0 0.0
          %1188 = vmatpush2.msra.mxu0 0.0
          %1189 = vmatprep.subr.mxu0 0.0
          %1190 = vmatpush2.msra.mxu0 0.0
          %1191 = vmatprep.mubr.f32.mxu0 0.0
          %1192 = vmatmul.mubr.f32.gmra.mxu0 %v1075
          %v1193 = vpop.f32.mrf.mxu0
          %v1194 = vadd.f32 %v1126, %v1193
          %v1195 = vpop.f32.mrf.mxu0
          %1196 = vmatprep.mubr.f32.mxu0 0.0
          %1197 = vmatmul.mubr.f32.gmra.mxu0 %v1076
          %v1198 = vpop.f32.mrf.mxu0
          %v1199 = vadd.f32 %v1126, %v1198
          %v1200 = vpop.f32.mrf.mxu0
          %1201 = vmatprep.mubr.f32.mxu0 0.0
          %1202 = vmatmul.mubr.f32.gmra.mxu0 %v1077
          %v1203 = vpop.f32.mrf.mxu0
          %v1204 = vadd.f32 %v1126, %v1203
          %v1205 = vpop.f32.mrf.mxu0
          %1206 = vmatprep.mubr.f32.mxu0 0.0
          %1207 = vmatmul.mubr.f32.gmra.mxu0 %v1078
          %v1208 = vpop.f32.mrf.mxu0
          %v1209 = vadd.f32 %v1126, %v1208
          %v1210 = vpop.f32.mrf.mxu0
          %1211 = vmatprep.mubr.f32.mxu0 0.0
          %1212 = vmatmul.mubr.f32.gmra.mxu0 %v1079
          %v1213 = vpop.f32.mrf.mxu0
          %v1214 = vadd.f32 %v1126, %v1213
          %v1215 = vpop.f32.mrf.mxu0
          %1216 = vmatprep.mubr.f32.mxu0 0.0
          %1217 = vmatmul.mubr.f32.gmra.mxu0 %v1080
          %v1218 = vpop.f32.mrf.mxu0
          %v1219 = vadd.f32 %v1126, %v1218
          %v1220 = vpop.f32.mrf.mxu0
          %1221 = vmatprep.mubr.f32.mxu0 0.0
          %1222 = vmatmul.mubr.f32.gmra.mxu0 %v1081
          %v1223 = vpop.f32.mrf.mxu0
          %v1224 = vadd.f32 %v1126, %v1223
          %v1225 = vpop.f32.mrf.mxu0
          %1226 = vmatprep.mubr.f32.mxu0 0.0
          %1227 = vmatmul.mubr.f32.gmra.mxu0 %v1082
          %v1228 = vpop.f32.mrf.mxu0
          %v1229 = vadd.f32 %v1126, %v1228
          %v1230 = vpop.f32.mrf.mxu0
          %1231 = vmatprep.mubr.f32.mxu0 0.0
          %1232 = vmatmul.mubr.f32.gmra.mxu0 %v1083
          %v1233 = vpop.f32.mrf.mxu0
          %v1234 = vadd.f32 %v1126, %v1233
          %v1235 = vpop.f32.mrf.mxu0
          %1236 = vmatprep.mubr.f32.mxu0 0.0
          %1237 = vmatmul.mubr.f32.gmra.mxu0 %v1084
          %v1238 = vpop.f32.mrf.mxu0
          %v1239 = vadd.f32 %v1126, %v1238
          %v1240 = vpop.f32.mrf.mxu0
          %1241 = vmatprep.mubr.f32.mxu0 0.0
          %1242 = vmatmul.mubr.f32.gmra.mxu0 %v1085
          %v1243 = vpop.f32.mrf.mxu0
          %v1244 = vadd.f32 %v1126, %v1243
          %v1245 = vpop.f32.mrf.mxu0
          %1246 = vmatprep.mubr.f32.mxu0 0.0
          %1247 = vmatmul.mubr.f32.gmra.mxu0 %v1086
          %v1248 = vpop.f32.mrf.mxu0
          %v1249 = vadd.f32 %v1126, %v1248
          %v1250 = vpop.f32.mrf.mxu0
          %1251 = vmatprep.mubr.f32.mxu0 0.0
          %1252 = vmatmul.mubr.f32.gmra.mxu0 %v1087
          %v1253 = vpop.f32.mrf.mxu0
          %v1254 = vadd.f32 %v1126, %v1253
          %v1255 = vpop.f32.mrf.mxu0
          %1256 = vmatprep.mubr.f32.mxu0 0.0
          %1257 = vmatmul.mubr.f32.gmra.mxu0 %v1088
          %v1258 = vpop.f32.mrf.mxu0
          %v1259 = vadd.f32 %v1126, %v1258
          %v1260 = vpop.f32.mrf.mxu0
          %1261 = vmatprep.mubr.f32.mxu0 0.0
          %1262 = vmatmul.mubr.f32.gmra.mxu0 %v1089
          %v1263 = vpop.f32.mrf.mxu0
          %v1264 = vadd.f32 %v1126, %v1263
          %v1265 = vpop.f32.mrf.mxu0
          %1266 = vmatprep.mubr.f32.mxu0 0.0
          %1267 = vmatmul.mubr.f32.gmra.mxu0 %v1090
          %v1268 = vpop.f32.mrf.mxu0
          %v1269 = vadd.f32 %v1126, %v1268
          %v1270 = vpop.f32.mrf.mxu0
          %1271 = vmatprep.mubr.f32.mxu0 0.0
          %1272 = vmatmul.mubr.f32.gmra.mxu0 %v1091
          %v1273 = vpop.f32.mrf.mxu0
          %v1274 = vadd.f32 %v1126, %v1273
          %v1275 = vpop.f32.mrf.mxu0
          %1276 = vmatprep.mubr.f32.mxu0 0.0
          %1277 = vmatmul.mubr.f32.gmra.mxu0 %v1092
          %v1278 = vpop.f32.mrf.mxu0
          %v1279 = vadd.f32 %v1126, %v1278
          %v1280 = vpop.f32.mrf.mxu0
          %1281 = vmatprep.mubr.f32.mxu0 0.0
          %1282 = vmatmul.mubr.f32.gmra.mxu0 %v1093
          %v1283 = vpop.f32.mrf.mxu0
          %v1284 = vadd.f32 %v1126, %v1283
          %v1285 = vpop.f32.mrf.mxu0
          %1286 = vmatprep.mubr.f32.mxu0 0.0
          %1287 = vmatmul.mubr.f32.gmra.mxu0 %v1094
          %v1288 = vpop.f32.mrf.mxu0
          %v1289 = vadd.f32 %v1126, %v1288
          %v1290 = vpop.f32.mrf.mxu0
          %1291 = vmatprep.mubr.f32.mxu0 0.0
          %1292 = vmatmul.mubr.f32.gmra.mxu0 %v1095
          %v1293 = vpop.f32.mrf.mxu0
          %v1294 = vadd.f32 %v1126, %v1293
          %v1295 = vpop.f32.mrf.mxu0
          %1296 = vmatprep.mubr.f32.mxu0 0.0
          %1297 = vmatmul.mubr.f32.gmra.mxu0 %v1096
          %v1298 = vpop.f32.mrf.mxu0
          %v1299 = vadd.f32 %v1126, %v1298
          %v1300 = vpop.f32.mrf.mxu0
          %1301 = vmatprep.mubr.f32.mxu0 0.0
          %1302 = vmatmul.mubr.f32.gmra.mxu0 %v1097
          %v1303 = vpop.f32.mrf.mxu0
          %v1304 = vadd.f32 %v1126, %v1303
          %v1305 = vpop.f32.mrf.mxu0
          %1306 = vmatprep.mubr.f32.mxu0 0.0
          %1307 = vmatmul.mubr.f32.gmra.mxu0 %v1098
          %v1308 = vpop.f32.mrf.mxu0
          %v1309 = vadd.f32 %v1126, %v1308
          %v1310 = vpop.f32.mrf.mxu0
          %1311 = vmatprep.mubr.f32.mxu0 0.0
          %1312 = vmatmul.mubr.f32.gmra.mxu0 %v1099
          %v1313 = vpop.f32.mrf.mxu0
          %v1314 = vadd.f32 %v1126, %v1313
          %v1315 = vpop.f32.mrf.mxu0
          %1316 = vmatprep.mubr.f32.mxu0 0.0
          %1317 = vmatmul.mubr.f32.gmra.mxu0 %v1100
          %v1318 = vpop.f32.mrf.mxu0
          %v1319 = vadd.f32 %v1126, %v1318
          %v1320 = vpop.f32.mrf.mxu0
          %1321 = vmatprep.mubr.f32.mxu0 0.0
          %1322 = vmatmul.mubr.f32.gmra.mxu0 %v1101
          %v1323 = vpop.f32.mrf.mxu0
          %v1324 = vadd.f32 %v1126, %v1323
          %v1325 = vpop.f32.mrf.mxu0
          %1326 = vmatprep.mubr.f32.mxu0 0.0
          %1327 = vmatmul.mubr.f32.gmra.mxu0 %v1102
          %v1328 = vpop.f32.mrf.mxu0
          %v1329 = vadd.f32 %v1126, %v1328
          %v1330 = vpop.f32.mrf.mxu0
          %1331 = vmatprep.mubr.f32.mxu0 0.0
          %1332 = vmatmul.mubr.f32.gmra.mxu0 %v1103
          %v1333 = vpop.f32.mrf.mxu0
          %v1334 = vadd.f32 %v1126, %v1333
          %v1335 = vpop.f32.mrf.mxu0
          %1336 = vmatprep.mubr.f32.mxu0 0.0
          %1337 = vmatmul.mubr.f32.gmra.mxu0 %v1104
          %v1338 = vpop.f32.mrf.mxu0
          %v1339 = vadd.f32 %v1126, %v1338
          %v1340 = vpop.f32.mrf.mxu0
          %1341 = vmatprep.mubr.f32.mxu0 0.0
          %1342 = vmatmul.mubr.f32.gmra.mxu0 %v1105
          %v1343 = vpop.f32.mrf.mxu0
          %v1344 = vadd.f32 %v1126, %v1343
          %v1345 = vpop.f32.mrf.mxu0
          %1346 = vmatprep.mubr.f32.mxu0 0.0
          %1347 = vmatmul.mubr.f32.gmra.mxu0 %v1106
          %v1348 = vpop.f32.mrf.mxu0
          %v1349 = vadd.f32 %v1126, %v1348
          %v1350 = vpop.f32.mrf.mxu0
          %1351 = vdwg.mxu0
          %1352 = vadd.xlane.f32.xlu0 %v1194
          %v1353 = vpop.xlane.xlu0 %1352
          %1354 = vadd.xlane.f32.xlu0 %v1199
          %v1355 = vpop.xlane.xlu0 %1354
          %1356 = vadd.xlane.f32.xlu0 %v1204
          %v1357 = vpop.xlane.xlu0 %1356
          %1358 = vadd.xlane.f32.xlu0 %v1209
          %v1359 = vpop.xlane.xlu0 %1358
          %1360 = vadd.xlane.f32.xlu0 %v1214
          %v1361 = vpop.xlane.xlu0 %1360
          %1362 = vadd.xlane.f32.xlu0 %v1219
          %v1363 = vpop.xlane.xlu0 %1362
          %1364 = vadd.xlane.f32.xlu0 %v1224
          %v1365 = vpop.xlane.xlu0 %1364
          %1366 = vadd.xlane.f32.xlu0 %v1229
          %v1367 = vpop.xlane.xlu0 %1366
          %1368 = vadd.xlane.f32.xlu0 %v1234
          %v1369 = vpop.xlane.xlu0 %1368
          %1370 = vadd.xlane.f32.xlu0 %v1239
          %v1371 = vpop.xlane.xlu0 %1370
          %1372 = vadd.xlane.f32.xlu0 %v1244
          %v1373 = vpop.xlane.xlu0 %1372
          %1374 = vadd.xlane.f32.xlu0 %v1249
          %v1375 = vpop.xlane.xlu0 %1374
          %1376 = vadd.xlane.f32.xlu0 %v1254
          %v1377 = vpop.xlane.xlu0 %1376
          %1378 = vadd.xlane.f32.xlu0 %v1259
          %v1379 = vpop.xlane.xlu0 %1378
          %1380 = vadd.xlane.f32.xlu0 %v1264
          %v1381 = vpop.xlane.xlu0 %1380
          %1382 = vadd.xlane.f32.xlu0 %v1269
          %v1383 = vpop.xlane.xlu0 %1382
          %1384 = vadd.xlane.f32.xlu0 %v1274
          %v1385 = vpop.xlane.xlu0 %1384
          %1386 = vadd.xlane.f32.xlu0 %v1279
          %v1387 = vpop.xlane.xlu0 %1386
          %1388 = vadd.xlane.f32.xlu0 %v1284
          %v1389 = vpop.xlane.xlu0 %1388
          %1390 = vadd.xlane.f32.xlu0 %v1289
          %v1391 = vpop.xlane.xlu0 %1390
          %1392 = vadd.xlane.f32.xlu0 %v1294
          %v1393 = vpop.xlane.xlu0 %1392
          %1394 = vadd.xlane.f32.xlu0 %v1299
          %v1395 = vpop.xlane.xlu0 %1394
          %1396 = vadd.xlane.f32.xlu0 %v1304
          %v1397 = vpop.xlane.xlu0 %1396
          %1398 = vadd.xlane.f32.xlu0 %v1309
          %v1399 = vpop.xlane.xlu0 %1398
          %1400 = vadd.xlane.f32.xlu0 %v1314
          %v1401 = vpop.xlane.xlu0 %1400
          %1402 = vadd.xlane.f32.xlu0 %v1319
          %v1403 = vpop.xlane.xlu0 %1402
          %1404 = vadd.xlane.f32.xlu0 %v1324
          %v1405 = vpop.xlane.xlu0 %1404
          %1406 = vadd.xlane.f32.xlu0 %v1329
          %v1407 = vpop.xlane.xlu0 %1406
          %1408 = vadd.xlane.f32.xlu0 %v1334
          %v1409 = vpop.xlane.xlu0 %1408
          %1410 = vadd.xlane.f32.xlu0 %v1339
          %v1411 = vpop.xlane.xlu0 %1410
          %1412 = vadd.xlane.f32.xlu0 %v1344
          %v1413 = vpop.xlane.xlu0 %1412
          %1414 = vadd.xlane.f32.xlu0 %v1349
          %v1415 = vpop.xlane.xlu0 %1414
          %v1416 = vmul.f32 %v1353, 0.01
          %v1417 = vmul.f32 %v1355, 0.01
          %v1418 = vmul.f32 %v1357, 0.01
          %v1419 = vmul.f32 %v1359, 0.01
          %v1420 = vmul.f32 %v1361, 0.01
          %v1421 = vmul.f32 %v1363, 0.01
          %v1422 = vmul.f32 %v1365, 0.01
          %v1423 = vmul.f32 %v1367, 0.01
          %v1424 = vmul.f32 %v1369, 0.01
          %v1425 = vmul.f32 %v1371, 0.01
          %v1426 = vmul.f32 %v1373, 0.01
          %v1427 = vmul.f32 %v1375, 0.01
          %v1428 = vmul.f32 %v1377, 0.01
          %v1429 = vmul.f32 %v1379, 0.01
          %v1430 = vmul.f32 %v1381, 0.01
          %v1431 = vmul.f32 %v1383, 0.01
          %v1432 = vmul.f32 %v1385, 0.01
          %v1433 = vmul.f32 %v1387, 0.01
          %v1434 = vmul.f32 %v1389, 0.01
          %v1435 = vmul.f32 %v1391, 0.01
          %v1436 = vmul.f32 %v1393, 0.01
          %v1437 = vmul.f32 %v1395, 0.01
          %v1438 = vmul.f32 %v1397, 0.01
          %v1439 = vmul.f32 %v1399, 0.01
          %v1440 = vmul.f32 %v1401, 0.01
          %v1441 = vmul.f32 %v1403, 0.01
          %v1442 = vmul.f32 %v1405, 0.01
          %v1443 = vmul.f32 %v1407, 0.01
          %v1444 = vmul.f32 %v1409, 0.01
          %v1445 = vmul.f32 %v1411, 0.01
          %v1446 = vmul.f32 %v1413, 0.01
          %v1447 = vmul.f32 %v1415, 0.01
          %v1448 = vsub.f32 %v1194, %v1416
          %v1449 = vsub.f32 %v1199, %v1417
          %v1450 = vsub.f32 %v1204, %v1418
          %v1451 = vsub.f32 %v1209, %v1419
          %v1452 = vsub.f32 %v1214, %v1420
          %v1453 = vsub.f32 %v1219, %v1421
          %v1454 = vsub.f32 %v1224, %v1422
          %v1455 = vsub.f32 %v1229, %v1423
          %v1456 = vsub.f32 %v1234, %v1424
          %v1457 = vsub.f32 %v1239, %v1425
          %v1458 = vsub.f32 %v1244, %v1426
          %v1459 = vsub.f32 %v1249, %v1427
          %v1460 = vsub.f32 %v1254, %v1428
          %v1461 = vsub.f32 %v1259, %v1429
          %v1462 = vsub.f32 %v1264, %v1430
          %v1463 = vsub.f32 %v1269, %v1431
          %v1464 = vsub.f32 %v1274, %v1432
          %v1465 = vsub.f32 %v1279, %v1433
          %v1466 = vsub.f32 %v1284, %v1434
          %v1467 = vsub.f32 %v1289, %v1435
          %v1468 = vsub.f32 %v1294, %v1436
          %v1469 = vsub.f32 %v1299, %v1437
          %v1470 = vsub.f32 %v1304, %v1438
          %v1471 = vsub.f32 %v1309, %v1439
          %v1472 = vsub.f32 %v1314, %v1440
          %v1473 = vsub.f32 %v1319, %v1441
          %v1474 = vsub.f32 %v1324, %v1442
          %v1475 = vsub.f32 %v1329, %v1443
          %v1476 = vsub.f32 %v1334, %v1444
          %v1477 = vsub.f32 %v1339, %v1445
          %v1478 = vsub.f32 %v1344, %v1446
          %v1479 = vsub.f32 %v1349, %v1447
          %v1480 = vmul.f32 %v1448, %v248
          %v1481 = vmul.f32 %v1449, %v248
          %v1482 = vmul.f32 %v1450, %v248
          %v1483 = vmul.f32 %v1451, %v248
          %v1484 = vmul.f32 %v1452, %v248
          %v1485 = vmul.f32 %v1453, %v248
          %v1486 = vmul.f32 %v1454, %v248
          %v1487 = vmul.f32 %v1455, %v248
          %v1488 = vmul.f32 %v1456, %v248
          %v1489 = vmul.f32 %v1457, %v248
          %v1490 = vmul.f32 %v1458, %v248
          %v1491 = vmul.f32 %v1459, %v248
          %v1492 = vmul.f32 %v1460, %v248
          %v1493 = vmul.f32 %v1461, %v248
          %v1494 = vmul.f32 %v1462, %v248
          %v1495 = vmul.f32 %v1463, %v248
          %v1496 = vmul.f32 %v1464, %v248
          %v1497 = vmul.f32 %v1465, %v248
          %v1498 = vmul.f32 %v1466, %v248
          %v1499 = vmul.f32 %v1467, %v248
          %v1500 = vmul.f32 %v1468, %v248
          %v1501 = vmul.f32 %v1469, %v248
          %v1502 = vmul.f32 %v1470, %v248
          %v1503 = vmul.f32 %v1471, %v248
          %v1504 = vmul.f32 %v1472, %v248
          %v1505 = vmul.f32 %v1473, %v248
          %v1506 = vmul.f32 %v1474, %v248
          %v1507 = vmul.f32 %v1475, %v248
          %v1508 = vmul.f32 %v1476, %v248
          %v1509 = vmul.f32 %v1477, %v248
          %v1510 = vmul.f32 %v1478, %v248
          %v1511 = vmul.f32 %v1479, %v248
          %v1512 = vmul.f32 %v1480, %v1480
          %v1513 = vmul.f32 %v1481, %v1481
          %v1514 = vmul.f32 %v1482, %v1482
          %v1515 = vmul.f32 %v1483, %v1483
          %v1516 = vmul.f32 %v1484, %v1484
          %v1517 = vmul.f32 %v1485, %v1485
          %v1518 = vmul.f32 %v1486, %v1486
          %v1519 = vmul.f32 %v1487, %v1487
          %v1520 = vmul.f32 %v1488, %v1488
          %v1521 = vmul.f32 %v1489, %v1489
          %v1522 = vmul.f32 %v1490, %v1490
          %v1523 = vmul.f32 %v1491, %v1491
          %v1524 = vmul.f32 %v1492, %v1492
          %v1525 = vmul.f32 %v1493, %v1493
          %v1526 = vmul.f32 %v1494, %v1494
          %v1527 = vmul.f32 %v1495, %v1495
          %v1528 = vmul.f32 %v1496, %v1496
          %v1529 = vmul.f32 %v1497, %v1497
          %v1530 = vmul.f32 %v1498, %v1498
          %v1531 = vmul.f32 %v1499, %v1499
          %v1532 = vmul.f32 %v1500, %v1500
          %v1533 = vmul.f32 %v1501, %v1501
          %v1534 = vmul.f32 %v1502, %v1502
          %v1535 = vmul.f32 %v1503, %v1503
          %v1536 = vmul.f32 %v1504, %v1504
          %v1537 = vmul.f32 %v1505, %v1505
          %v1538 = vmul.f32 %v1506, %v1506
          %v1539 = vmul.f32 %v1507, %v1507
          %v1540 = vmul.f32 %v1508, %v1508
          %v1541 = vmul.f32 %v1509, %v1509
          %v1542 = vmul.f32 %v1510, %v1510
          %v1543 = vmul.f32 %v1511, %v1511
          %1544 = vadd.xlane.f32.xlu0 %v1512
          %v1545 = vpop.xlane.xlu0 %1544
          %1546 = vadd.xlane.f32.xlu0 %v1513
          %v1547 = vpop.xlane.xlu0 %1546
          %1548 = vadd.xlane.f32.xlu0 %v1514
          %v1549 = vpop.xlane.xlu0 %1548
          %1550 = vadd.xlane.f32.xlu0 %v1515
          %v1551 = vpop.xlane.xlu0 %1550
          %1552 = vadd.xlane.f32.xlu0 %v1516
          %v1553 = vpop.xlane.xlu0 %1552
          %1554 = vadd.xlane.f32.xlu0 %v1517
          %v1555 = vpop.xlane.xlu0 %1554
          %1556 = vadd.xlane.f32.xlu0 %v1518
          %v1557 = vpop.xlane.xlu0 %1556
          %1558 = vadd.xlane.f32.xlu0 %v1519
          %v1559 = vpop.xlane.xlu0 %1558
          %1560 = vadd.xlane.f32.xlu0 %v1520
          %v1561 = vpop.xlane.xlu0 %1560
          %1562 = vadd.xlane.f32.xlu0 %v1521
          %v1563 = vpop.xlane.xlu0 %1562
          %1564 = vadd.xlane.f32.xlu0 %v1522
          %v1565 = vpop.xlane.xlu0 %1564
          %1566 = vadd.xlane.f32.xlu0 %v1523
          %v1567 = vpop.xlane.xlu0 %1566
          %1568 = vadd.xlane.f32.xlu0 %v1524
          %v1569 = vpop.xlane.xlu0 %1568
          %1570 = vadd.xlane.f32.xlu0 %v1525
          %v1571 = vpop.xlane.xlu0 %1570
          %1572 = vadd.xlane.f32.xlu0 %v1526
          %v1573 = vpop.xlane.xlu0 %1572
          %1574 = vadd.xlane.f32.xlu0 %v1527
          %v1575 = vpop.xlane.xlu0 %1574
          %1576 = vadd.xlane.f32.xlu0 %v1528
          %v1577 = vpop.xlane.xlu0 %1576
          %1578 = vadd.xlane.f32.xlu0 %v1529
          %v1579 = vpop.xlane.xlu0 %1578
          %1580 = vadd.xlane.f32.xlu0 %v1530
          %v1581 = vpop.xlane.xlu0 %1580
          %1582 = vadd.xlane.f32.xlu0 %v1531
          %v1583 = vpop.xlane.xlu0 %1582
          %1584 = vadd.xlane.f32.xlu0 %v1532
          %v1585 = vpop.xlane.xlu0 %1584
          %1586 = vadd.xlane.f32.xlu0 %v1533
          %v1587 = vpop.xlane.xlu0 %1586
          %1588 = vadd.xlane.f32.xlu0 %v1534
          %v1589 = vpop.xlane.xlu0 %1588
          %1590 = vadd.xlane.f32.xlu0 %v1535
          %v1591 = vpop.xlane.xlu0 %1590
          %1592 = vadd.xlane.f32.xlu0 %v1536
          %v1593 = vpop.xlane.xlu0 %1592
          %1594 = vadd.xlane.f32.xlu0 %v1537
          %v1595 = vpop.xlane.xlu0 %1594
          %1596 = vadd.xlane.f32.xlu0 %v1538
          %v1597 = vpop.xlane.xlu0 %1596
          %1598 = vadd.xlane.f32.xlu0 %v1539
          %v1599 = vpop.xlane.xlu0 %1598
          %1600 = vadd.xlane.f32.xlu0 %v1540
          %v1601 = vpop.xlane.xlu0 %1600
          %1602 = vadd.xlane.f32.xlu0 %v1541
          %v1603 = vpop.xlane.xlu0 %1602
          %1604 = vadd.xlane.f32.xlu0 %v1542
          %v1605 = vpop.xlane.xlu0 %1604
          %1606 = vadd.xlane.f32.xlu0 %v1543
          %v1607 = vpop.xlane.xlu0 %1606
          %v1608 = vmul.f32 %v1545, 0.01
          %v1609 = vmul.f32 %v1547, 0.01
          %v1610 = vmul.f32 %v1549, 0.01
          %v1611 = vmul.f32 %v1551, 0.01
          %v1612 = vmul.f32 %v1553, 0.01
          %v1613 = vmul.f32 %v1555, 0.01
          %v1614 = vmul.f32 %v1557, 0.01
          %v1615 = vmul.f32 %v1559, 0.01
          %v1616 = vmul.f32 %v1561, 0.01
          %v1617 = vmul.f32 %v1563, 0.01
          %v1618 = vmul.f32 %v1565, 0.01
          %v1619 = vmul.f32 %v1567, 0.01
          %v1620 = vmul.f32 %v1569, 0.01
          %v1621 = vmul.f32 %v1571, 0.01
          %v1622 = vmul.f32 %v1573, 0.01
          %v1623 = vmul.f32 %v1575, 0.01
          %v1624 = vmul.f32 %v1577, 0.01
          %v1625 = vmul.f32 %v1579, 0.01
          %v1626 = vmul.f32 %v1581, 0.01
          %v1627 = vmul.f32 %v1583, 0.01
          %v1628 = vmul.f32 %v1585, 0.01
          %v1629 = vmul.f32 %v1587, 0.01
          %v1630 = vmul.f32 %v1589, 0.01
          %v1631 = vmul.f32 %v1591, 0.01
          %v1632 = vmul.f32 %v1593, 0.01
          %v1633 = vmul.f32 %v1595, 0.01
          %v1634 = vmul.f32 %v1597, 0.01
          %v1635 = vmul.f32 %v1599, 0.01
          %v1636 = vmul.f32 %v1601, 0.01
          %v1637 = vmul.f32 %v1603, 0.01
          %v1638 = vmul.f32 %v1605, 0.01
          %v1639 = vmul.f32 %v1607, 0.01
          %v1640 = vadd.f32 %v1608, 1e-05
          %v1641 = vadd.f32 %v1609, 1e-05
          %v1642 = vadd.f32 %v1610, 1e-05
          %v1643 = vadd.f32 %v1611, 1e-05
          %v1644 = vadd.f32 %v1612, 1e-05
          %v1645 = vadd.f32 %v1613, 1e-05
          %v1646 = vadd.f32 %v1614, 1e-05
          %v1647 = vadd.f32 %v1615, 1e-05
          %v1648 = vadd.f32 %v1616, 1e-05
          %v1649 = vadd.f32 %v1617, 1e-05
          %v1650 = vadd.f32 %v1618, 1e-05
          %v1651 = vadd.f32 %v1619, 1e-05
          %v1652 = vadd.f32 %v1620, 1e-05
          %v1653 = vadd.f32 %v1621, 1e-05
          %v1654 = vadd.f32 %v1622, 1e-05
          %v1655 = vadd.f32 %v1623, 1e-05
          %v1656 = vadd.f32 %v1624, 1e-05
          %v1657 = vadd.f32 %v1625, 1e-05
          %v1658 = vadd.f32 %v1626, 1e-05
          %v1659 = vadd.f32 %v1627, 1e-05
          %v1660 = vadd.f32 %v1628, 1e-05
          %v1661 = vadd.f32 %v1629, 1e-05
          %v1662 = vadd.f32 %v1630, 1e-05
          %v1663 = vadd.f32 %v1631, 1e-05
          %v1664 = vadd.f32 %v1632, 1e-05
          %v1665 = vadd.f32 %v1633, 1e-05
          %v1666 = vadd.f32 %v1634, 1e-05
          %v1667 = vadd.f32 %v1635, 1e-05
          %v1668 = vadd.f32 %v1636, 1e-05
          %v1669 = vadd.f32 %v1637, 1e-05
          %v1670 = vadd.f32 %v1638, 1e-05
          %v1671 = vadd.f32 %v1639, 1e-05
          %v1672 = vrsqrt.pop %v1640
          %v1673 = vrsqrt.pop %v1641
          %v1674 = vrsqrt.pop %v1642
          %v1675 = vrsqrt.pop %v1643
          %v1676 = vrsqrt.pop %v1644
          %v1677 = vrsqrt.pop %v1645
          %v1678 = vrsqrt.pop %v1646
          %v1679 = vrsqrt.pop %v1647
          %v1680 = vrsqrt.pop %v1648
          %v1681 = vrsqrt.pop %v1649
          %v1682 = vrsqrt.pop %v1650
          %v1683 = vrsqrt.pop %v1651
          %v1684 = vrsqrt.pop %v1652
          %v1685 = vrsqrt.pop %v1653
          %v1686 = vrsqrt.pop %v1654
          %v1687 = vrsqrt.pop %v1655
          %v1688 = vrsqrt.pop %v1656
          %v1689 = vrsqrt.pop %v1657
          %v1690 = vrsqrt.pop %v1658
          %v1691 = vrsqrt.pop %v1659
          %v1692 = vrsqrt.pop %v1660
          %v1693 = vrsqrt.pop %v1661
          %v1694 = vrsqrt.pop %v1662
          %v1695 = vrsqrt.pop %v1663
          %v1696 = vrsqrt.pop %v1664
          %v1697 = vrsqrt.pop %v1665
          %v1698 = vrsqrt.pop %v1666
          %v1699 = vrsqrt.pop %v1667
          %v1700 = vrsqrt.pop %v1668
          %v1701 = vrsqrt.pop %v1669
          %v1702 = vrsqrt.pop %v1670
          %v1703 = vrsqrt.pop %v1671
          %v1704 = vmul.f32 %v1448, %v1672
          %v1705 = vmul.f32 %v1449, %v1673
          %v1706 = vmul.f32 %v1450, %v1674
          %v1707 = vmul.f32 %v1451, %v1675
          %v1708 = vmul.f32 %v1452, %v1676
          %v1709 = vmul.f32 %v1453, %v1677
          %v1710 = vmul.f32 %v1454, %v1678
          %v1711 = vmul.f32 %v1455, %v1679
          %v1712 = vmul.f32 %v1456, %v1680
          %v1713 = vmul.f32 %v1457, %v1681
          %v1714 = vmul.f32 %v1458, %v1682
          %v1715 = vmul.f32 %v1459, %v1683
          %v1716 = vmul.f32 %v1460, %v1684
          %v1717 = vmul.f32 %v1461, %v1685
          %v1718 = vmul.f32 %v1462, %v1686
          %v1719 = vmul.f32 %v1463, %v1687
          %v1720 = vmul.f32 %v1464, %v1688
          %v1721 = vmul.f32 %v1465, %v1689
          %v1722 = vmul.f32 %v1466, %v1690
          %v1723 = vmul.f32 %v1467, %v1691
          %v1724 = vmul.f32 %v1468, %v1692
          %v1725 = vmul.f32 %v1469, %v1693
          %v1726 = vmul.f32 %v1470, %v1694
          %v1727 = vmul.f32 %v1471, %v1695
          %v1728 = vmul.f32 %v1472, %v1696
          %v1729 = vmul.f32 %v1473, %v1697
          %v1730 = vmul.f32 %v1474, %v1698
          %v1731 = vmul.f32 %v1475, %v1699
          %v1732 = vmul.f32 %v1476, %v1700
          %v1733 = vmul.f32 %v1477, %v1701
          %v1734 = vmul.f32 %v1478, %v1702
          %v1735 = vmul.f32 %v1479, %v1703
          %v1736 = vlaneseq
          %v1737 = vshrl.u32 %v1736, 7
          %v1738 = vsub.s32 4, %v1737
          %v1739 = vrot.slane %v258, %v1738
          %v1740 = vmul.f32 %v1704, %v1739
          %v1741 = vmul.f32 %v1705, %v1739
          %v1742 = vmul.f32 %v1706, %v1739
          %v1743 = vmul.f32 %v1707, %v1739
          %v1744 = vmul.f32 %v1708, %v1739
          %v1745 = vmul.f32 %v1709, %v1739
          %v1746 = vmul.f32 %v1710, %v1739
          %v1747 = vmul.f32 %v1711, %v1739
          %v1748 = vmul.f32 %v1712, %v1739
          %v1749 = vmul.f32 %v1713, %v1739
          %v1750 = vmul.f32 %v1714, %v1739
          %v1751 = vmul.f32 %v1715, %v1739
          %v1752 = vmul.f32 %v1716, %v1739
          %v1753 = vmul.f32 %v1717, %v1739
          %v1754 = vmul.f32 %v1718, %v1739
          %v1755 = vmul.f32 %v1719, %v1739
          %v1756 = vmul.f32 %v1720, %v1739
          %v1757 = vmul.f32 %v1721, %v1739
          %v1758 = vmul.f32 %v1722, %v1739
          %v1759 = vmul.f32 %v1723, %v1739
          %v1760 = vmul.f32 %v1724, %v1739
          %v1761 = vmul.f32 %v1725, %v1739
          %v1762 = vmul.f32 %v1726, %v1739
          %v1763 = vmul.f32 %v1727, %v1739
          %v1764 = vmul.f32 %v1728, %v1739
          %v1765 = vmul.f32 %v1729, %v1739
          %v1766 = vmul.f32 %v1730, %v1739
          %v1767 = vmul.f32 %v1731, %v1739
          %v1768 = vmul.f32 %v1732, %v1739
          %v1769 = vmul.f32 %v1733, %v1739
          %v1770 = vmul.f32 %v1734, %v1739
          %v1771 = vmul.f32 %v1735, %v1739
          %v1772 = vlaneseq
          %v1773 = vshrl.u32 %v1772, 7
          %v1774 = vsub.s32 5, %v1773
          %v1775 = vrot.slane %v258, %v1774
          %v1776 = vadd.f32 %v1740, %v1775
          %v1777 = vadd.f32 %v1741, %v1775
          %v1778 = vadd.f32 %v1742, %v1775
          %v1779 = vadd.f32 %v1743, %v1775
          %v1780 = vadd.f32 %v1744, %v1775
          %v1781 = vadd.f32 %v1745, %v1775
          %v1782 = vadd.f32 %v1746, %v1775
          %v1783 = vadd.f32 %v1747, %v1775
          %v1784 = vadd.f32 %v1748, %v1775
          %v1785 = vadd.f32 %v1749, %v1775
          %v1786 = vadd.f32 %v1750, %v1775
          %v1787 = vadd.f32 %v1751, %v1775
          %v1788 = vadd.f32 %v1752, %v1775
          %v1789 = vadd.f32 %v1753, %v1775
          %v1790 = vadd.f32 %v1754, %v1775
          %v1791 = vadd.f32 %v1755, %v1775
          %v1792 = vadd.f32 %v1756, %v1775
          %v1793 = vadd.f32 %v1757, %v1775
          %v1794 = vadd.f32 %v1758, %v1775
          %v1795 = vadd.f32 %v1759, %v1775
          %v1796 = vadd.f32 %v1760, %v1775
          %v1797 = vadd.f32 %v1761, %v1775
          %v1798 = vadd.f32 %v1762, %v1775
          %v1799 = vadd.f32 %v1763, %v1775
          %v1800 = vadd.f32 %v1764, %v1775
          %v1801 = vadd.f32 %v1765, %v1775
          %v1802 = vadd.f32 %v1766, %v1775
          %v1803 = vadd.f32 %v1767, %v1775
          %v1804 = vadd.f32 %v1768, %v1775
          %v1805 = vadd.f32 %v1769, %v1775
          %v1806 = vadd.f32 %v1770, %v1775
          %v1807 = vadd.f32 %v1771, %v1775
          %v1808 = vmax.f32 %v1776, 0.0
          %v1809 = vmax.f32 %v1777, 0.0
          %v1810 = vmax.f32 %v1778, 0.0
          %v1811 = vmax.f32 %v1779, 0.0
          %v1812 = vmax.f32 %v1780, 0.0
          %v1813 = vmax.f32 %v1781, 0.0
          %v1814 = vmax.f32 %v1782, 0.0
          %v1815 = vmax.f32 %v1783, 0.0
          %v1816 = vmax.f32 %v1784, 0.0
          %v1817 = vmax.f32 %v1785, 0.0
          %v1818 = vmax.f32 %v1786, 0.0
          %v1819 = vmax.f32 %v1787, 0.0
          %v1820 = vmax.f32 %v1788, 0.0
          %v1821 = vmax.f32 %v1789, 0.0
          %v1822 = vmax.f32 %v1790, 0.0
          %v1823 = vmax.f32 %v1791, 0.0
          %v1824 = vmax.f32 %v1792, 0.0
          %v1825 = vmax.f32 %v1793, 0.0
          %v1826 = vmax.f32 %v1794, 0.0
          %v1827 = vmax.f32 %v1795, 0.0
          %v1828 = vmax.f32 %v1796, 0.0
          %v1829 = vmax.f32 %v1797, 0.0
          %v1830 = vmax.f32 %v1798, 0.0
          %v1831 = vmax.f32 %v1799, 0.0
          %v1832 = vmax.f32 %v1800, 0.0
          %v1833 = vmax.f32 %v1801, 0.0
          %v1834 = vmax.f32 %v1802, 0.0
          %v1835 = vmax.f32 %v1803, 0.0
          %v1836 = vmax.f32 %v1804, 0.0
          %v1837 = vmax.f32 %v1805, 0.0
          %v1838 = vmax.f32 %v1806, 0.0
          %v1839 = vmax.f32 %v1807, 0.0
          %s1840 = scalar_lea.vmem %s2, 128
          %v1841 = vld [vmem:[%s1840] sm:$0xff]
          %v1842 = vld [vmem:[%s1840 + $0x8] sm:$0xff]
          %v1843 = vld [vmem:[%s1840 + $0x10] sm:$0xff]
          %v1844 = vld [vmem:[%s1840 + $0x18] sm:$0xff]
          %v1845 = vld [vmem:[%s1840 + $0x20] sm:$0xff]
          %v1846 = vld [vmem:[%s1840 + $0x28] sm:$0xff]
          %v1847 = vld [vmem:[%s1840 + $0x30] sm:$0xff]
          %v1848 = vld [vmem:[%s1840 + $0x38] sm:$0xff]
          %v1849 = vld [vmem:[%s1840 + $0x40] sm:$0xff]
          %v1850 = vld [vmem:[%s1840 + $0x48] sm:$0xff]
          %v1851 = vld [vmem:[%s1840 + $0x50] sm:$0xff]
          %v1852 = vld [vmem:[%s1840 + $0x58] sm:$0xff]
          %v1853 = vld [vmem:[%s1840 + $0x60] sm:$0xff]
          %v1854 = vld [vmem:[%s1840 + $0x68] sm:$0xff]
          %v1855 = vld [vmem:[%s1840 + $0x70] sm:$0xff]
          %v1856 = vld [vmem:[%s1840 + $0x78] sm:$0xff]
          %v1857 = vlaneseq
          %v1858 = vshrl.u32 %v1857, 7
          %v1859 = vsub.s32 6, %v1858
          %v1860 = vrot.slane %v258, %v1859
          %1861 = vmatprep.subr.mxu0 0.0
          %1862 = vmatpush1.msra.mxu0 %v1856
          %1863 = vmatprep.subr.mxu0 0.0
          %1864 = vmatpush1.msra.mxu0 %v1855
          %1865 = vmatprep.subr.mxu0 0.0
          %1866 = vmatpush1.msra.mxu0 %v1854
          %1867 = vmatprep.subr.mxu0 0.0
          %1868 = vmatpush1.msra.mxu0 %v1853
          %1869 = vmatprep.subr.mxu0 0.0
          %1870 = vmatpush1.msra.mxu0 %v1852
          %1871 = vmatprep.subr.mxu0 0.0
          %1872 = vmatpush1.msra.mxu0 %v1851
          %1873 = vmatprep.subr.mxu0 0.0
          %1874 = vmatpush1.msra.mxu0 %v1850
          %1875 = vmatprep.subr.mxu0 0.0
          %1876 = vmatpush1.msra.mxu0 %v1849
          %1877 = vmatprep.subr.mxu0 0.0
          %1878 = vmatpush1.msra.mxu0 %v1848
          %1879 = vmatprep.subr.mxu0 0.0
          %1880 = vmatpush1.msra.mxu0 %v1847
          %1881 = vmatprep.subr.mxu0 0.0
          %1882 = vmatpush1.msra.mxu0 %v1846
          %1883 = vmatprep.subr.mxu0 0.0
          %1884 = vmatpush1.msra.mxu0 %v1845
          %1885 = vmatprep.subr.mxu0 0.0
          %1886 = vmatpush1.msra.mxu0 %v1844
          %1887 = vmatprep.subr.mxu0 0.0
          %1888 = vmatpush1.msra.mxu0 %v1843
          %1889 = vmatprep.subr.mxu0 0.0
          %1890 = vmatpush1.msra.mxu0 %v1842
          %1891 = vmatprep.subr.mxu0 0.0
          %1892 = vmatpush1.msra.mxu0 %v1841
          %1893 = vmatprep.subr.mxu0 0.0
          %1894 = vmatpush2.msra.mxu0 0.0
          %1895 = vmatprep.subr.mxu0 0.0
          %1896 = vmatpush2.msra.mxu0 0.0
          %1897 = vmatprep.subr.mxu0 0.0
          %1898 = vmatpush2.msra.mxu0 0.0
          %1899 = vmatprep.subr.mxu0 0.0
          %1900 = vmatpush2.msra.mxu0 0.0
          %1901 = vmatprep.subr.mxu0 0.0
          %1902 = vmatpush2.msra.mxu0 0.0
          %1903 = vmatprep.subr.mxu0 0.0
          %1904 = vmatpush2.msra.mxu0 0.0
          %1905 = vmatprep.subr.mxu0 0.0
          %1906 = vmatpush2.msra.mxu0 0.0
          %1907 = vmatprep.subr.mxu0 0.0
          %1908 = vmatpush2.msra.mxu0 0.0
          %1909 = vmatprep.subr.mxu0 0.0
          %1910 = vmatpush2.msra.mxu0 0.0
          %1911 = vmatprep.subr.mxu0 0.0
          %1912 = vmatpush2.msra.mxu0 0.0
          %1913 = vmatprep.subr.mxu0 0.0
          %1914 = vmatpush2.msra.mxu0 0.0
          %1915 = vmatprep.subr.mxu0 0.0
          %1916 = vmatpush2.msra.mxu0 0.0
          %1917 = vmatprep.subr.mxu0 0.0
          %1918 = vmatpush2.msra.mxu0 0.0
          %1919 = vmatprep.subr.mxu0 0.0
          %1920 = vmatpush2.msra.mxu0 0.0
          %1921 = vmatprep.subr.mxu0 0.0
          %1922 = vmatpush2.msra.mxu0 0.0
          %1923 = vmatprep.subr.mxu0 0.0
          %1924 = vmatpush2.msra.mxu0 0.0
          %1925 = vmatprep.mubr.f32.mxu0 0.0
          %1926 = vmatmul.mubr.f32.gmra.mxu0 %v1808
          %v1927 = vpop.f32.mrf.mxu0
          %v1928 = vadd.f32 %v1860, %v1927
          %v1929 = vpop.f32.mrf.mxu0
          %1930 = vmatprep.mubr.f32.mxu0 0.0
          %1931 = vmatmul.mubr.f32.gmra.mxu0 %v1809
          %v1932 = vpop.f32.mrf.mxu0
          %v1933 = vadd.f32 %v1860, %v1932
          %v1934 = vpop.f32.mrf.mxu0
          %1935 = vmatprep.mubr.f32.mxu0 0.0
          %1936 = vmatmul.mubr.f32.gmra.mxu0 %v1810
          %v1937 = vpop.f32.mrf.mxu0
          %v1938 = vadd.f32 %v1860, %v1937
          %v1939 = vpop.f32.mrf.mxu0
          %1940 = vmatprep.mubr.f32.mxu0 0.0
          %1941 = vmatmul.mubr.f32.gmra.mxu0 %v1811
          %v1942 = vpop.f32.mrf.mxu0
          %v1943 = vadd.f32 %v1860, %v1942
          %v1944 = vpop.f32.mrf.mxu0
          %1945 = vmatprep.mubr.f32.mxu0 0.0
          %1946 = vmatmul.mubr.f32.gmra.mxu0 %v1812
          %v1947 = vpop.f32.mrf.mxu0
          %v1948 = vadd.f32 %v1860, %v1947
          %v1949 = vpop.f32.mrf.mxu0
          %1950 = vmatprep.mubr.f32.mxu0 0.0
          %1951 = vmatmul.mubr.f32.gmra.mxu0 %v1813
          %v1952 = vpop.f32.mrf.mxu0
          %v1953 = vadd.f32 %v1860, %v1952
          %v1954 = vpop.f32.mrf.mxu0
          %1955 = vmatprep.mubr.f32.mxu0 0.0
          %1956 = vmatmul.mubr.f32.gmra.mxu0 %v1814
          %v1957 = vpop.f32.mrf.mxu0
          %v1958 = vadd.f32 %v1860, %v1957
          %v1959 = vpop.f32.mrf.mxu0
          %1960 = vmatprep.mubr.f32.mxu0 0.0
          %1961 = vmatmul.mubr.f32.gmra.mxu0 %v1815
          %v1962 = vpop.f32.mrf.mxu0
          %v1963 = vadd.f32 %v1860, %v1962
          %v1964 = vpop.f32.mrf.mxu0
          %1965 = vmatprep.mubr.f32.mxu0 0.0
          %1966 = vmatmul.mubr.f32.gmra.mxu0 %v1816
          %v1967 = vpop.f32.mrf.mxu0
          %v1968 = vadd.f32 %v1860, %v1967
          %v1969 = vpop.f32.mrf.mxu0
          %1970 = vmatprep.mubr.f32.mxu0 0.0
          %1971 = vmatmul.mubr.f32.gmra.mxu0 %v1817
          %v1972 = vpop.f32.mrf.mxu0
          %v1973 = vadd.f32 %v1860, %v1972
          %v1974 = vpop.f32.mrf.mxu0
          %1975 = vmatprep.mubr.f32.mxu0 0.0
          %1976 = vmatmul.mubr.f32.gmra.mxu0 %v1818
          %v1977 = vpop.f32.mrf.mxu0
          %v1978 = vadd.f32 %v1860, %v1977
          %v1979 = vpop.f32.mrf.mxu0
          %1980 = vmatprep.mubr.f32.mxu0 0.0
          %1981 = vmatmul.mubr.f32.gmra.mxu0 %v1819
          %v1982 = vpop.f32.mrf.mxu0
          %v1983 = vadd.f32 %v1860, %v1982
          %v1984 = vpop.f32.mrf.mxu0
          %1985 = vmatprep.mubr.f32.mxu0 0.0
          %1986 = vmatmul.mubr.f32.gmra.mxu0 %v1820
          %v1987 = vpop.f32.mrf.mxu0
          %v1988 = vadd.f32 %v1860, %v1987
          %v1989 = vpop.f32.mrf.mxu0
          %1990 = vmatprep.mubr.f32.mxu0 0.0
          %1991 = vmatmul.mubr.f32.gmra.mxu0 %v1821
          %v1992 = vpop.f32.mrf.mxu0
          %v1993 = vadd.f32 %v1860, %v1992
          %v1994 = vpop.f32.mrf.mxu0
          %1995 = vmatprep.mubr.f32.mxu0 0.0
          %1996 = vmatmul.mubr.f32.gmra.mxu0 %v1822
          %v1997 = vpop.f32.mrf.mxu0
          %v1998 = vadd.f32 %v1860, %v1997
          %v1999 = vpop.f32.mrf.mxu0
          %2000 = vmatprep.mubr.f32.mxu0 0.0
          %2001 = vmatmul.mubr.f32.gmra.mxu0 %v1823
          %v2002 = vpop.f32.mrf.mxu0
          %v2003 = vadd.f32 %v1860, %v2002
          %v2004 = vpop.f32.mrf.mxu0
          %2005 = vmatprep.mubr.f32.mxu0 0.0
          %2006 = vmatmul.mubr.f32.gmra.mxu0 %v1824
          %v2007 = vpop.f32.mrf.mxu0
          %v2008 = vadd.f32 %v1860, %v2007
          %v2009 = vpop.f32.mrf.mxu0
          %2010 = vmatprep.mubr.f32.mxu0 0.0
          %2011 = vmatmul.mubr.f32.gmra.mxu0 %v1825
          %v2012 = vpop.f32.mrf.mxu0
          %v2013 = vadd.f32 %v1860, %v2012
          %v2014 = vpop.f32.mrf.mxu0
          %2015 = vmatprep.mubr.f32.mxu0 0.0
          %2016 = vmatmul.mubr.f32.gmra.mxu0 %v1826
          %v2017 = vpop.f32.mrf.mxu0
          %v2018 = vadd.f32 %v1860, %v2017
          %v2019 = vpop.f32.mrf.mxu0
          %2020 = vmatprep.mubr.f32.mxu0 0.0
          %2021 = vmatmul.mubr.f32.gmra.mxu0 %v1827
          %v2022 = vpop.f32.mrf.mxu0
          %v2023 = vadd.f32 %v1860, %v2022
          %v2024 = vpop.f32.mrf.mxu0
          %2025 = vmatprep.mubr.f32.mxu0 0.0
          %2026 = vmatmul.mubr.f32.gmra.mxu0 %v1828
          %v2027 = vpop.f32.mrf.mxu0
          %v2028 = vadd.f32 %v1860, %v2027
          %v2029 = vpop.f32.mrf.mxu0
          %2030 = vmatprep.mubr.f32.mxu0 0.0
          %2031 = vmatmul.mubr.f32.gmra.mxu0 %v1829
          %v2032 = vpop.f32.mrf.mxu0
          %v2033 = vadd.f32 %v1860, %v2032
          %v2034 = vpop.f32.mrf.mxu0
          %2035 = vmatprep.mubr.f32.mxu0 0.0
          %2036 = vmatmul.mubr.f32.gmra.mxu0 %v1830
          %v2037 = vpop.f32.mrf.mxu0
          %v2038 = vadd.f32 %v1860, %v2037
          %v2039 = vpop.f32.mrf.mxu0
          %2040 = vmatprep.mubr.f32.mxu0 0.0
          %2041 = vmatmul.mubr.f32.gmra.mxu0 %v1831
          %v2042 = vpop.f32.mrf.mxu0
          %v2043 = vadd.f32 %v1860, %v2042
          %v2044 = vpop.f32.mrf.mxu0
          %2045 = vmatprep.mubr.f32.mxu0 0.0
          %2046 = vmatmul.mubr.f32.gmra.mxu0 %v1832
          %v2047 = vpop.f32.mrf.mxu0
          %v2048 = vadd.f32 %v1860, %v2047
          %v2049 = vpop.f32.mrf.mxu0
          %2050 = vmatprep.mubr.f32.mxu0 0.0
          %2051 = vmatmul.mubr.f32.gmra.mxu0 %v1833
          %v2052 = vpop.f32.mrf.mxu0
          %v2053 = vadd.f32 %v1860, %v2052
          %v2054 = vpop.f32.mrf.mxu0
          %2055 = vmatprep.mubr.f32.mxu0 0.0
          %2056 = vmatmul.mubr.f32.gmra.mxu0 %v1834
          %v2057 = vpop.f32.mrf.mxu0
          %v2058 = vadd.f32 %v1860, %v2057
          %v2059 = vpop.f32.mrf.mxu0
          %2060 = vmatprep.mubr.f32.mxu0 0.0
          %2061 = vmatmul.mubr.f32.gmra.mxu0 %v1835
          %v2062 = vpop.f32.mrf.mxu0
          %v2063 = vadd.f32 %v1860, %v2062
          %v2064 = vpop.f32.mrf.mxu0
          %2065 = vmatprep.mubr.f32.mxu0 0.0
          %2066 = vmatmul.mubr.f32.gmra.mxu0 %v1836
          %v2067 = vpop.f32.mrf.mxu0
          %v2068 = vadd.f32 %v1860, %v2067
          %v2069 = vpop.f32.mrf.mxu0
          %2070 = vmatprep.mubr.f32.mxu0 0.0
          %2071 = vmatmul.mubr.f32.gmra.mxu0 %v1837
          %v2072 = vpop.f32.mrf.mxu0
          %v2073 = vadd.f32 %v1860, %v2072
          %v2074 = vpop.f32.mrf.mxu0
          %2075 = vmatprep.mubr.f32.mxu0 0.0
          %2076 = vmatmul.mubr.f32.gmra.mxu0 %v1838
          %v2077 = vpop.f32.mrf.mxu0
          %v2078 = vadd.f32 %v1860, %v2077
          %v2079 = vpop.f32.mrf.mxu0
          %2080 = vmatprep.mubr.f32.mxu0 0.0
          %2081 = vmatmul.mubr.f32.gmra.mxu0 %v1839
          %v2082 = vpop.f32.mrf.mxu0
          %v2083 = vadd.f32 %v1860, %v2082
          %v2084 = vpop.f32.mrf.mxu0
          %2085 = vdwg.mxu0
          %v2086 = vadd.s32 %v245, 128
          %s2087 = smul.u32 %s23, 256
          %v2088 = vstv %s2087
          %v2089 = vadd.s32 %v245, %v2088
          %v2090 = vadd.s32 %v2086, %v2088
          %vm2091 = vcmp.lt.s32.totalorder %v2089, 600
          %vm2092 = vcmp.lt.s32.totalorder %v2090, 600
          %v2093 = vsel %vm2091, 1, 0
          %v2094 = vsel %vm2092, 1, 0
          %v2095 = vcvt.s32.f32 %v2093
          %v2096 = vcvt.s32.f32 %v2094
          %v2097 = vld [vmem:[#allocation2] sm:$0x1]
          %2098 = vmatprep.subr.mxu0 0.0
          %2099 = vmatpush1.msra.mxu0 %v2003
          %2100 = vmatprep.subr.mxu0 0.0
          %2101 = vmatpush1.msra.mxu0 %v1998
          %2102 = vmatprep.subr.mxu0 0.0
          %2103 = vmatpush1.msra.mxu0 %v1993
          %2104 = vmatprep.subr.mxu0 0.0
          %2105 = vmatpush1.msra.mxu0 %v1988
          %2106 = vmatprep.subr.mxu0 0.0
          %2107 = vmatpush1.msra.mxu0 %v1983
          %2108 = vmatprep.subr.mxu0 0.0
          %2109 = vmatpush1.msra.mxu0 %v1978
          %2110 = vmatprep.subr.mxu0 0.0
          %2111 = vmatpush1.msra.mxu0 %v1973
          %2112 = vmatprep.subr.mxu0 0.0
          %2113 = vmatpush1.msra.mxu0 %v1968
          %2114 = vmatprep.subr.mxu0 0.0
          %2115 = vmatpush1.msra.mxu0 %v1963
          %2116 = vmatprep.subr.mxu0 0.0
          %2117 = vmatpush1.msra.mxu0 %v1958
          %2118 = vmatprep.subr.mxu0 0.0
          %2119 = vmatpush1.msra.mxu0 %v1953
          %2120 = vmatprep.subr.mxu0 0.0
          %2121 = vmatpush1.msra.mxu0 %v1948
          %2122 = vmatprep.subr.mxu0 0.0
          %2123 = vmatpush1.msra.mxu0 %v1943
          %2124 = vmatprep.subr.mxu0 0.0
          %2125 = vmatpush1.msra.mxu0 %v1938
          %2126 = vmatprep.subr.mxu0 0.0
          %2127 = vmatpush1.msra.mxu0 %v1933
          %2128 = vmatprep.subr.mxu0 0.0
          %2129 = vmatpush1.msra.mxu0 %v1928
          %2130 = vmatprep.subr.mxu0 0.0
          %2131 = vmatpush2.msra.mxu0 %v2083
          %2132 = vmatprep.subr.mxu0 0.0
          %2133 = vmatpush2.msra.mxu0 %v2078
          %2134 = vmatprep.subr.mxu0 0.0
          %2135 = vmatpush2.msra.mxu0 %v2073
          %2136 = vmatprep.subr.mxu0 0.0
          %2137 = vmatpush2.msra.mxu0 %v2068
          %2138 = vmatprep.subr.mxu0 0.0
          %2139 = vmatpush2.msra.mxu0 %v2063
          %2140 = vmatprep.subr.mxu0 0.0
          %2141 = vmatpush2.msra.mxu0 %v2058
          %2142 = vmatprep.subr.mxu0 0.0
          %2143 = vmatpush2.msra.mxu0 %v2053
          %2144 = vmatprep.subr.mxu0 0.0
          %2145 = vmatpush2.msra.mxu0 %v2048
          %2146 = vmatprep.subr.mxu0 0.0
          %2147 = vmatpush2.msra.mxu0 %v2043
          %2148 = vmatprep.subr.mxu0 0.0
          %2149 = vmatpush2.msra.mxu0 %v2038
          %2150 = vmatprep.subr.mxu0 0.0
          %2151 = vmatpush2.msra.mxu0 %v2033
          %2152 = vmatprep.subr.mxu0 0.0
          %2153 = vmatpush2.msra.mxu0 %v2028
          %2154 = vmatprep.subr.mxu0 0.0
          %2155 = vmatpush2.msra.mxu0 %v2023
          %2156 = vmatprep.subr.mxu0 0.0
          %2157 = vmatpush2.msra.mxu0 %v2018
          %2158 = vmatprep.subr.mxu0 0.0
          %2159 = vmatpush2.msra.mxu0 %v2013
          %2160 = vmatprep.subr.mxu0 0.0
          %2161 = vmatpush2.msra.mxu0 %v2008
          %2162 = vmatprep.mubr.f32.mxu0 %v2096
          %2163 = vmatmul.mubr.f32.gmra.mxu0 %v2095
          %v2164 = vpop.f32.mrf.mxu0
          %v2165 = vadd.f32 0.0, %v2164
          %v2166 = vpop.f32.mrf.mxu0
          %2167 = vdwg.mxu0
          %v2168 = vadd.f32 %v2097, %v2165
          %2169 = vst [vmem:[#allocation2] sm:$0x1] %v2168
          %p2170 = scmp.eq.s32.totalorder %s23, 2
          // Predicated region
          $region45: #{autoencoder_forward.1} parent=39 // pred_check
            %p2171 = pneg %p2170
          $region46: #{autoencoder_forward.1} parent=39 // pred_check_branch
            %2173 = sbr.rel (%p2171) target = $region48
          $region47: #{autoencoder_forward.1} parent=39 // pred_region
            %v2174 = vld [vmem:[#allocation2] sm:$0x1]
            %v2175 = vmul.f32 %v2174, 0.0016666667
            %s2176 = scalar_lea.vmem %s2, 256
            %v2177 = vld [vmem:[%s2176] sm:$0xff]
            %v2178 = vld [vmem:[%s2176 + $0x8] sm:$0xff]
            %v2179 = vld [vmem:[%s2176 + $0x10] sm:$0xff]
            %v2180 = vld [vmem:[%s2176 + $0x18] sm:$0xff]
            %v2181 = vld [vmem:[%s2176 + $0x20] sm:$0xff]
            %v2182 = vld [vmem:[%s2176 + $0x28] sm:$0xff]
            %v2183 = vld [vmem:[%s2176 + $0x30] sm:$0xff]
            %v2184 = vld [vmem:[%s2176 + $0x38] sm:$0xff]
            %v2185 = vld [vmem:[%s2176 + $0x40] sm:$0xff]
            %v2186 = vld [vmem:[%s2176 + $0x48] sm:$0xff]
            %v2187 = vld [vmem:[%s2176 + $0x50] sm:$0xff]
            %v2188 = vld [vmem:[%s2176 + $0x58] sm:$0xff]
            %v2189 = vld [vmem:[%s2176 + $0x60] sm:$0xff]
            %v2190 = vld [vmem:[%s2176 + $0x68] sm:$0xff]
            %v2191 = vld [vmem:[%s2176 + $0x70] sm:$0xff]
            %v2192 = vld [vmem:[%s2176 + $0x78] sm:$0xff]
            %v2194 = vrot.slane %v258, 7
            %2196 = vmatprep.subr.mxu0 0.0
            %2197 = vmatpush1.msra.mxu0 %v2192
            %2198 = vmatprep.subr.mxu0 0.0
            %2199 = vmatpush1.msra.mxu0 %v2191
            %2200 = vmatprep.subr.mxu0 0.0
            %2201 = vmatpush1.msra.mxu0 %v2190
            %2202 = vmatprep.subr.mxu0 0.0
            %2203 = vmatpush1.msra.mxu0 %v2189
            %2204 = vmatprep.subr.mxu0 0.0
            %2205 = vmatpush1.msra.mxu0 %v2188
            %2206 = vmatprep.subr.mxu0 0.0
            %2207 = vmatpush1.msra.mxu0 %v2187
            %2208 = vmatprep.subr.mxu0 0.0
            %2209 = vmatpush1.msra.mxu0 %v2186
            %2210 = vmatprep.subr.mxu0 0.0
            %2211 = vmatpush1.msra.mxu0 %v2185
            %2212 = vmatprep.subr.mxu0 0.0
            %2213 = vmatpush1.msra.mxu0 %v2184
            %2214 = vmatprep.subr.mxu0 0.0
            %2215 = vmatpush1.msra.mxu0 %v2183
            %2216 = vmatprep.subr.mxu0 0.0
            %2217 = vmatpush1.msra.mxu0 %v2182
            %2218 = vmatprep.subr.mxu0 0.0
            %2219 = vmatpush1.msra.mxu0 %v2181
            %2220 = vmatprep.subr.mxu0 0.0
            %2221 = vmatpush1.msra.mxu0 %v2180
            %2222 = vmatprep.subr.mxu0 0.0
            %2223 = vmatpush1.msra.mxu0 %v2179
            %2224 = vmatprep.subr.mxu0 0.0
            %2225 = vmatpush1.msra.mxu0 %v2178
            %2226 = vmatprep.subr.mxu0 0.0
            %2227 = vmatpush1.msra.mxu0 %v2177
            %2228 = vmatprep.subr.mxu0 0.0
            %2229 = vmatpush2.msra.mxu0 0.0
            %2230 = vmatprep.subr.mxu0 0.0
            %2231 = vmatpush2.msra.mxu0 0.0
            %2232 = vmatprep.subr.mxu0 0.0
            %2233 = vmatpush2.msra.mxu0 0.0
            %2234 = vmatprep.subr.mxu0 0.0
            %2235 = vmatpush2.msra.mxu0 0.0
            %2236 = vmatprep.subr.mxu0 0.0
            %2237 = vmatpush2.msra.mxu0 0.0
            %2238 = vmatprep.subr.mxu0 0.0
            %2239 = vmatpush2.msra.mxu0 0.0
            %2240 = vmatprep.subr.mxu0 0.0
            %2241 = vmatpush2.msra.mxu0 0.0
            %2242 = vmatprep.subr.mxu0 0.0
            %2243 = vmatpush2.msra.mxu0 0.0
            %2244 = vmatprep.subr.mxu0 0.0
            %2245 = vmatpush2.msra.mxu0 0.0
            %2246 = vmatprep.subr.mxu0 0.0
            %2247 = vmatpush2.msra.mxu0 0.0
            %2248 = vmatprep.subr.mxu0 0.0
            %2249 = vmatpush2.msra.mxu0 0.0
            %2250 = vmatprep.subr.mxu0 0.0
            %2251 = vmatpush2.msra.mxu0 0.0
            %2252 = vmatprep.subr.mxu0 0.0
            %2253 = vmatpush2.msra.mxu0 0.0
            %2254 = vmatprep.subr.mxu0 0.0
            %2255 = vmatpush2.msra.mxu0 0.0
            %2256 = vmatprep.subr.mxu0 0.0
            %2257 = vmatpush2.msra.mxu0 0.0
            %2258 = vmatprep.subr.mxu0 0.0
            %2259 = vmatpush2.msra.mxu0 0.0
            %2260 = vmatprep.mubr.f32.mxu0 0.0
            %2261 = vmatmul.mubr.f32.gmra.mxu0 %v2175
            %v2262 = vpop.f32.mrf.mxu0
            %v2263 = vadd.f32 %v2194, %v2262
            %v2264 = vpop.f32.mrf.mxu0
            %2265 = vdwg.mxu0
            %vm2266 = vcmask 1040384
            %v2267 = vsel %vm2266, %v2263, 0.0
            %2268 = vadd.xlane.f32.xlu0 %v2267
            %v2269 = vpop.xlane.xlu0 %2268
            %v2270 = vmul.f32 %v2269, 0.01
            %v2271 = vsub.f32 %v2263, %v2270
            %v2272 = vmul.f32 %v2271, %v248
            %v2273 = vmul.f32 %v2272, %v2272
            %v2274 = vsel %vm2266, %v2273, 0.0
            %2275 = vadd.xlane.f32.xlu0 %v2274
            %v2276 = vpop.xlane.xlu0 %2275
            %v2277 = vmul.f32 %v2276, 0.01
            %v2278 = vadd.f32 %v2277, 1e-05
            %v2279 = vrsqrt.pop %v2278
            %v2280 = vmul.f32 %v2271, %v2279
            %v2281 = vmul.f32 %v2280, %v259
            %v2283 = vrot.slane %v259, 1
            %v2285 = vadd.f32 %v2281, %v2283
            %v2286 = vmax.f32 %v2285, 0.0
            %s2287 = scalar_lea.vmem %s2, 384
            %v2288 = vld [vmem:[%s2287] sm:$0xff]
            %v2289 = vld [vmem:[%s2287 + $0x8] sm:$0xff]
            %v2290 = vld [vmem:[%s2287 + $0x10] sm:$0xff]
            %v2291 = vld [vmem:[%s2287 + $0x18] sm:$0xff]
            %v2292 = vld [vmem:[%s2287 + $0x20] sm:$0xff]
            %v2293 = vld [vmem:[%s2287 + $0x28] sm:$0xff]
            %v2294 = vld [vmem:[%s2287 + $0x30] sm:$0xff]
            %v2295 = vld [vmem:[%s2287 + $0x38] sm:$0xff]
            %v2296 = vld [vmem:[%s2287 + $0x40] sm:$0xff]
            %v2297 = vld [vmem:[%s2287 + $0x48] sm:$0xff]
            %v2298 = vld [vmem:[%s2287 + $0x50] sm:$0xff]
            %v2299 = vld [vmem:[%s2287 + $0x58] sm:$0xff]
            %v2300 = vld [vmem:[%s2287 + $0x60] sm:$0xff]
            %v2301 = vld [vmem:[%s2287 + $0x68] sm:$0xff]
            %v2302 = vld [vmem:[%s2287 + $0x70] sm:$0xff]
            %v2303 = vld [vmem:[%s2287 + $0x78] sm:$0xff]
            %v2304 = vrot.slane %v259, 2
            %2306 = vmatprep.subr.mxu0 0.0
            %2307 = vmatpush1.msra.mxu0 %v2303
            %2308 = vmatprep.subr.mxu0 0.0
            %2309 = vmatpush1.msra.mxu0 %v2302
            %2310 = vmatprep.subr.mxu0 0.0
            %2311 = vmatpush1.msra.mxu0 %v2301
            %2312 = vmatprep.subr.mxu0 0.0
            %2313 = vmatpush1.msra.mxu0 %v2300
            %2314 = vmatprep.subr.mxu0 0.0
            %2315 = vmatpush1.msra.mxu0 %v2299
            %2316 = vmatprep.subr.mxu0 0.0
            %2317 = vmatpush1.msra.mxu0 %v2298
            %2318 = vmatprep.subr.mxu0 0.0
            %2319 = vmatpush1.msra.mxu0 %v2297
            %2320 = vmatprep.subr.mxu0 0.0
            %2321 = vmatpush1.msra.mxu0 %v2296
            %2322 = vmatprep.subr.mxu0 0.0
            %2323 = vmatpush1.msra.mxu0 %v2295
            %2324 = vmatprep.subr.mxu0 0.0
            %2325 = vmatpush1.msra.mxu0 %v2294
            %2326 = vmatprep.subr.mxu0 0.0
            %2327 = vmatpush1.msra.mxu0 %v2293
            %2328 = vmatprep.subr.mxu0 0.0
            %2329 = vmatpush1.msra.mxu0 %v2292
            %2330 = vmatprep.subr.mxu0 0.0
            %2331 = vmatpush1.msra.mxu0 %v2291
            %2332 = vmatprep.subr.mxu0 0.0
            %2333 = vmatpush1.msra.mxu0 %v2290
            %2334 = vmatprep.subr.mxu0 0.0
            %2335 = vmatpush1.msra.mxu0 %v2289
            %2336 = vmatprep.subr.mxu0 0.0
            %2337 = vmatpush1.msra.mxu0 %v2288
            %2338 = vmatprep.subr.mxu0 0.0
            %2339 = vmatpush2.msra.mxu0 0.0
            %2340 = vmatprep.subr.mxu0 0.0
            %2341 = vmatpush2.msra.mxu0 0.0
            %2342 = vmatprep.subr.mxu0 0.0
            %2343 = vmatpush2.msra.mxu0 0.0
            %2344 = vmatprep.subr.mxu0 0.0
            %2345 = vmatpush2.msra.mxu0 0.0
            %2346 = vmatprep.subr.mxu0 0.0
            %2347 = vmatpush2.msra.mxu0 0.0
            %2348 = vmatprep.subr.mxu0 0.0
            %2349 = vmatpush2.msra.mxu0 0.0
            %2350 = vmatprep.subr.mxu0 0.0
            %2351 = vmatpush2.msra.mxu0 0.0
            %2352 = vmatprep.subr.mxu0 0.0
            %2353 = vmatpush2.msra.mxu0 0.0
            %2354 = vmatprep.subr.mxu0 0.0
            %2355 = vmatpush2.msra.mxu0 0.0
            %2356 = vmatprep.subr.mxu0 0.0
            %2357 = vmatpush2.msra.mxu0 0.0
            %2358 = vmatprep.subr.mxu0 0.0
            %2359 = vmatpush2.msra.mxu0 0.0
            %2360 = vmatprep.subr.mxu0 0.0
            %2361 = vmatpush2.msra.mxu0 0.0
            %2362 = vmatprep.subr.mxu0 0.0
            %2363 = vmatpush2.msra.mxu0 0.0
            %2364 = vmatprep.subr.mxu0 0.0
            %2365 = vmatpush2.msra.mxu0 0.0
            %2366 = vmatprep.subr.mxu0 0.0
            %2367 = vmatpush2.msra.mxu0 0.0
            %2368 = vmatprep.subr.mxu0 0.0
            %2369 = vmatpush2.msra.mxu0 0.0
            %2370 = vmatprep.mubr.f32.mxu0 0.0
            %2371 = vmatmul.mubr.f32.gmra.mxu0 %v2286
            %v2372 = vpop.f32.mrf.mxu0
            %v2373 = vadd.f32 %v2304, %v2372
            %v2374 = vpop.f32.mrf.mxu0
            %2375 = vdwg.mxu0
            %v2376 = vsel %vm2266, %v2373, 0.0
            %2377 = vadd.xlane.f32.xlu0 %v2376
            %v2378 = vpop.xlane.xlu0 %2377
            %v2379 = vmul.f32 %v2378, 0.01
            %v2380 = vsub.f32 %v2373, %v2379
            %v2381 = vmul.f32 %v2380, %v248
            %v2382 = vmul.f32 %v2381, %v2381
            %v2383 = vsel %vm2266, %v2382, 0.0
            %2384 = vadd.xlane.f32.xlu0 %v2383
            %v2385 = vpop.xlane.xlu0 %2384
            %v2386 = vmul.f32 %v2385, 0.01
            %v2387 = vadd.f32 %v2386, 1e-05
            %v2388 = vrsqrt.pop %v2387
            %v2389 = vmul.f32 %v2380, %v2388
            %v2390 = vrot.slane %v259, 3
            %v2392 = vmul.f32 %v2389, %v2390
            %v2393 = vrot.slane %v259, 4
            %v2395 = vadd.f32 %v2392, %v2393
            %v2396 = vmax.f32 %v2395, 0.0
            %s2397 = scalar_lea.vmem %s2, 512
            %v2398 = vld [vmem:[%s2397] sm:$0xff]
            %v2399 = vld [vmem:[%s2397 + $0x8] sm:$0xff]
            %v2400 = vld [vmem:[%s2397 + $0x10] sm:$0xff]
            %v2401 = vld [vmem:[%s2397 + $0x18] sm:$0xff]
            %v2402 = vld [vmem:[%s2397 + $0x20] sm:$0xff]
            %v2403 = vld [vmem:[%s2397 + $0x28] sm:$0xff]
            %v2404 = vld [vmem:[%s2397 + $0x30] sm:$0xff]
            %v2405 = vld [vmem:[%s2397 + $0x38] sm:$0xff]
            %v2406 = vld [vmem:[%s2397 + $0x40] sm:$0xff]
            %v2407 = vld [vmem:[%s2397 + $0x48] sm:$0xff]
            %v2408 = vld [vmem:[%s2397 + $0x50] sm:$0xff]
            %v2409 = vld [vmem:[%s2397 + $0x58] sm:$0xff]
            %v2410 = vld [vmem:[%s2397 + $0x60] sm:$0xff]
            %v2411 = vld [vmem:[%s2397 + $0x68] sm:$0xff]
            %v2412 = vld [vmem:[%s2397 + $0x70] sm:$0xff]
            %v2413 = vld [vmem:[%s2397 + $0x78] sm:$0xff]
            %v2414 = vrot.slane %v259, 5
            %2416 = vmatprep.subr.mxu0 0.0
            %2417 = vmatpush1.msra.mxu0 %v2413
            %2418 = vmatprep.subr.mxu0 0.0
            %2419 = vmatpush1.msra.mxu0 %v2412
            %2420 = vmatprep.subr.mxu0 0.0
            %2421 = vmatpush1.msra.mxu0 %v2411
            %2422 = vmatprep.subr.mxu0 0.0
            %2423 = vmatpush1.msra.mxu0 %v2410
            %2424 = vmatprep.subr.mxu0 0.0
            %2425 = vmatpush1.msra.mxu0 %v2409
            %2426 = vmatprep.subr.mxu0 0.0
            %2427 = vmatpush1.msra.mxu0 %v2408
            %2428 = vmatprep.subr.mxu0 0.0
            %2429 = vmatpush1.msra.mxu0 %v2407
            %2430 = vmatprep.subr.mxu0 0.0
            %2431 = vmatpush1.msra.mxu0 %v2406
            %2432 = vmatprep.subr.mxu0 0.0
            %2433 = vmatpush1.msra.mxu0 %v2405
            %2434 = vmatprep.subr.mxu0 0.0
            %2435 = vmatpush1.msra.mxu0 %v2404
            %2436 = vmatprep.subr.mxu0 0.0
            %2437 = vmatpush1.msra.mxu0 %v2403
            %2438 = vmatprep.subr.mxu0 0.0
            %2439 = vmatpush1.msra.mxu0 %v2402
            %2440 = vmatprep.subr.mxu0 0.0
            %2441 = vmatpush1.msra.mxu0 %v2401
            %2442 = vmatprep.subr.mxu0 0.0
            %2443 = vmatpush1.msra.mxu0 %v2400
            %2444 = vmatprep.subr.mxu0 0.0
            %2445 = vmatpush1.msra.mxu0 %v2399
            %2446 = vmatprep.subr.mxu0 0.0
            %2447 = vmatpush1.msra.mxu0 %v2398
            %2448 = vmatprep.subr.mxu0 0.0
            %2449 = vmatpush2.msra.mxu0 0.0
            %2450 = vmatprep.subr.mxu0 0.0
            %2451 = vmatpush2.msra.mxu0 0.0
            %2452 = vmatprep.subr.mxu0 0.0
            %2453 = vmatpush2.msra.mxu0 0.0
            %2454 = vmatprep.subr.mxu0 0.0
            %2455 = vmatpush2.msra.mxu0 0.0
            %2456 = vmatprep.subr.mxu0 0.0
            %2457 = vmatpush2.msra.mxu0 0.0
            %2458 = vmatprep.subr.mxu0 0.0
            %2459 = vmatpush2.msra.mxu0 0.0
            %2460 = vmatprep.subr.mxu0 0.0
            %2461 = vmatpush2.msra.mxu0 0.0
            %2462 = vmatprep.subr.mxu0 0.0
            %2463 = vmatpush2.msra.mxu0 0.0
            %2464 = vmatprep.subr.mxu0 0.0
            %2465 = vmatpush2.msra.mxu0 0.0
            %2466 = vmatprep.subr.mxu0 0.0
            %2467 = vmatpush2.msra.mxu0 0.0
            %2468 = vmatprep.subr.mxu0 0.0
            %2469 = vmatpush2.msra.mxu0 0.0
            %2470 = vmatprep.subr.mxu0 0.0
            %2471 = vmatpush2.msra.mxu0 0.0
            %2472 = vmatprep.subr.mxu0 0.0
            %2473 = vmatpush2.msra.mxu0 0.0
            %2474 = vmatprep.subr.mxu0 0.0
            %2475 = vmatpush2.msra.mxu0 0.0
            %2476 = vmatprep.subr.mxu0 0.0
            %2477 = vmatpush2.msra.mxu0 0.0
            %2478 = vmatprep.subr.mxu0 0.0
            %2479 = vmatpush2.msra.mxu0 0.0
            %2480 = vmatprep.mubr.f32.mxu0 0.0
            %2481 = vmatmul.mubr.f32.gmra.mxu0 %v2396
            %v2482 = vpop.f32.mrf.mxu0
            %v2483 = vadd.f32 %v2414, %v2482
            %v2484 = vpop.f32.mrf.mxu0
            %2485 = vdwg.mxu0
            %2486 = vst [vmem:[#allocation4] sm:$0x1] %v2483
            %s2487 = scalar_lea.vmem %s2, 640
            %v2488 = vld [vmem:[%s2487] sm:$0xff]
            %v2489 = vld [vmem:[%s2487 + $0x8] sm:$0xff]
            %v2490 = vld [vmem:[%s2487 + $0x10] sm:$0xff]
            %v2491 = vld [vmem:[%s2487 + $0x18] sm:$0xff]
            %v2492 = vld [vmem:[%s2487 + $0x20] sm:$0xff]
            %v2493 = vld [vmem:[%s2487 + $0x28] sm:$0xff]
            %v2494 = vld [vmem:[%s2487 + $0x30] sm:$0xff]
            %v2495 = vld [vmem:[%s2487 + $0x38] sm:$0xff]
            %v2496 = vld [vmem:[%s2487 + $0x40] sm:$0xff]
            %v2497 = vld [vmem:[%s2487 + $0x48] sm:$0xff]
            %v2498 = vld [vmem:[%s2487 + $0x50] sm:$0xff]
            %v2499 = vld [vmem:[%s2487 + $0x58] sm:$0xff]
            %v2500 = vld [vmem:[%s2487 + $0x60] sm:$0xff]
            %v2501 = vld [vmem:[%s2487 + $0x68] sm:$0xff]
            %v2502 = vld [vmem:[%s2487 + $0x70] sm:$0xff]
            %v2503 = vld [vmem:[%s2487 + $0x78] sm:$0xff]
            %v2504 = vrot.slane %v259, 6
            %2506 = vmatprep.subr.mxu0 0.0
            %2507 = vmatpush1.msra.mxu0 %v2503
            %2508 = vmatprep.subr.mxu0 0.0
            %2509 = vmatpush1.msra.mxu0 %v2502
            %2510 = vmatprep.subr.mxu0 0.0
            %2511 = vmatpush1.msra.mxu0 %v2501
            %2512 = vmatprep.subr.mxu0 0.0
            %2513 = vmatpush1.msra.mxu0 %v2500
            %2514 = vmatprep.subr.mxu0 0.0
            %2515 = vmatpush1.msra.mxu0 %v2499
            %2516 = vmatprep.subr.mxu0 0.0
            %2517 = vmatpush1.msra.mxu0 %v2498
            %2518 = vmatprep.subr.mxu0 0.0
            %2519 = vmatpush1.msra.mxu0 %v2497
            %2520 = vmatprep.subr.mxu0 0.0
            %2521 = vmatpush1.msra.mxu0 %v2496
            %2522 = vmatprep.subr.mxu0 0.0
            %2523 = vmatpush1.msra.mxu0 %v2495
            %2524 = vmatprep.subr.mxu0 0.0
            %2525 = vmatpush1.msra.mxu0 %v2494
            %2526 = vmatprep.subr.mxu0 0.0
            %2527 = vmatpush1.msra.mxu0 %v2493
            %2528 = vmatprep.subr.mxu0 0.0
            %2529 = vmatpush1.msra.mxu0 %v2492
            %2530 = vmatprep.subr.mxu0 0.0
            %2531 = vmatpush1.msra.mxu0 %v2491
            %2532 = vmatprep.subr.mxu0 0.0
            %2533 = vmatpush1.msra.mxu0 %v2490
            %2534 = vmatprep.subr.mxu0 0.0
            %2535 = vmatpush1.msra.mxu0 %v2489
            %2536 = vmatprep.subr.mxu0 0.0
            %2537 = vmatpush1.msra.mxu0 %v2488
            %2538 = vmatprep.subr.mxu0 0.0
            %2539 = vmatpush2.msra.mxu0 0.0
            %2540 = vmatprep.subr.mxu0 0.0
            %2541 = vmatpush2.msra.mxu0 0.0
            %2542 = vmatprep.subr.mxu0 0.0
            %2543 = vmatpush2.msra.mxu0 0.0
            %2544 = vmatprep.subr.mxu0 0.0
            %2545 = vmatpush2.msra.mxu0 0.0
            %2546 = vmatprep.subr.mxu0 0.0
            %2547 = vmatpush2.msra.mxu0 0.0
            %2548 = vmatprep.subr.mxu0 0.0
            %2549 = vmatpush2.msra.mxu0 0.0
            %2550 = vmatprep.subr.mxu0 0.0
            %2551 = vmatpush2.msra.mxu0 0.0
            %2552 = vmatprep.subr.mxu0 0.0
            %2553 = vmatpush2.msra.mxu0 0.0
            %2554 = vmatprep.subr.mxu0 0.0
            %2555 = vmatpush2.msra.mxu0 0.0
            %2556 = vmatprep.subr.mxu0 0.0
            %2557 = vmatpush2.msra.mxu0 0.0
            %2558 = vmatprep.subr.mxu0 0.0
            %2559 = vmatpush2.msra.mxu0 0.0
            %2560 = vmatprep.subr.mxu0 0.0
            %2561 = vmatpush2.msra.mxu0 0.0
            %2562 = vmatprep.subr.mxu0 0.0
            %2563 = vmatpush2.msra.mxu0 0.0
            %2564 = vmatprep.subr.mxu0 0.0
            %2565 = vmatpush2.msra.mxu0 0.0
            %2566 = vmatprep.subr.mxu0 0.0
            %2567 = vmatpush2.msra.mxu0 0.0
            %2568 = vmatprep.subr.mxu0 0.0
            %2569 = vmatpush2.msra.mxu0 0.0
            %2570 = vmatprep.mubr.f32.mxu0 0.0
            %2571 = vmatmul.mubr.f32.gmra.mxu0 %v2483
            %v2572 = vpop.f32.mrf.mxu0
            %v2573 = vadd.f32 %v2504, %v2572
            %v2574 = vpop.f32.mrf.mxu0
            %2575 = vdwg.mxu0
            %2576 = vst [vmem:[#allocation3] sm:$0x1] %v2573
          $region48: #{autoencoder_forward.1} parent=39 // pred_fallthru
            _
        $region40: #{autoencoder_forward.1} parent=35 // pred_fallthru
          _
        %p2577 = scmp.eq.s32.totalorder %s22, 1
        // Predicated region
        $region49: #{autoencoder_forward.1} parent=35 // pred_check
          %p2578 = pneg %p2577
        $region50: #{autoencoder_forward.1} parent=35 // pred_check_branch
          %2580 = sbr.rel (%p2578) target = $region52
        $region51: #{autoencoder_forward.1} parent=35 // pred_region
          %v2581 = vld [vmem:[%s3 + $0x8] sm:$0xff]
          %v2582 = vld [vmem:[%s3 + $0x10] sm:$0xff]
          %v2583 = vld [vmem:[%s234] sm:$0xff]
          %v2584 = vld [vmem:[%s234 + $0x8] sm:$0xff]
          %v2585 = vld [vmem:[%s234 + $0x10] sm:$0xff]
          %v2586 = vld [vmem:[%s234 + $0x18] sm:$0xff]
          %v2587 = vld [vmem:[%s234 + $0x20] sm:$0xff]
          %v2588 = vld [vmem:[%s234 + $0x28] sm:$0xff]
          %v2589 = vld [vmem:[%s234 + $0x30] sm:$0xff]
          %v2590 = vld [vmem:[%s234 + $0x38] sm:$0xff]
          %v2591 = vld [vmem:[%s234 + $0x40] sm:$0xff]
          %v2592 = vld [vmem:[%s234 + $0x48] sm:$0xff]
          %v2593 = vld [vmem:[%s234 + $0x50] sm:$0xff]
          %v2594 = vld [vmem:[%s234 + $0x58] sm:$0xff]
          %v2595 = vld [vmem:[%s234 + $0x60] sm:$0xff]
          %v2596 = vld [vmem:[%s234 + $0x68] sm:$0xff]
          %v2597 = vld [vmem:[%s234 + $0x70] sm:$0xff]
          %v2598 = vld [vmem:[%s234 + $0x78] sm:$0xff]
          %v2599 = vld [vmem:[%s234 + $0x80] sm:$0xff]
          %v2600 = vld [vmem:[%s234 + $0x88] sm:$0xff]
          %v2601 = vld [vmem:[%s234 + $0x90] sm:$0xff]
          %v2602 = vld [vmem:[%s234 + $0x98] sm:$0xff]
          %v2603 = vld [vmem:[%s234 + $0xa0] sm:$0xff]
          %v2604 = vld [vmem:[%s234 + $0xa8] sm:$0xff]
          %v2605 = vld [vmem:[%s234 + $0xb0] sm:$0xff]
          %v2606 = vld [vmem:[%s234 + $0xb8] sm:$0xff]
          %v2607 = vld [vmem:[%s234 + $0xc0] sm:$0xff]
          %v2608 = vld [vmem:[%s234 + $0xc8] sm:$0xff]
          %v2609 = vld [vmem:[%s234 + $0xd0] sm:$0xff]
          %v2610 = vld [vmem:[%s234 + $0xd8] sm:$0xff]
          %v2611 = vld [vmem:[%s234 + $0xe0] sm:$0xff]
          %v2612 = vld [vmem:[%s234 + $0xe8] sm:$0xff]
          %v2613 = vld [vmem:[%s234 + $0xf0] sm:$0xff]
          %v2614 = vld [vmem:[%s234 + $0xf8] sm:$0xff]
          %s2615 = scalar_lea.vmem %s1, 8
          %v2616 = vld [vmem:[%s2615] sm:$0xff]
          %v2617 = vld [vmem:[#allocation3] sm:$0x1]
          %v2619 = vlaneseq
          %v2620 = vshrl.u32 %v2619, 7
          %v2621 = vsub.s32 0, %v2620
          %v2622 = vrot.slane %v2617, %v2621
          %vm2624 = vcmask 64512
          %v2626 = vsel %vm2624, %v2583, 0
          %v2629 = vsel %vm2624, %v2584, 0
          %v2632 = vsel %vm2624, %v2585, 0
          %v2635 = vsel %vm2624, %v2586, 0
          %v2638 = vsel %vm2624, %v2587, 0
          %v2641 = vsel %vm2624, %v2588, 0
          %v2644 = vsel %vm2624, %v2589, 0
          %v2647 = vsel %vm2624, %v2590, 0
          %v2650 = vsel %vm2624, %v2591, 0
          %v2653 = vsel %vm2624, %v2592, 0
          %v2656 = vsel %vm2624, %v2593, 0
          %v2659 = vsel %vm2624, %v2594, 0
          %v2662 = vsel %vm2624, %v2595, 0
          %v2665 = vsel %vm2624, %v2596, 0
          %v2668 = vsel %vm2624, %v2597, 0
          %v2671 = vsel %vm2624, %v2598, 0
          %v2674 = vsel %vm2624, %v2599, 0
          %v2677 = vsel %vm2624, %v2600, 0
          %v2680 = vsel %vm2624, %v2601, 0
          %v2683 = vsel %vm2624, %v2602, 0
          %v2686 = vsel %vm2624, %v2603, 0
          %v2689 = vsel %vm2624, %v2604, 0
          %v2692 = vsel %vm2624, %v2605, 0
          %v2695 = vsel %vm2624, %v2606, 0
          %v2698 = vsel %vm2624, %v2607, 0
          %v2701 = vsel %vm2624, %v2608, 0
          %v2704 = vsel %vm2624, %v2609, 0
          %v2707 = vsel %vm2624, %v2610, 0
          %v2710 = vsel %vm2624, %v2611, 0
          %v2713 = vsel %vm2624, %v2612, 0
          %v2716 = vsel %vm2624, %v2613, 0
          %v2719 = vsel %vm2624, %v2614, 0
          %2721 = vmatprep.subr.mxu0 0.0
          %2722 = vmatpush1.msra.mxu0 0.0
          %2723 = vmatprep.subr.mxu0 0.0
          %2724 = vmatpush1.msra.mxu0 0.0
          %2725 = vmatprep.subr.mxu0 0.0
          %2726 = vmatpush1.msra.mxu0 0.0
          %2727 = vmatprep.subr.mxu0 0.0
          %2728 = vmatpush1.msra.mxu0 0.0
          %2729 = vmatprep.subr.mxu0 0.0
          %2730 = vmatpush1.msra.mxu0 0.0
          %2731 = vmatprep.subr.mxu0 0.0
          %2732 = vmatpush1.msra.mxu0 0.0
          %2733 = vmatprep.subr.mxu0 0.0
          %2734 = vmatpush1.msra.mxu0 0.0
          %2735 = vmatprep.subr.mxu0 0.0
          %2736 = vmatpush1.msra.mxu0 0.0
          %2737 = vmatprep.subr.mxu0 0.0
          %2738 = vmatpush1.msra.mxu0 0.0
          %2739 = vmatprep.subr.mxu0 0.0
          %2740 = vmatpush1.msra.mxu0 0.0
          %2741 = vmatprep.subr.mxu0 0.0
          %2742 = vmatpush1.msra.mxu0 0.0
          %2743 = vmatprep.subr.mxu0 0.0
          %2744 = vmatpush1.msra.mxu0 0.0
          %2745 = vmatprep.subr.mxu0 0.0
          %2746 = vmatpush1.msra.mxu0 0.0
          %2747 = vmatprep.subr.mxu0 0.0
          %2748 = vmatpush1.msra.mxu0 0.0
          %2749 = vmatprep.subr.mxu0 0.0
          %2750 = vmatpush1.msra.mxu0 0.0
          %2751 = vmatprep.subr.mxu0 0.0
          %2752 = vmatpush1.msra.mxu0 %v2616
          %2753 = vmatprep.subr.mxu0 0.0
          %2754 = vmatpush2.msra.mxu0 0.0
          %2755 = vmatprep.subr.mxu0 0.0
          %2756 = vmatpush2.msra.mxu0 0.0
          %2757 = vmatprep.subr.mxu0 0.0
          %2758 = vmatpush2.msra.mxu0 0.0
          %2759 = vmatprep.subr.mxu0 0.0
          %2760 = vmatpush2.msra.mxu0 0.0
          %2761 = vmatprep.subr.mxu0 0.0
          %2762 = vmatpush2.msra.mxu0 0.0
          %2763 = vmatprep.subr.mxu0 0.0
          %2764 = vmatpush2.msra.mxu0 0.0
          %2765 = vmatprep.subr.mxu0 0.0
          %2766 = vmatpush2.msra.mxu0 0.0
          %2767 = vmatprep.subr.mxu0 0.0
          %2768 = vmatpush2.msra.mxu0 0.0
          %2769 = vmatprep.subr.mxu0 0.0
          %2770 = vmatpush2.msra.mxu0 0.0
          %2771 = vmatprep.subr.mxu0 0.0
          %2772 = vmatpush2.msra.mxu0 0.0
          %2773 = vmatprep.subr.mxu0 0.0
          %2774 = vmatpush2.msra.mxu0 0.0
          %2775 = vmatprep.subr.mxu0 0.0
          %2776 = vmatpush2.msra.mxu0 0.0
          %2777 = vmatprep.subr.mxu0 0.0
          %2778 = vmatpush2.msra.mxu0 0.0
          %2779 = vmatprep.subr.mxu0 0.0
          %2780 = vmatpush2.msra.mxu0 0.0
          %2781 = vmatprep.subr.mxu0 0.0
          %2782 = vmatpush2.msra.mxu0 0.0
          %2783 = vmatprep.subr.mxu0 0.0
          %2784 = vmatpush2.msra.mxu0 0.0
          %2785 = vmatprep.mubr.f32.mxu0 0.0
          %2786 = vmatmul.mubr.f32.gmra.mxu0 %v2626
          %v2787 = vpop.f32.mrf.mxu0
          %v2788 = vadd.f32 %v2622, %v2787
          %v2789 = vpop.f32.mrf.mxu0
          %2790 = vmatprep.mubr.f32.mxu0 0.0
          %2791 = vmatmul.mubr.f32.gmra.mxu0 %v2629
          %v2792 = vpop.f32.mrf.mxu0
          %v2793 = vadd.f32 %v2622, %v2792
          %v2794 = vpop.f32.mrf.mxu0
          %2795 = vmatprep.mubr.f32.mxu0 0.0
          %2796 = vmatmul.mubr.f32.gmra.mxu0 %v2632
          %v2797 = vpop.f32.mrf.mxu0
          %v2798 = vadd.f32 %v2622, %v2797
          %v2799 = vpop.f32.mrf.mxu0
          %2800 = vmatprep.mubr.f32.mxu0 0.0
          %2801 = vmatmul.mubr.f32.gmra.mxu0 %v2635
          %v2802 = vpop.f32.mrf.mxu0
          %v2803 = vadd.f32 %v2622, %v2802
          %v2804 = vpop.f32.mrf.mxu0
          %2805 = vmatprep.mubr.f32.mxu0 0.0
          %2806 = vmatmul.mubr.f32.gmra.mxu0 %v2638
          %v2807 = vpop.f32.mrf.mxu0
          %v2808 = vadd.f32 %v2622, %v2807
          %v2809 = vpop.f32.mrf.mxu0
          %2810 = vmatprep.mubr.f32.mxu0 0.0
          %2811 = vmatmul.mubr.f32.gmra.mxu0 %v2641
          %v2812 = vpop.f32.mrf.mxu0
          %v2813 = vadd.f32 %v2622, %v2812
          %v2814 = vpop.f32.mrf.mxu0
          %2815 = vmatprep.mubr.f32.mxu0 0.0
          %2816 = vmatmul.mubr.f32.gmra.mxu0 %v2644
          %v2817 = vpop.f32.mrf.mxu0
          %v2818 = vadd.f32 %v2622, %v2817
          %v2819 = vpop.f32.mrf.mxu0
          %2820 = vmatprep.mubr.f32.mxu0 0.0
          %2821 = vmatmul.mubr.f32.gmra.mxu0 %v2647
          %v2822 = vpop.f32.mrf.mxu0
          %v2823 = vadd.f32 %v2622, %v2822
          %v2824 = vpop.f32.mrf.mxu0
          %2825 = vmatprep.mubr.f32.mxu0 0.0
          %2826 = vmatmul.mubr.f32.gmra.mxu0 %v2650
          %v2827 = vpop.f32.mrf.mxu0
          %v2828 = vadd.f32 %v2622, %v2827
          %v2829 = vpop.f32.mrf.mxu0
          %2830 = vmatprep.mubr.f32.mxu0 0.0
          %2831 = vmatmul.mubr.f32.gmra.mxu0 %v2653
          %v2832 = vpop.f32.mrf.mxu0
          %v2833 = vadd.f32 %v2622, %v2832
          %v2834 = vpop.f32.mrf.mxu0
          %2835 = vmatprep.mubr.f32.mxu0 0.0
          %2836 = vmatmul.mubr.f32.gmra.mxu0 %v2656
          %v2837 = vpop.f32.mrf.mxu0
          %v2838 = vadd.f32 %v2622, %v2837
          %v2839 = vpop.f32.mrf.mxu0
          %2840 = vmatprep.mubr.f32.mxu0 0.0
          %2841 = vmatmul.mubr.f32.gmra.mxu0 %v2659
          %v2842 = vpop.f32.mrf.mxu0
          %v2843 = vadd.f32 %v2622, %v2842
          %v2844 = vpop.f32.mrf.mxu0
          %2845 = vmatprep.mubr.f32.mxu0 0.0
          %2846 = vmatmul.mubr.f32.gmra.mxu0 %v2662
          %v2847 = vpop.f32.mrf.mxu0
          %v2848 = vadd.f32 %v2622, %v2847
          %v2849 = vpop.f32.mrf.mxu0
          %2850 = vmatprep.mubr.f32.mxu0 0.0
          %2851 = vmatmul.mubr.f32.gmra.mxu0 %v2665
          %v2852 = vpop.f32.mrf.mxu0
          %v2853 = vadd.f32 %v2622, %v2852
          %v2854 = vpop.f32.mrf.mxu0
          %2855 = vmatprep.mubr.f32.mxu0 0.0
          %2856 = vmatmul.mubr.f32.gmra.mxu0 %v2668
          %v2857 = vpop.f32.mrf.mxu0
          %v2858 = vadd.f32 %v2622, %v2857
          %v2859 = vpop.f32.mrf.mxu0
          %2860 = vmatprep.mubr.f32.mxu0 0.0
          %2861 = vmatmul.mubr.f32.gmra.mxu0 %v2671
          %v2862 = vpop.f32.mrf.mxu0
          %v2863 = vadd.f32 %v2622, %v2862
          %v2864 = vpop.f32.mrf.mxu0
          %2865 = vmatprep.mubr.f32.mxu0 0.0
          %2866 = vmatmul.mubr.f32.gmra.mxu0 %v2674
          %v2867 = vpop.f32.mrf.mxu0
          %v2868 = vadd.f32 %v2622, %v2867
          %v2869 = vpop.f32.mrf.mxu0
          %2870 = vmatprep.mubr.f32.mxu0 0.0
          %2871 = vmatmul.mubr.f32.gmra.mxu0 %v2677
          %v2872 = vpop.f32.mrf.mxu0
          %v2873 = vadd.f32 %v2622, %v2872
          %v2874 = vpop.f32.mrf.mxu0
          %2875 = vmatprep.mubr.f32.mxu0 0.0
          %2876 = vmatmul.mubr.f32.gmra.mxu0 %v2680
          %v2877 = vpop.f32.mrf.mxu0
          %v2878 = vadd.f32 %v2622, %v2877
          %v2879 = vpop.f32.mrf.mxu0
          %2880 = vmatprep.mubr.f32.mxu0 0.0
          %2881 = vmatmul.mubr.f32.gmra.mxu0 %v2683
          %v2882 = vpop.f32.mrf.mxu0
          %v2883 = vadd.f32 %v2622, %v2882
          %v2884 = vpop.f32.mrf.mxu0
          %2885 = vmatprep.mubr.f32.mxu0 0.0
          %2886 = vmatmul.mubr.f32.gmra.mxu0 %v2686
          %v2887 = vpop.f32.mrf.mxu0
          %v2888 = vadd.f32 %v2622, %v2887
          %v2889 = vpop.f32.mrf.mxu0
          %2890 = vmatprep.mubr.f32.mxu0 0.0
          %2891 = vmatmul.mubr.f32.gmra.mxu0 %v2689
          %v2892 = vpop.f32.mrf.mxu0
          %v2893 = vadd.f32 %v2622, %v2892
          %v2894 = vpop.f32.mrf.mxu0
          %2895 = vmatprep.mubr.f32.mxu0 0.0
          %2896 = vmatmul.mubr.f32.gmra.mxu0 %v2692
          %v2897 = vpop.f32.mrf.mxu0
          %v2898 = vadd.f32 %v2622, %v2897
          %v2899 = vpop.f32.mrf.mxu0
          %2900 = vmatprep.mubr.f32.mxu0 0.0
          %2901 = vmatmul.mubr.f32.gmra.mxu0 %v2695
          %v2902 = vpop.f32.mrf.mxu0
          %v2903 = vadd.f32 %v2622, %v2902
          %v2904 = vpop.f32.mrf.mxu0
          %2905 = vmatprep.mubr.f32.mxu0 0.0
          %2906 = vmatmul.mubr.f32.gmra.mxu0 %v2698
          %v2907 = vpop.f32.mrf.mxu0
          %v2908 = vadd.f32 %v2622, %v2907
          %v2909 = vpop.f32.mrf.mxu0
          %2910 = vmatprep.mubr.f32.mxu0 0.0
          %2911 = vmatmul.mubr.f32.gmra.mxu0 %v2701
          %v2912 = vpop.f32.mrf.mxu0
          %v2913 = vadd.f32 %v2622, %v2912
          %v2914 = vpop.f32.mrf.mxu0
          %2915 = vmatprep.mubr.f32.mxu0 0.0
          %2916 = vmatmul.mubr.f32.gmra.mxu0 %v2704
          %v2917 = vpop.f32.mrf.mxu0
          %v2918 = vadd.f32 %v2622, %v2917
          %v2919 = vpop.f32.mrf.mxu0
          %2920 = vmatprep.mubr.f32.mxu0 0.0
          %2921 = vmatmul.mubr.f32.gmra.mxu0 %v2707
          %v2922 = vpop.f32.mrf.mxu0
          %v2923 = vadd.f32 %v2622, %v2922
          %v2924 = vpop.f32.mrf.mxu0
          %2925 = vmatprep.mubr.f32.mxu0 0.0
          %2926 = vmatmul.mubr.f32.gmra.mxu0 %v2710
          %v2927 = vpop.f32.mrf.mxu0
          %v2928 = vadd.f32 %v2622, %v2927
          %v2929 = vpop.f32.mrf.mxu0
          %2930 = vmatprep.mubr.f32.mxu0 0.0
          %2931 = vmatmul.mubr.f32.gmra.mxu0 %v2713
          %v2932 = vpop.f32.mrf.mxu0
          %v2933 = vadd.f32 %v2622, %v2932
          %v2934 = vpop.f32.mrf.mxu0
          %2935 = vmatprep.mubr.f32.mxu0 0.0
          %2936 = vmatmul.mubr.f32.gmra.mxu0 %v2716
          %v2937 = vpop.f32.mrf.mxu0
          %v2938 = vadd.f32 %v2622, %v2937
          %v2939 = vpop.f32.mrf.mxu0
          %2940 = vmatprep.mubr.f32.mxu0 0.0
          %2941 = vmatmul.mubr.f32.gmra.mxu0 %v2719
          %v2942 = vpop.f32.mrf.mxu0
          %v2943 = vadd.f32 %v2622, %v2942
          %v2944 = vpop.f32.mrf.mxu0
          %2945 = vdwg.mxu0
          %2946 = vadd.xlane.f32.xlu0 %v2788
          %v2947 = vpop.xlane.xlu0 %2946
          %2948 = vadd.xlane.f32.xlu0 %v2793
          %v2949 = vpop.xlane.xlu0 %2948
          %2950 = vadd.xlane.f32.xlu0 %v2798
          %v2951 = vpop.xlane.xlu0 %2950
          %2952 = vadd.xlane.f32.xlu0 %v2803
          %v2953 = vpop.xlane.xlu0 %2952
          %2954 = vadd.xlane.f32.xlu0 %v2808
          %v2955 = vpop.xlane.xlu0 %2954
          %2956 = vadd.xlane.f32.xlu0 %v2813
          %v2957 = vpop.xlane.xlu0 %2956
          %2958 = vadd.xlane.f32.xlu0 %v2818
          %v2959 = vpop.xlane.xlu0 %2958
          %2960 = vadd.xlane.f32.xlu0 %v2823
          %v2961 = vpop.xlane.xlu0 %2960
          %2962 = vadd.xlane.f32.xlu0 %v2828
          %v2963 = vpop.xlane.xlu0 %2962
          %2964 = vadd.xlane.f32.xlu0 %v2833
          %v2965 = vpop.xlane.xlu0 %2964
          %2966 = vadd.xlane.f32.xlu0 %v2838
          %v2967 = vpop.xlane.xlu0 %2966
          %2968 = vadd.xlane.f32.xlu0 %v2843
          %v2969 = vpop.xlane.xlu0 %2968
          %2970 = vadd.xlane.f32.xlu0 %v2848
          %v2971 = vpop.xlane.xlu0 %2970
          %2972 = vadd.xlane.f32.xlu0 %v2853
          %v2973 = vpop.xlane.xlu0 %2972
          %2974 = vadd.xlane.f32.xlu0 %v2858
          %v2975 = vpop.xlane.xlu0 %2974
          %2976 = vadd.xlane.f32.xlu0 %v2863
          %v2977 = vpop.xlane.xlu0 %2976
          %2978 = vadd.xlane.f32.xlu0 %v2868
          %v2979 = vpop.xlane.xlu0 %2978
          %2980 = vadd.xlane.f32.xlu0 %v2873
          %v2981 = vpop.xlane.xlu0 %2980
          %2982 = vadd.xlane.f32.xlu0 %v2878
          %v2983 = vpop.xlane.xlu0 %2982
          %2984 = vadd.xlane.f32.xlu0 %v2883
          %v2985 = vpop.xlane.xlu0 %2984
          %2986 = vadd.xlane.f32.xlu0 %v2888
          %v2987 = vpop.xlane.xlu0 %2986
          %2988 = vadd.xlane.f32.xlu0 %v2893
          %v2989 = vpop.xlane.xlu0 %2988
          %2990 = vadd.xlane.f32.xlu0 %v2898
          %v2991 = vpop.xlane.xlu0 %2990
          %2992 = vadd.xlane.f32.xlu0 %v2903
          %v2993 = vpop.xlane.xlu0 %2992
          %2994 = vadd.xlane.f32.xlu0 %v2908
          %v2995 = vpop.xlane.xlu0 %2994
          %2996 = vadd.xlane.f32.xlu0 %v2913
          %v2997 = vpop.xlane.xlu0 %2996
          %2998 = vadd.xlane.f32.xlu0 %v2918
          %v2999 = vpop.xlane.xlu0 %2998
          %3000 = vadd.xlane.f32.xlu0 %v2923
          %v3001 = vpop.xlane.xlu0 %3000
          %3002 = vadd.xlane.f32.xlu0 %v2928
          %v3003 = vpop.xlane.xlu0 %3002
          %3004 = vadd.xlane.f32.xlu0 %v2933
          %v3005 = vpop.xlane.xlu0 %3004
          %3006 = vadd.xlane.f32.xlu0 %v2938
          %v3007 = vpop.xlane.xlu0 %3006
          %3008 = vadd.xlane.f32.xlu0 %v2943
          %v3009 = vpop.xlane.xlu0 %3008
          %v3010 = vmul.f32 %v2947, 0.01
          %v3011 = vmul.f32 %v2949, 0.01
          %v3012 = vmul.f32 %v2951, 0.01
          %v3013 = vmul.f32 %v2953, 0.01
          %v3014 = vmul.f32 %v2955, 0.01
          %v3015 = vmul.f32 %v2957, 0.01
          %v3016 = vmul.f32 %v2959, 0.01
          %v3017 = vmul.f32 %v2961, 0.01
          %v3018 = vmul.f32 %v2963, 0.01
          %v3019 = vmul.f32 %v2965, 0.01
          %v3020 = vmul.f32 %v2967, 0.01
          %v3021 = vmul.f32 %v2969, 0.01
          %v3022 = vmul.f32 %v2971, 0.01
          %v3023 = vmul.f32 %v2973, 0.01
          %v3024 = vmul.f32 %v2975, 0.01
          %v3025 = vmul.f32 %v2977, 0.01
          %v3026 = vmul.f32 %v2979, 0.01
          %v3027 = vmul.f32 %v2981, 0.01
          %v3028 = vmul.f32 %v2983, 0.01
          %v3029 = vmul.f32 %v2985, 0.01
          %v3030 = vmul.f32 %v2987, 0.01
          %v3031 = vmul.f32 %v2989, 0.01
          %v3032 = vmul.f32 %v2991, 0.01
          %v3033 = vmul.f32 %v2993, 0.01
          %v3034 = vmul.f32 %v2995, 0.01
          %v3035 = vmul.f32 %v2997, 0.01
          %v3036 = vmul.f32 %v2999, 0.01
          %v3037 = vmul.f32 %v3001, 0.01
          %v3038 = vmul.f32 %v3003, 0.01
          %v3039 = vmul.f32 %v3005, 0.01
          %v3040 = vmul.f32 %v3007, 0.01
          %v3041 = vmul.f32 %v3009, 0.01
          %v3042 = vsub.f32 %v2788, %v3010
          %v3043 = vsub.f32 %v2793, %v3011
          %v3044 = vsub.f32 %v2798, %v3012
          %v3045 = vsub.f32 %v2803, %v3013
          %v3046 = vsub.f32 %v2808, %v3014
          %v3047 = vsub.f32 %v2813, %v3015
          %v3048 = vsub.f32 %v2818, %v3016
          %v3049 = vsub.f32 %v2823, %v3017
          %v3050 = vsub.f32 %v2828, %v3018
          %v3051 = vsub.f32 %v2833, %v3019
          %v3052 = vsub.f32 %v2838, %v3020
          %v3053 = vsub.f32 %v2843, %v3021
          %v3054 = vsub.f32 %v2848, %v3022
          %v3055 = vsub.f32 %v2853, %v3023
          %v3056 = vsub.f32 %v2858, %v3024
          %v3057 = vsub.f32 %v2863, %v3025
          %v3058 = vsub.f32 %v2868, %v3026
          %v3059 = vsub.f32 %v2873, %v3027
          %v3060 = vsub.f32 %v2878, %v3028
          %v3061 = vsub.f32 %v2883, %v3029
          %v3062 = vsub.f32 %v2888, %v3030
          %v3063 = vsub.f32 %v2893, %v3031
          %v3064 = vsub.f32 %v2898, %v3032
          %v3065 = vsub.f32 %v2903, %v3033
          %v3066 = vsub.f32 %v2908, %v3034
          %v3067 = vsub.f32 %v2913, %v3035
          %v3068 = vsub.f32 %v2918, %v3036
          %v3069 = vsub.f32 %v2923, %v3037
          %v3070 = vsub.f32 %v2928, %v3038
          %v3071 = vsub.f32 %v2933, %v3039
          %v3072 = vsub.f32 %v2938, %v3040
          %v3073 = vsub.f32 %v2943, %v3041
          %v3074 = vmul.f32 %v3042, %v248
          %v3075 = vmul.f32 %v3043, %v248
          %v3076 = vmul.f32 %v3044, %v248
          %v3077 = vmul.f32 %v3045, %v248
          %v3078 = vmul.f32 %v3046, %v248
          %v3079 = vmul.f32 %v3047, %v248
          %v3080 = vmul.f32 %v3048, %v248
          %v3081 = vmul.f32 %v3049, %v248
          %v3082 = vmul.f32 %v3050, %v248
          %v3083 = vmul.f32 %v3051, %v248
          %v3084 = vmul.f32 %v3052, %v248
          %v3085 = vmul.f32 %v3053, %v248
          %v3086 = vmul.f32 %v3054, %v248
          %v3087 = vmul.f32 %v3055, %v248
          %v3088 = vmul.f32 %v3056, %v248
          %v3089 = vmul.f32 %v3057, %v248
          %v3090 = vmul.f32 %v3058, %v248
          %v3091 = vmul.f32 %v3059, %v248
          %v3092 = vmul.f32 %v3060, %v248
          %v3093 = vmul.f32 %v3061, %v248
          %v3094 = vmul.f32 %v3062, %v248
          %v3095 = vmul.f32 %v3063, %v248
          %v3096 = vmul.f32 %v3064, %v248
          %v3097 = vmul.f32 %v3065, %v248
          %v3098 = vmul.f32 %v3066, %v248
          %v3099 = vmul.f32 %v3067, %v248
          %v3100 = vmul.f32 %v3068, %v248
          %v3101 = vmul.f32 %v3069, %v248
          %v3102 = vmul.f32 %v3070, %v248
          %v3103 = vmul.f32 %v3071, %v248
          %v3104 = vmul.f32 %v3072, %v248
          %v3105 = vmul.f32 %v3073, %v248
          %v3106 = vmul.f32 %v3074, %v3074
          %v3107 = vmul.f32 %v3075, %v3075
          %v3108 = vmul.f32 %v3076, %v3076
          %v3109 = vmul.f32 %v3077, %v3077
          %v3110 = vmul.f32 %v3078, %v3078
          %v3111 = vmul.f32 %v3079, %v3079
          %v3112 = vmul.f32 %v3080, %v3080
          %v3113 = vmul.f32 %v3081, %v3081
          %v3114 = vmul.f32 %v3082, %v3082
          %v3115 = vmul.f32 %v3083, %v3083
          %v3116 = vmul.f32 %v3084, %v3084
          %v3117 = vmul.f32 %v3085, %v3085
          %v3118 = vmul.f32 %v3086, %v3086
          %v3119 = vmul.f32 %v3087, %v3087
          %v3120 = vmul.f32 %v3088, %v3088
          %v3121 = vmul.f32 %v3089, %v3089
          %v3122 = vmul.f32 %v3090, %v3090
          %v3123 = vmul.f32 %v3091, %v3091
          %v3124 = vmul.f32 %v3092, %v3092
          %v3125 = vmul.f32 %v3093, %v3093
          %v3126 = vmul.f32 %v3094, %v3094
          %v3127 = vmul.f32 %v3095, %v3095
          %v3128 = vmul.f32 %v3096, %v3096
          %v3129 = vmul.f32 %v3097, %v3097
          %v3130 = vmul.f32 %v3098, %v3098
          %v3131 = vmul.f32 %v3099, %v3099
          %v3132 = vmul.f32 %v3100, %v3100
          %v3133 = vmul.f32 %v3101, %v3101
          %v3134 = vmul.f32 %v3102, %v3102
          %v3135 = vmul.f32 %v3103, %v3103
          %v3136 = vmul.f32 %v3104, %v3104
          %v3137 = vmul.f32 %v3105, %v3105
          %3138 = vadd.xlane.f32.xlu0 %v3106
          %v3139 = vpop.xlane.xlu0 %3138
          %3140 = vadd.xlane.f32.xlu0 %v3107
          %v3141 = vpop.xlane.xlu0 %3140
          %3142 = vadd.xlane.f32.xlu0 %v3108
          %v3143 = vpop.xlane.xlu0 %3142
          %3144 = vadd.xlane.f32.xlu0 %v3109
          %v3145 = vpop.xlane.xlu0 %3144
          %3146 = vadd.xlane.f32.xlu0 %v3110
          %v3147 = vpop.xlane.xlu0 %3146
          %3148 = vadd.xlane.f32.xlu0 %v3111
          %v3149 = vpop.xlane.xlu0 %3148
          %3150 = vadd.xlane.f32.xlu0 %v3112
          %v3151 = vpop.xlane.xlu0 %3150
          %3152 = vadd.xlane.f32.xlu0 %v3113
          %v3153 = vpop.xlane.xlu0 %3152
          %3154 = vadd.xlane.f32.xlu0 %v3114
          %v3155 = vpop.xlane.xlu0 %3154
          %3156 = vadd.xlane.f32.xlu0 %v3115
          %v3157 = vpop.xlane.xlu0 %3156
          %3158 = vadd.xlane.f32.xlu0 %v3116
          %v3159 = vpop.xlane.xlu0 %3158
          %3160 = vadd.xlane.f32.xlu0 %v3117
          %v3161 = vpop.xlane.xlu0 %3160
          %3162 = vadd.xlane.f32.xlu0 %v3118
          %v3163 = vpop.xlane.xlu0 %3162
          %3164 = vadd.xlane.f32.xlu0 %v3119
          %v3165 = vpop.xlane.xlu0 %3164
          %3166 = vadd.xlane.f32.xlu0 %v3120
          %v3167 = vpop.xlane.xlu0 %3166
          %3168 = vadd.xlane.f32.xlu0 %v3121
          %v3169 = vpop.xlane.xlu0 %3168
          %3170 = vadd.xlane.f32.xlu0 %v3122
          %v3171 = vpop.xlane.xlu0 %3170
          %3172 = vadd.xlane.f32.xlu0 %v3123
          %v3173 = vpop.xlane.xlu0 %3172
          %3174 = vadd.xlane.f32.xlu0 %v3124
          %v3175 = vpop.xlane.xlu0 %3174
          %3176 = vadd.xlane.f32.xlu0 %v3125
          %v3177 = vpop.xlane.xlu0 %3176
          %3178 = vadd.xlane.f32.xlu0 %v3126
          %v3179 = vpop.xlane.xlu0 %3178
          %3180 = vadd.xlane.f32.xlu0 %v3127
          %v3181 = vpop.xlane.xlu0 %3180
          %3182 = vadd.xlane.f32.xlu0 %v3128
          %v3183 = vpop.xlane.xlu0 %3182
          %3184 = vadd.xlane.f32.xlu0 %v3129
          %v3185 = vpop.xlane.xlu0 %3184
          %3186 = vadd.xlane.f32.xlu0 %v3130
          %v3187 = vpop.xlane.xlu0 %3186
          %3188 = vadd.xlane.f32.xlu0 %v3131
          %v3189 = vpop.xlane.xlu0 %3188
          %3190 = vadd.xlane.f32.xlu0 %v3132
          %v3191 = vpop.xlane.xlu0 %3190
          %3192 = vadd.xlane.f32.xlu0 %v3133
          %v3193 = vpop.xlane.xlu0 %3192
          %3194 = vadd.xlane.f32.xlu0 %v3134
          %v3195 = vpop.xlane.xlu0 %3194
          %3196 = vadd.xlane.f32.xlu0 %v3135
          %v3197 = vpop.xlane.xlu0 %3196
          %3198 = vadd.xlane.f32.xlu0 %v3136
          %v3199 = vpop.xlane.xlu0 %3198
          %3200 = vadd.xlane.f32.xlu0 %v3137
          %v3201 = vpop.xlane.xlu0 %3200
          %v3202 = vmul.f32 %v3139, 0.01
          %v3203 = vmul.f32 %v3141, 0.01
          %v3204 = vmul.f32 %v3143, 0.01
          %v3205 = vmul.f32 %v3145, 0.01
          %v3206 = vmul.f32 %v3147, 0.01
          %v3207 = vmul.f32 %v3149, 0.01
          %v3208 = vmul.f32 %v3151, 0.01
          %v3209 = vmul.f32 %v3153, 0.01
          %v3210 = vmul.f32 %v3155, 0.01
          %v3211 = vmul.f32 %v3157, 0.01
          %v3212 = vmul.f32 %v3159, 0.01
          %v3213 = vmul.f32 %v3161, 0.01
          %v3214 = vmul.f32 %v3163, 0.01
          %v3215 = vmul.f32 %v3165, 0.01
          %v3216 = vmul.f32 %v3167, 0.01
          %v3217 = vmul.f32 %v3169, 0.01
          %v3218 = vmul.f32 %v3171, 0.01
          %v3219 = vmul.f32 %v3173, 0.01
          %v3220 = vmul.f32 %v3175, 0.01
          %v3221 = vmul.f32 %v3177, 0.01
          %v3222 = vmul.f32 %v3179, 0.01
          %v3223 = vmul.f32 %v3181, 0.01
          %v3224 = vmul.f32 %v3183, 0.01
          %v3225 = vmul.f32 %v3185, 0.01
          %v3226 = vmul.f32 %v3187, 0.01
          %v3227 = vmul.f32 %v3189, 0.01
          %v3228 = vmul.f32 %v3191, 0.01
          %v3229 = vmul.f32 %v3193, 0.01
          %v3230 = vmul.f32 %v3195, 0.01
          %v3231 = vmul.f32 %v3197, 0.01
          %v3232 = vmul.f32 %v3199, 0.01
          %v3233 = vmul.f32 %v3201, 0.01
          %v3234 = vadd.f32 %v3202, 1e-05
          %v3235 = vadd.f32 %v3203, 1e-05
          %v3236 = vadd.f32 %v3204, 1e-05
          %v3237 = vadd.f32 %v3205, 1e-05
          %v3238 = vadd.f32 %v3206, 1e-05
          %v3239 = vadd.f32 %v3207, 1e-05
          %v3240 = vadd.f32 %v3208, 1e-05
          %v3241 = vadd.f32 %v3209, 1e-05
          %v3242 = vadd.f32 %v3210, 1e-05
          %v3243 = vadd.f32 %v3211, 1e-05
          %v3244 = vadd.f32 %v3212, 1e-05
          %v3245 = vadd.f32 %v3213, 1e-05
          %v3246 = vadd.f32 %v3214, 1e-05
          %v3247 = vadd.f32 %v3215, 1e-05
          %v3248 = vadd.f32 %v3216, 1e-05
          %v3249 = vadd.f32 %v3217, 1e-05
          %v3250 = vadd.f32 %v3218, 1e-05
          %v3251 = vadd.f32 %v3219, 1e-05
          %v3252 = vadd.f32 %v3220, 1e-05
          %v3253 = vadd.f32 %v3221, 1e-05
          %v3254 = vadd.f32 %v3222, 1e-05
          %v3255 = vadd.f32 %v3223, 1e-05
          %v3256 = vadd.f32 %v3224, 1e-05
          %v3257 = vadd.f32 %v3225, 1e-05
          %v3258 = vadd.f32 %v3226, 1e-05
          %v3259 = vadd.f32 %v3227, 1e-05
          %v3260 = vadd.f32 %v3228, 1e-05
          %v3261 = vadd.f32 %v3229, 1e-05
          %v3262 = vadd.f32 %v3230, 1e-05
          %v3263 = vadd.f32 %v3231, 1e-05
          %v3264 = vadd.f32 %v3232, 1e-05
          %v3265 = vadd.f32 %v3233, 1e-05
          %v3266 = vrsqrt.pop %v3234
          %v3267 = vrsqrt.pop %v3235
          %v3268 = vrsqrt.pop %v3236
          %v3269 = vrsqrt.pop %v3237
          %v3270 = vrsqrt.pop %v3238
          %v3271 = vrsqrt.pop %v3239
          %v3272 = vrsqrt.pop %v3240
          %v3273 = vrsqrt.pop %v3241
          %v3274 = vrsqrt.pop %v3242
          %v3275 = vrsqrt.pop %v3243
          %v3276 = vrsqrt.pop %v3244
          %v3277 = vrsqrt.pop %v3245
          %v3278 = vrsqrt.pop %v3246
          %v3279 = vrsqrt.pop %v3247
          %v3280 = vrsqrt.pop %v3248
          %v3281 = vrsqrt.pop %v3249
          %v3282 = vrsqrt.pop %v3250
          %v3283 = vrsqrt.pop %v3251
          %v3284 = vrsqrt.pop %v3252
          %v3285 = vrsqrt.pop %v3253
          %v3286 = vrsqrt.pop %v3254
          %v3287 = vrsqrt.pop %v3255
          %v3288 = vrsqrt.pop %v3256
          %v3289 = vrsqrt.pop %v3257
          %v3290 = vrsqrt.pop %v3258
          %v3291 = vrsqrt.pop %v3259
          %v3292 = vrsqrt.pop %v3260
          %v3293 = vrsqrt.pop %v3261
          %v3294 = vrsqrt.pop %v3262
          %v3295 = vrsqrt.pop %v3263
          %v3296 = vrsqrt.pop %v3264
          %v3297 = vrsqrt.pop %v3265
          %v3298 = vmul.f32 %v3042, %v3266
          %v3299 = vmul.f32 %v3043, %v3267
          %v3300 = vmul.f32 %v3044, %v3268
          %v3301 = vmul.f32 %v3045, %v3269
          %v3302 = vmul.f32 %v3046, %v3270
          %v3303 = vmul.f32 %v3047, %v3271
          %v3304 = vmul.f32 %v3048, %v3272
          %v3305 = vmul.f32 %v3049, %v3273
          %v3306 = vmul.f32 %v3050, %v3274
          %v3307 = vmul.f32 %v3051, %v3275
          %v3308 = vmul.f32 %v3052, %v3276
          %v3309 = vmul.f32 %v3053, %v3277
          %v3310 = vmul.f32 %v3054, %v3278
          %v3311 = vmul.f32 %v3055, %v3279
          %v3312 = vmul.f32 %v3056, %v3280
          %v3313 = vmul.f32 %v3057, %v3281
          %v3314 = vmul.f32 %v3058, %v3282
          %v3315 = vmul.f32 %v3059, %v3283
          %v3316 = vmul.f32 %v3060, %v3284
          %v3317 = vmul.f32 %v3061, %v3285
          %v3318 = vmul.f32 %v3062, %v3286
          %v3319 = vmul.f32 %v3063, %v3287
          %v3320 = vmul.f32 %v3064, %v3288
          %v3321 = vmul.f32 %v3065, %v3289
          %v3322 = vmul.f32 %v3066, %v3290
          %v3323 = vmul.f32 %v3067, %v3291
          %v3324 = vmul.f32 %v3068, %v3292
          %v3325 = vmul.f32 %v3069, %v3293
          %v3326 = vmul.f32 %v3070, %v3294
          %v3327 = vmul.f32 %v3071, %v3295
          %v3328 = vmul.f32 %v3072, %v3296
          %v3329 = vmul.f32 %v3073, %v3297
          %v3330 = vlaneseq
          %v3331 = vshrl.u32 %v3330, 7
          %v3332 = vsub.s32 7, %v3331
          %v3333 = vrot.slane %v2581, %v3332
          %v3334 = vmul.f32 %v3298, %v3333
          %v3335 = vmul.f32 %v3299, %v3333
          %v3336 = vmul.f32 %v3300, %v3333
          %v3337 = vmul.f32 %v3301, %v3333
          %v3338 = vmul.f32 %v3302, %v3333
          %v3339 = vmul.f32 %v3303, %v3333
          %v3340 = vmul.f32 %v3304, %v3333
          %v3341 = vmul.f32 %v3305, %v3333
          %v3342 = vmul.f32 %v3306, %v3333
          %v3343 = vmul.f32 %v3307, %v3333
          %v3344 = vmul.f32 %v3308, %v3333
          %v3345 = vmul.f32 %v3309, %v3333
          %v3346 = vmul.f32 %v3310, %v3333
          %v3347 = vmul.f32 %v3311, %v3333
          %v3348 = vmul.f32 %v3312, %v3333
          %v3349 = vmul.f32 %v3313, %v3333
          %v3350 = vmul.f32 %v3314, %v3333
          %v3351 = vmul.f32 %v3315, %v3333
          %v3352 = vmul.f32 %v3316, %v3333
          %v3353 = vmul.f32 %v3317, %v3333
          %v3354 = vmul.f32 %v3318, %v3333
          %v3355 = vmul.f32 %v3319, %v3333
          %v3356 = vmul.f32 %v3320, %v3333
          %v3357 = vmul.f32 %v3321, %v3333
          %v3358 = vmul.f32 %v3322, %v3333
          %v3359 = vmul.f32 %v3323, %v3333
          %v3360 = vmul.f32 %v3324, %v3333
          %v3361 = vmul.f32 %v3325, %v3333
          %v3362 = vmul.f32 %v3326, %v3333
          %v3363 = vmul.f32 %v3327, %v3333
          %v3364 = vmul.f32 %v3328, %v3333
          %v3365 = vmul.f32 %v3329, %v3333
          %v3366 = vlaneseq
          %v3367 = vshrl.u32 %v3366, 7
          %v3368 = vsub.s32 0, %v3367
          %v3369 = vrot.slane %v2582, %v3368
          %v3370 = vadd.f32 %v3334, %v3369
          %v3371 = vadd.f32 %v3335, %v3369
          %v3372 = vadd.f32 %v3336, %v3369
          %v3373 = vadd.f32 %v3337, %v3369
          %v3374 = vadd.f32 %v3338, %v3369
          %v3375 = vadd.f32 %v3339, %v3369
          %v3376 = vadd.f32 %v3340, %v3369
          %v3377 = vadd.f32 %v3341, %v3369
          %v3378 = vadd.f32 %v3342, %v3369
          %v3379 = vadd.f32 %v3343, %v3369
          %v3380 = vadd.f32 %v3344, %v3369
          %v3381 = vadd.f32 %v3345, %v3369
          %v3382 = vadd.f32 %v3346, %v3369
          %v3383 = vadd.f32 %v3347, %v3369
          %v3384 = vadd.f32 %v3348, %v3369
          %v3385 = vadd.f32 %v3349, %v3369
          %v3386 = vadd.f32 %v3350, %v3369
          %v3387 = vadd.f32 %v3351, %v3369
          %v3388 = vadd.f32 %v3352, %v3369
          %v3389 = vadd.f32 %v3353, %v3369
          %v3390 = vadd.f32 %v3354, %v3369
          %v3391 = vadd.f32 %v3355, %v3369
          %v3392 = vadd.f32 %v3356, %v3369
          %v3393 = vadd.f32 %v3357, %v3369
          %v3394 = vadd.f32 %v3358, %v3369
          %v3395 = vadd.f32 %v3359, %v3369
          %v3396 = vadd.f32 %v3360, %v3369
          %v3397 = vadd.f32 %v3361, %v3369
          %v3398 = vadd.f32 %v3362, %v3369
          %v3399 = vadd.f32 %v3363, %v3369
          %v3400 = vadd.f32 %v3364, %v3369
          %v3401 = vadd.f32 %v3365, %v3369
          %v3402 = vmax.f32 %v3370, 0.0
          %v3403 = vmax.f32 %v3371, 0.0
          %v3404 = vmax.f32 %v3372, 0.0
          %v3405 = vmax.f32 %v3373, 0.0
          %v3406 = vmax.f32 %v3374, 0.0
          %v3407 = vmax.f32 %v3375, 0.0
          %v3408 = vmax.f32 %v3376, 0.0
          %v3409 = vmax.f32 %v3377, 0.0
          %v3410 = vmax.f32 %v3378, 0.0
          %v3411 = vmax.f32 %v3379, 0.0
          %v3412 = vmax.f32 %v3380, 0.0
          %v3413 = vmax.f32 %v3381, 0.0
          %v3414 = vmax.f32 %v3382, 0.0
          %v3415 = vmax.f32 %v3383, 0.0
          %v3416 = vmax.f32 %v3384, 0.0
          %v3417 = vmax.f32 %v3385, 0.0
          %v3418 = vmax.f32 %v3386, 0.0
          %v3419 = vmax.f32 %v3387, 0.0
          %v3420 = vmax.f32 %v3388, 0.0
          %v3421 = vmax.f32 %v3389, 0.0
          %v3422 = vmax.f32 %v3390, 0.0
          %v3423 = vmax.f32 %v3391, 0.0
          %v3424 = vmax.f32 %v3392, 0.0
          %v3425 = vmax.f32 %v3393, 0.0
          %v3426 = vmax.f32 %v3394, 0.0
          %v3427 = vmax.f32 %v3395, 0.0
          %v3428 = vmax.f32 %v3396, 0.0
          %v3429 = vmax.f32 %v3397, 0.0
          %v3430 = vmax.f32 %v3398, 0.0
          %v3431 = vmax.f32 %v3399, 0.0
          %v3432 = vmax.f32 %v3400, 0.0
          %v3433 = vmax.f32 %v3401, 0.0
          %s3434 = scalar_lea.vmem %s2, 768
          %v3435 = vld [vmem:[%s3434] sm:$0xff]
          %v3436 = vld [vmem:[%s3434 + $0x8] sm:$0xff]
          %v3437 = vld [vmem:[%s3434 + $0x10] sm:$0xff]
          %v3438 = vld [vmem:[%s3434 + $0x18] sm:$0xff]
          %v3439 = vld [vmem:[%s3434 + $0x20] sm:$0xff]
          %v3440 = vld [vmem:[%s3434 + $0x28] sm:$0xff]
          %v3441 = vld [vmem:[%s3434 + $0x30] sm:$0xff]
          %v3442 = vld [vmem:[%s3434 + $0x38] sm:$0xff]
          %v3443 = vld [vmem:[%s3434 + $0x40] sm:$0xff]
          %v3444 = vld [vmem:[%s3434 + $0x48] sm:$0xff]
          %v3445 = vld [vmem:[%s3434 + $0x50] sm:$0xff]
          %v3446 = vld [vmem:[%s3434 + $0x58] sm:$0xff]
          %v3447 = vld [vmem:[%s3434 + $0x60] sm:$0xff]
          %v3448 = vld [vmem:[%s3434 + $0x68] sm:$0xff]
          %v3449 = vld [vmem:[%s3434 + $0x70] sm:$0xff]
          %v3450 = vld [vmem:[%s3434 + $0x78] sm:$0xff]
          %v3451 = vlaneseq
          %v3452 = vshrl.u32 %v3451, 7
          %v3453 = vsub.s32 1, %v3452
          %v3454 = vrot.slane %v2582, %v3453
          %3455 = vmatprep.subr.mxu0 0.0
          %3456 = vmatpush1.msra.mxu0 %v3450
          %3457 = vmatprep.subr.mxu0 0.0
          %3458 = vmatpush1.msra.mxu0 %v3449
          %3459 = vmatprep.subr.mxu0 0.0
          %3460 = vmatpush1.msra.mxu0 %v3448
          %3461 = vmatprep.subr.mxu0 0.0
          %3462 = vmatpush1.msra.mxu0 %v3447
          %3463 = vmatprep.subr.mxu0 0.0
          %3464 = vmatpush1.msra.mxu0 %v3446
          %3465 = vmatprep.subr.mxu0 0.0
          %3466 = vmatpush1.msra.mxu0 %v3445
          %3467 = vmatprep.subr.mxu0 0.0
          %3468 = vmatpush1.msra.mxu0 %v3444
          %3469 = vmatprep.subr.mxu0 0.0
          %3470 = vmatpush1.msra.mxu0 %v3443
          %3471 = vmatprep.subr.mxu0 0.0
          %3472 = vmatpush1.msra.mxu0 %v3442
          %3473 = vmatprep.subr.mxu0 0.0
          %3474 = vmatpush1.msra.mxu0 %v3441
          %3475 = vmatprep.subr.mxu0 0.0
          %3476 = vmatpush1.msra.mxu0 %v3440
          %3477 = vmatprep.subr.mxu0 0.0
          %3478 = vmatpush1.msra.mxu0 %v3439
          %3479 = vmatprep.subr.mxu0 0.0
          %3480 = vmatpush1.msra.mxu0 %v3438
          %3481 = vmatprep.subr.mxu0 0.0
          %3482 = vmatpush1.msra.mxu0 %v3437
          %3483 = vmatprep.subr.mxu0 0.0
          %3484 = vmatpush1.msra.mxu0 %v3436
          %3485 = vmatprep.subr.mxu0 0.0
          %3486 = vmatpush1.msra.mxu0 %v3435
          %3487 = vmatprep.subr.mxu0 0.0
          %3488 = vmatpush2.msra.mxu0 0.0
          %3489 = vmatprep.subr.mxu0 0.0
          %3490 = vmatpush2.msra.mxu0 0.0
          %3491 = vmatprep.subr.mxu0 0.0
          %3492 = vmatpush2.msra.mxu0 0.0
          %3493 = vmatprep.subr.mxu0 0.0
          %3494 = vmatpush2.msra.mxu0 0.0
          %3495 = vmatprep.subr.mxu0 0.0
          %3496 = vmatpush2.msra.mxu0 0.0
          %3497 = vmatprep.subr.mxu0 0.0
          %3498 = vmatpush2.msra.mxu0 0.0
          %3499 = vmatprep.subr.mxu0 0.0
          %3500 = vmatpush2.msra.mxu0 0.0
          %3501 = vmatprep.subr.mxu0 0.0
          %3502 = vmatpush2.msra.mxu0 0.0
          %3503 = vmatprep.subr.mxu0 0.0
          %3504 = vmatpush2.msra.mxu0 0.0
          %3505 = vmatprep.subr.mxu0 0.0
          %3506 = vmatpush2.msra.mxu0 0.0
          %3507 = vmatprep.subr.mxu0 0.0
          %3508 = vmatpush2.msra.mxu0 0.0
          %3509 = vmatprep.subr.mxu0 0.0
          %3510 = vmatpush2.msra.mxu0 0.0
          %3511 = vmatprep.subr.mxu0 0.0
          %3512 = vmatpush2.msra.mxu0 0.0
          %3513 = vmatprep.subr.mxu0 0.0
          %3514 = vmatpush2.msra.mxu0 0.0
          %3515 = vmatprep.subr.mxu0 0.0
          %3516 = vmatpush2.msra.mxu0 0.0
          %3517 = vmatprep.subr.mxu0 0.0
          %3518 = vmatpush2.msra.mxu0 0.0
          %3519 = vmatprep.mubr.f32.mxu0 0.0
          %3520 = vmatmul.mubr.f32.gmra.mxu0 %v3402
          %v3521 = vpop.f32.mrf.mxu0
          %v3522 = vadd.f32 %v3454, %v3521
          %v3523 = vpop.f32.mrf.mxu0
          %3524 = vmatprep.mubr.f32.mxu0 0.0
          %3525 = vmatmul.mubr.f32.gmra.mxu0 %v3403
          %v3526 = vpop.f32.mrf.mxu0
          %v3527 = vadd.f32 %v3454, %v3526
          %v3528 = vpop.f32.mrf.mxu0
          %3529 = vmatprep.mubr.f32.mxu0 0.0
          %3530 = vmatmul.mubr.f32.gmra.mxu0 %v3404
          %v3531 = vpop.f32.mrf.mxu0
          %v3532 = vadd.f32 %v3454, %v3531
          %v3533 = vpop.f32.mrf.mxu0
          %3534 = vmatprep.mubr.f32.mxu0 0.0
          %3535 = vmatmul.mubr.f32.gmra.mxu0 %v3405
          %v3536 = vpop.f32.mrf.mxu0
          %v3537 = vadd.f32 %v3454, %v3536
          %v3538 = vpop.f32.mrf.mxu0
          %3539 = vmatprep.mubr.f32.mxu0 0.0
          %3540 = vmatmul.mubr.f32.gmra.mxu0 %v3406
          %v3541 = vpop.f32.mrf.mxu0
          %v3542 = vadd.f32 %v3454, %v3541
          %v3543 = vpop.f32.mrf.mxu0
          %3544 = vmatprep.mubr.f32.mxu0 0.0
          %3545 = vmatmul.mubr.f32.gmra.mxu0 %v3407
          %v3546 = vpop.f32.mrf.mxu0
          %v3547 = vadd.f32 %v3454, %v3546
          %v3548 = vpop.f32.mrf.mxu0
          %3549 = vmatprep.mubr.f32.mxu0 0.0
          %3550 = vmatmul.mubr.f32.gmra.mxu0 %v3408
          %v3551 = vpop.f32.mrf.mxu0
          %v3552 = vadd.f32 %v3454, %v3551
          %v3553 = vpop.f32.mrf.mxu0
          %3554 = vmatprep.mubr.f32.mxu0 0.0
          %3555 = vmatmul.mubr.f32.gmra.mxu0 %v3409
          %v3556 = vpop.f32.mrf.mxu0
          %v3557 = vadd.f32 %v3454, %v3556
          %v3558 = vpop.f32.mrf.mxu0
          %3559 = vmatprep.mubr.f32.mxu0 0.0
          %3560 = vmatmul.mubr.f32.gmra.mxu0 %v3410
          %v3561 = vpop.f32.mrf.mxu0
          %v3562 = vadd.f32 %v3454, %v3561
          %v3563 = vpop.f32.mrf.mxu0
          %3564 = vmatprep.mubr.f32.mxu0 0.0
          %3565 = vmatmul.mubr.f32.gmra.mxu0 %v3411
          %v3566 = vpop.f32.mrf.mxu0
          %v3567 = vadd.f32 %v3454, %v3566
          %v3568 = vpop.f32.mrf.mxu0
          %3569 = vmatprep.mubr.f32.mxu0 0.0
          %3570 = vmatmul.mubr.f32.gmra.mxu0 %v3412
          %v3571 = vpop.f32.mrf.mxu0
          %v3572 = vadd.f32 %v3454, %v3571
          %v3573 = vpop.f32.mrf.mxu0
          %3574 = vmatprep.mubr.f32.mxu0 0.0
          %3575 = vmatmul.mubr.f32.gmra.mxu0 %v3413
          %v3576 = vpop.f32.mrf.mxu0
          %v3577 = vadd.f32 %v3454, %v3576
          %v3578 = vpop.f32.mrf.mxu0
          %3579 = vmatprep.mubr.f32.mxu0 0.0
          %3580 = vmatmul.mubr.f32.gmra.mxu0 %v3414
          %v3581 = vpop.f32.mrf.mxu0
          %v3582 = vadd.f32 %v3454, %v3581
          %v3583 = vpop.f32.mrf.mxu0
          %3584 = vmatprep.mubr.f32.mxu0 0.0
          %3585 = vmatmul.mubr.f32.gmra.mxu0 %v3415
          %v3586 = vpop.f32.mrf.mxu0
          %v3587 = vadd.f32 %v3454, %v3586
          %v3588 = vpop.f32.mrf.mxu0
          %3589 = vmatprep.mubr.f32.mxu0 0.0
          %3590 = vmatmul.mubr.f32.gmra.mxu0 %v3416
          %v3591 = vpop.f32.mrf.mxu0
          %v3592 = vadd.f32 %v3454, %v3591
          %v3593 = vpop.f32.mrf.mxu0
          %3594 = vmatprep.mubr.f32.mxu0 0.0
          %3595 = vmatmul.mubr.f32.gmra.mxu0 %v3417
          %v3596 = vpop.f32.mrf.mxu0
          %v3597 = vadd.f32 %v3454, %v3596
          %v3598 = vpop.f32.mrf.mxu0
          %3599 = vmatprep.mubr.f32.mxu0 0.0
          %3600 = vmatmul.mubr.f32.gmra.mxu0 %v3418
          %v3601 = vpop.f32.mrf.mxu0
          %v3602 = vadd.f32 %v3454, %v3601
          %v3603 = vpop.f32.mrf.mxu0
          %3604 = vmatprep.mubr.f32.mxu0 0.0
          %3605 = vmatmul.mubr.f32.gmra.mxu0 %v3419
          %v3606 = vpop.f32.mrf.mxu0
          %v3607 = vadd.f32 %v3454, %v3606
          %v3608 = vpop.f32.mrf.mxu0
          %3609 = vmatprep.mubr.f32.mxu0 0.0
          %3610 = vmatmul.mubr.f32.gmra.mxu0 %v3420
          %v3611 = vpop.f32.mrf.mxu0
          %v3612 = vadd.f32 %v3454, %v3611
          %v3613 = vpop.f32.mrf.mxu0
          %3614 = vmatprep.mubr.f32.mxu0 0.0
          %3615 = vmatmul.mubr.f32.gmra.mxu0 %v3421
          %v3616 = vpop.f32.mrf.mxu0
          %v3617 = vadd.f32 %v3454, %v3616
          %v3618 = vpop.f32.mrf.mxu0
          %3619 = vmatprep.mubr.f32.mxu0 0.0
          %3620 = vmatmul.mubr.f32.gmra.mxu0 %v3422
          %v3621 = vpop.f32.mrf.mxu0
          %v3622 = vadd.f32 %v3454, %v3621
          %v3623 = vpop.f32.mrf.mxu0
          %3624 = vmatprep.mubr.f32.mxu0 0.0
          %3625 = vmatmul.mubr.f32.gmra.mxu0 %v3423
          %v3626 = vpop.f32.mrf.mxu0
          %v3627 = vadd.f32 %v3454, %v3626
          %v3628 = vpop.f32.mrf.mxu0
          %3629 = vmatprep.mubr.f32.mxu0 0.0
          %3630 = vmatmul.mubr.f32.gmra.mxu0 %v3424
          %v3631 = vpop.f32.mrf.mxu0
          %v3632 = vadd.f32 %v3454, %v3631
          %v3633 = vpop.f32.mrf.mxu0
          %3634 = vmatprep.mubr.f32.mxu0 0.0
          %3635 = vmatmul.mubr.f32.gmra.mxu0 %v3425
          %v3636 = vpop.f32.mrf.mxu0
          %v3637 = vadd.f32 %v3454, %v3636
          %v3638 = vpop.f32.mrf.mxu0
          %3639 = vmatprep.mubr.f32.mxu0 0.0
          %3640 = vmatmul.mubr.f32.gmra.mxu0 %v3426
          %v3641 = vpop.f32.mrf.mxu0
          %v3642 = vadd.f32 %v3454, %v3641
          %v3643 = vpop.f32.mrf.mxu0
          %3644 = vmatprep.mubr.f32.mxu0 0.0
          %3645 = vmatmul.mubr.f32.gmra.mxu0 %v3427
          %v3646 = vpop.f32.mrf.mxu0
          %v3647 = vadd.f32 %v3454, %v3646
          %v3648 = vpop.f32.mrf.mxu0
          %3649 = vmatprep.mubr.f32.mxu0 0.0
          %3650 = vmatmul.mubr.f32.gmra.mxu0 %v3428
          %v3651 = vpop.f32.mrf.mxu0
          %v3652 = vadd.f32 %v3454, %v3651
          %v3653 = vpop.f32.mrf.mxu0
          %3654 = vmatprep.mubr.f32.mxu0 0.0
          %3655 = vmatmul.mubr.f32.gmra.mxu0 %v3429
          %v3656 = vpop.f32.mrf.mxu0
          %v3657 = vadd.f32 %v3454, %v3656
          %v3658 = vpop.f32.mrf.mxu0
          %3659 = vmatprep.mubr.f32.mxu0 0.0
          %3660 = vmatmul.mubr.f32.gmra.mxu0 %v3430
          %v3661 = vpop.f32.mrf.mxu0
          %v3662 = vadd.f32 %v3454, %v3661
          %v3663 = vpop.f32.mrf.mxu0
          %3664 = vmatprep.mubr.f32.mxu0 0.0
          %3665 = vmatmul.mubr.f32.gmra.mxu0 %v3431
          %v3666 = vpop.f32.mrf.mxu0
          %v3667 = vadd.f32 %v3454, %v3666
          %v3668 = vpop.f32.mrf.mxu0
          %3669 = vmatprep.mubr.f32.mxu0 0.0
          %3670 = vmatmul.mubr.f32.gmra.mxu0 %v3432
          %v3671 = vpop.f32.mrf.mxu0
          %v3672 = vadd.f32 %v3454, %v3671
          %v3673 = vpop.f32.mrf.mxu0
          %3674 = vmatprep.mubr.f32.mxu0 0.0
          %3675 = vmatmul.mubr.f32.gmra.mxu0 %v3433
          %v3676 = vpop.f32.mrf.mxu0
          %v3677 = vadd.f32 %v3454, %v3676
          %v3678 = vpop.f32.mrf.mxu0
          %3679 = vdwg.mxu0
          %3680 = vadd.xlane.f32.xlu0 %v3522
          %v3681 = vpop.xlane.xlu0 %3680
          %3682 = vadd.xlane.f32.xlu0 %v3527
          %v3683 = vpop.xlane.xlu0 %3682
          %3684 = vadd.xlane.f32.xlu0 %v3532
          %v3685 = vpop.xlane.xlu0 %3684
          %3686 = vadd.xlane.f32.xlu0 %v3537
          %v3687 = vpop.xlane.xlu0 %3686
          %3688 = vadd.xlane.f32.xlu0 %v3542
          %v3689 = vpop.xlane.xlu0 %3688
          %3690 = vadd.xlane.f32.xlu0 %v3547
          %v3691 = vpop.xlane.xlu0 %3690
          %3692 = vadd.xlane.f32.xlu0 %v3552
          %v3693 = vpop.xlane.xlu0 %3692
          %3694 = vadd.xlane.f32.xlu0 %v3557
          %v3695 = vpop.xlane.xlu0 %3694
          %3696 = vadd.xlane.f32.xlu0 %v3562
          %v3697 = vpop.xlane.xlu0 %3696
          %3698 = vadd.xlane.f32.xlu0 %v3567
          %v3699 = vpop.xlane.xlu0 %3698
          %3700 = vadd.xlane.f32.xlu0 %v3572
          %v3701 = vpop.xlane.xlu0 %3700
          %3702 = vadd.xlane.f32.xlu0 %v3577
          %v3703 = vpop.xlane.xlu0 %3702
          %3704 = vadd.xlane.f32.xlu0 %v3582
          %v3705 = vpop.xlane.xlu0 %3704
          %3706 = vadd.xlane.f32.xlu0 %v3587
          %v3707 = vpop.xlane.xlu0 %3706
          %3708 = vadd.xlane.f32.xlu0 %v3592
          %v3709 = vpop.xlane.xlu0 %3708
          %3710 = vadd.xlane.f32.xlu0 %v3597
          %v3711 = vpop.xlane.xlu0 %3710
          %3712 = vadd.xlane.f32.xlu0 %v3602
          %v3713 = vpop.xlane.xlu0 %3712
          %3714 = vadd.xlane.f32.xlu0 %v3607
          %v3715 = vpop.xlane.xlu0 %3714
          %3716 = vadd.xlane.f32.xlu0 %v3612
          %v3717 = vpop.xlane.xlu0 %3716
          %3718 = vadd.xlane.f32.xlu0 %v3617
          %v3719 = vpop.xlane.xlu0 %3718
          %3720 = vadd.xlane.f32.xlu0 %v3622
          %v3721 = vpop.xlane.xlu0 %3720
          %3722 = vadd.xlane.f32.xlu0 %v3627
          %v3723 = vpop.xlane.xlu0 %3722
          %3724 = vadd.xlane.f32.xlu0 %v3632
          %v3725 = vpop.xlane.xlu0 %3724
          %3726 = vadd.xlane.f32.xlu0 %v3637
          %v3727 = vpop.xlane.xlu0 %3726
          %3728 = vadd.xlane.f32.xlu0 %v3642
          %v3729 = vpop.xlane.xlu0 %3728
          %3730 = vadd.xlane.f32.xlu0 %v3647
          %v3731 = vpop.xlane.xlu0 %3730
          %3732 = vadd.xlane.f32.xlu0 %v3652
          %v3733 = vpop.xlane.xlu0 %3732
          %3734 = vadd.xlane.f32.xlu0 %v3657
          %v3735 = vpop.xlane.xlu0 %3734
          %3736 = vadd.xlane.f32.xlu0 %v3662
          %v3737 = vpop.xlane.xlu0 %3736
          %3738 = vadd.xlane.f32.xlu0 %v3667
          %v3739 = vpop.xlane.xlu0 %3738
          %3740 = vadd.xlane.f32.xlu0 %v3672
          %v3741 = vpop.xlane.xlu0 %3740
          %3742 = vadd.xlane.f32.xlu0 %v3677
          %v3743 = vpop.xlane.xlu0 %3742
          %v3744 = vmul.f32 %v3681, 0.01
          %v3745 = vmul.f32 %v3683, 0.01
          %v3746 = vmul.f32 %v3685, 0.01
          %v3747 = vmul.f32 %v3687, 0.01
          %v3748 = vmul.f32 %v3689, 0.01
          %v3749 = vmul.f32 %v3691, 0.01
          %v3750 = vmul.f32 %v3693, 0.01
          %v3751 = vmul.f32 %v3695, 0.01
          %v3752 = vmul.f32 %v3697, 0.01
          %v3753 = vmul.f32 %v3699, 0.01
          %v3754 = vmul.f32 %v3701, 0.01
          %v3755 = vmul.f32 %v3703, 0.01
          %v3756 = vmul.f32 %v3705, 0.01
          %v3757 = vmul.f32 %v3707, 0.01
          %v3758 = vmul.f32 %v3709, 0.01
          %v3759 = vmul.f32 %v3711, 0.01
          %v3760 = vmul.f32 %v3713, 0.01
          %v3761 = vmul.f32 %v3715, 0.01
          %v3762 = vmul.f32 %v3717, 0.01
          %v3763 = vmul.f32 %v3719, 0.01
          %v3764 = vmul.f32 %v3721, 0.01
          %v3765 = vmul.f32 %v3723, 0.01
          %v3766 = vmul.f32 %v3725, 0.01
          %v3767 = vmul.f32 %v3727, 0.01
          %v3768 = vmul.f32 %v3729, 0.01
          %v3769 = vmul.f32 %v3731, 0.01
          %v3770 = vmul.f32 %v3733, 0.01
          %v3771 = vmul.f32 %v3735, 0.01
          %v3772 = vmul.f32 %v3737, 0.01
          %v3773 = vmul.f32 %v3739, 0.01
          %v3774 = vmul.f32 %v3741, 0.01
          %v3775 = vmul.f32 %v3743, 0.01
          %v3776 = vsub.f32 %v3522, %v3744
          %v3777 = vsub.f32 %v3527, %v3745
          %v3778 = vsub.f32 %v3532, %v3746
          %v3779 = vsub.f32 %v3537, %v3747
          %v3780 = vsub.f32 %v3542, %v3748
          %v3781 = vsub.f32 %v3547, %v3749
          %v3782 = vsub.f32 %v3552, %v3750
          %v3783 = vsub.f32 %v3557, %v3751
          %v3784 = vsub.f32 %v3562, %v3752
          %v3785 = vsub.f32 %v3567, %v3753
          %v3786 = vsub.f32 %v3572, %v3754
          %v3787 = vsub.f32 %v3577, %v3755
          %v3788 = vsub.f32 %v3582, %v3756
          %v3789 = vsub.f32 %v3587, %v3757
          %v3790 = vsub.f32 %v3592, %v3758
          %v3791 = vsub.f32 %v3597, %v3759
          %v3792 = vsub.f32 %v3602, %v3760
          %v3793 = vsub.f32 %v3607, %v3761
          %v3794 = vsub.f32 %v3612, %v3762
          %v3795 = vsub.f32 %v3617, %v3763
          %v3796 = vsub.f32 %v3622, %v3764
          %v3797 = vsub.f32 %v3627, %v3765
          %v3798 = vsub.f32 %v3632, %v3766
          %v3799 = vsub.f32 %v3637, %v3767
          %v3800 = vsub.f32 %v3642, %v3768
          %v3801 = vsub.f32 %v3647, %v3769
          %v3802 = vsub.f32 %v3652, %v3770
          %v3803 = vsub.f32 %v3657, %v3771
          %v3804 = vsub.f32 %v3662, %v3772
          %v3805 = vsub.f32 %v3667, %v3773
          %v3806 = vsub.f32 %v3672, %v3774
          %v3807 = vsub.f32 %v3677, %v3775
          %v3808 = vmul.f32 %v3776, %v248
          %v3809 = vmul.f32 %v3777, %v248
          %v3810 = vmul.f32 %v3778, %v248
          %v3811 = vmul.f32 %v3779, %v248
          %v3812 = vmul.f32 %v3780, %v248
          %v3813 = vmul.f32 %v3781, %v248
          %v3814 = vmul.f32 %v3782, %v248
          %v3815 = vmul.f32 %v3783, %v248
          %v3816 = vmul.f32 %v3784, %v248
          %v3817 = vmul.f32 %v3785, %v248
          %v3818 = vmul.f32 %v3786, %v248
          %v3819 = vmul.f32 %v3787, %v248
          %v3820 = vmul.f32 %v3788, %v248
          %v3821 = vmul.f32 %v3789, %v248
          %v3822 = vmul.f32 %v3790, %v248
          %v3823 = vmul.f32 %v3791, %v248
          %v3824 = vmul.f32 %v3792, %v248
          %v3825 = vmul.f32 %v3793, %v248
          %v3826 = vmul.f32 %v3794, %v248
          %v3827 = vmul.f32 %v3795, %v248
          %v3828 = vmul.f32 %v3796, %v248
          %v3829 = vmul.f32 %v3797, %v248
          %v3830 = vmul.f32 %v3798, %v248
          %v3831 = vmul.f32 %v3799, %v248
          %v3832 = vmul.f32 %v3800, %v248
          %v3833 = vmul.f32 %v3801, %v248
          %v3834 = vmul.f32 %v3802, %v248
          %v3835 = vmul.f32 %v3803, %v248
          %v3836 = vmul.f32 %v3804, %v248
          %v3837 = vmul.f32 %v3805, %v248
          %v3838 = vmul.f32 %v3806, %v248
          %v3839 = vmul.f32 %v3807, %v248
          %v3840 = vmul.f32 %v3808, %v3808
          %v3841 = vmul.f32 %v3809, %v3809
          %v3842 = vmul.f32 %v3810, %v3810
          %v3843 = vmul.f32 %v3811, %v3811
          %v3844 = vmul.f32 %v3812, %v3812
          %v3845 = vmul.f32 %v3813, %v3813
          %v3846 = vmul.f32 %v3814, %v3814
          %v3847 = vmul.f32 %v3815, %v3815
          %v3848 = vmul.f32 %v3816, %v3816
          %v3849 = vmul.f32 %v3817, %v3817
          %v3850 = vmul.f32 %v3818, %v3818
          %v3851 = vmul.f32 %v3819, %v3819
          %v3852 = vmul.f32 %v3820, %v3820
          %v3853 = vmul.f32 %v3821, %v3821
          %v3854 = vmul.f32 %v3822, %v3822
          %v3855 = vmul.f32 %v3823, %v3823
          %v3856 = vmul.f32 %v3824, %v3824
          %v3857 = vmul.f32 %v3825, %v3825
          %v3858 = vmul.f32 %v3826, %v3826
          %v3859 = vmul.f32 %v3827, %v3827
          %v3860 = vmul.f32 %v3828, %v3828
          %v3861 = vmul.f32 %v3829, %v3829
          %v3862 = vmul.f32 %v3830, %v3830
          %v3863 = vmul.f32 %v3831, %v3831
          %v3864 = vmul.f32 %v3832, %v3832
          %v3865 = vmul.f32 %v3833, %v3833
          %v3866 = vmul.f32 %v3834, %v3834
          %v3867 = vmul.f32 %v3835, %v3835
          %v3868 = vmul.f32 %v3836, %v3836
          %v3869 = vmul.f32 %v3837, %v3837
          %v3870 = vmul.f32 %v3838, %v3838
          %v3871 = vmul.f32 %v3839, %v3839
          %3872 = vadd.xlane.f32.xlu0 %v3840
          %v3873 = vpop.xlane.xlu0 %3872
          %3874 = vadd.xlane.f32.xlu0 %v3841
          %v3875 = vpop.xlane.xlu0 %3874
          %3876 = vadd.xlane.f32.xlu0 %v3842
          %v3877 = vpop.xlane.xlu0 %3876
          %3878 = vadd.xlane.f32.xlu0 %v3843
          %v3879 = vpop.xlane.xlu0 %3878
          %3880 = vadd.xlane.f32.xlu0 %v3844
          %v3881 = vpop.xlane.xlu0 %3880
          %3882 = vadd.xlane.f32.xlu0 %v3845
          %v3883 = vpop.xlane.xlu0 %3882
          %3884 = vadd.xlane.f32.xlu0 %v3846
          %v3885 = vpop.xlane.xlu0 %3884
          %3886 = vadd.xlane.f32.xlu0 %v3847
          %v3887 = vpop.xlane.xlu0 %3886
          %3888 = vadd.xlane.f32.xlu0 %v3848
          %v3889 = vpop.xlane.xlu0 %3888
          %3890 = vadd.xlane.f32.xlu0 %v3849
          %v3891 = vpop.xlane.xlu0 %3890
          %3892 = vadd.xlane.f32.xlu0 %v3850
          %v3893 = vpop.xlane.xlu0 %3892
          %3894 = vadd.xlane.f32.xlu0 %v3851
          %v3895 = vpop.xlane.xlu0 %3894
          %3896 = vadd.xlane.f32.xlu0 %v3852
          %v3897 = vpop.xlane.xlu0 %3896
          %3898 = vadd.xlane.f32.xlu0 %v3853
          %v3899 = vpop.xlane.xlu0 %3898
          %3900 = vadd.xlane.f32.xlu0 %v3854
          %v3901 = vpop.xlane.xlu0 %3900
          %3902 = vadd.xlane.f32.xlu0 %v3855
          %v3903 = vpop.xlane.xlu0 %3902
          %3904 = vadd.xlane.f32.xlu0 %v3856
          %v3905 = vpop.xlane.xlu0 %3904
          %3906 = vadd.xlane.f32.xlu0 %v3857
          %v3907 = vpop.xlane.xlu0 %3906
          %3908 = vadd.xlane.f32.xlu0 %v3858
          %v3909 = vpop.xlane.xlu0 %3908
          %3910 = vadd.xlane.f32.xlu0 %v3859
          %v3911 = vpop.xlane.xlu0 %3910
          %3912 = vadd.xlane.f32.xlu0 %v3860
          %v3913 = vpop.xlane.xlu0 %3912
          %3914 = vadd.xlane.f32.xlu0 %v3861
          %v3915 = vpop.xlane.xlu0 %3914
          %3916 = vadd.xlane.f32.xlu0 %v3862
          %v3917 = vpop.xlane.xlu0 %3916
          %3918 = vadd.xlane.f32.xlu0 %v3863
          %v3919 = vpop.xlane.xlu0 %3918
          %3920 = vadd.xlane.f32.xlu0 %v3864
          %v3921 = vpop.xlane.xlu0 %3920
          %3922 = vadd.xlane.f32.xlu0 %v3865
          %v3923 = vpop.xlane.xlu0 %3922
          %3924 = vadd.xlane.f32.xlu0 %v3866
          %v3925 = vpop.xlane.xlu0 %3924
          %3926 = vadd.xlane.f32.xlu0 %v3867
          %v3927 = vpop.xlane.xlu0 %3926
          %3928 = vadd.xlane.f32.xlu0 %v3868
          %v3929 = vpop.xlane.xlu0 %3928
          %3930 = vadd.xlane.f32.xlu0 %v3869
          %v3931 = vpop.xlane.xlu0 %3930
          %3932 = vadd.xlane.f32.xlu0 %v3870
          %v3933 = vpop.xlane.xlu0 %3932
          %3934 = vadd.xlane.f32.xlu0 %v3871
          %v3935 = vpop.xlane.xlu0 %3934
          %v3936 = vmul.f32 %v3873, 0.01
          %v3937 = vmul.f32 %v3875, 0.01
          %v3938 = vmul.f32 %v3877, 0.01
          %v3939 = vmul.f32 %v3879, 0.01
          %v3940 = vmul.f32 %v3881, 0.01
          %v3941 = vmul.f32 %v3883, 0.01
          %v3942 = vmul.f32 %v3885, 0.01
          %v3943 = vmul.f32 %v3887, 0.01
          %v3944 = vmul.f32 %v3889, 0.01
          %v3945 = vmul.f32 %v3891, 0.01
          %v3946 = vmul.f32 %v3893, 0.01
          %v3947 = vmul.f32 %v3895, 0.01
          %v3948 = vmul.f32 %v3897, 0.01
          %v3949 = vmul.f32 %v3899, 0.01
          %v3950 = vmul.f32 %v3901, 0.01
          %v3951 = vmul.f32 %v3903, 0.01
          %v3952 = vmul.f32 %v3905, 0.01
          %v3953 = vmul.f32 %v3907, 0.01
          %v3954 = vmul.f32 %v3909, 0.01
          %v3955 = vmul.f32 %v3911, 0.01
          %v3956 = vmul.f32 %v3913, 0.01
          %v3957 = vmul.f32 %v3915, 0.01
          %v3958 = vmul.f32 %v3917, 0.01
          %v3959 = vmul.f32 %v3919, 0.01
          %v3960 = vmul.f32 %v3921, 0.01
          %v3961 = vmul.f32 %v3923, 0.01
          %v3962 = vmul.f32 %v3925, 0.01
          %v3963 = vmul.f32 %v3927, 0.01
          %v3964 = vmul.f32 %v3929, 0.01
          %v3965 = vmul.f32 %v3931, 0.01
          %v3966 = vmul.f32 %v3933, 0.01
          %v3967 = vmul.f32 %v3935, 0.01
          %v3968 = vadd.f32 %v3936, 1e-05
          %v3969 = vadd.f32 %v3937, 1e-05
          %v3970 = vadd.f32 %v3938, 1e-05
          %v3971 = vadd.f32 %v3939, 1e-05
          %v3972 = vadd.f32 %v3940, 1e-05
          %v3973 = vadd.f32 %v3941, 1e-05
          %v3974 = vadd.f32 %v3942, 1e-05
          %v3975 = vadd.f32 %v3943, 1e-05
          %v3976 = vadd.f32 %v3944, 1e-05
          %v3977 = vadd.f32 %v3945, 1e-05
          %v3978 = vadd.f32 %v3946, 1e-05
          %v3979 = vadd.f32 %v3947, 1e-05
          %v3980 = vadd.f32 %v3948, 1e-05
          %v3981 = vadd.f32 %v3949, 1e-05
          %v3982 = vadd.f32 %v3950, 1e-05
          %v3983 = vadd.f32 %v3951, 1e-05
          %v3984 = vadd.f32 %v3952, 1e-05
          %v3985 = vadd.f32 %v3953, 1e-05
          %v3986 = vadd.f32 %v3954, 1e-05
          %v3987 = vadd.f32 %v3955, 1e-05
          %v3988 = vadd.f32 %v3956, 1e-05
          %v3989 = vadd.f32 %v3957, 1e-05
          %v3990 = vadd.f32 %v3958, 1e-05
          %v3991 = vadd.f32 %v3959, 1e-05
          %v3992 = vadd.f32 %v3960, 1e-05
          %v3993 = vadd.f32 %v3961, 1e-05
          %v3994 = vadd.f32 %v3962, 1e-05
          %v3995 = vadd.f32 %v3963, 1e-05
          %v3996 = vadd.f32 %v3964, 1e-05
          %v3997 = vadd.f32 %v3965, 1e-05
          %v3998 = vadd.f32 %v3966, 1e-05
          %v3999 = vadd.f32 %v3967, 1e-05
          %v4000 = vrsqrt.pop %v3968
          %v4001 = vrsqrt.pop %v3969
          %v4002 = vrsqrt.pop %v3970
          %v4003 = vrsqrt.pop %v3971
          %v4004 = vrsqrt.pop %v3972
          %v4005 = vrsqrt.pop %v3973
          %v4006 = vrsqrt.pop %v3974
          %v4007 = vrsqrt.pop %v3975
          %v4008 = vrsqrt.pop %v3976
          %v4009 = vrsqrt.pop %v3977
          %v4010 = vrsqrt.pop %v3978
          %v4011 = vrsqrt.pop %v3979
          %v4012 = vrsqrt.pop %v3980
          %v4013 = vrsqrt.pop %v3981
          %v4014 = vrsqrt.pop %v3982
          %v4015 = vrsqrt.pop %v3983
          %v4016 = vrsqrt.pop %v3984
          %v4017 = vrsqrt.pop %v3985
          %v4018 = vrsqrt.pop %v3986
          %v4019 = vrsqrt.pop %v3987
          %v4020 = vrsqrt.pop %v3988
          %v4021 = vrsqrt.pop %v3989
          %v4022 = vrsqrt.pop %v3990
          %v4023 = vrsqrt.pop %v3991
          %v4024 = vrsqrt.pop %v3992
          %v4025 = vrsqrt.pop %v3993
          %v4026 = vrsqrt.pop %v3994
          %v4027 = vrsqrt.pop %v3995
          %v4028 = vrsqrt.pop %v3996
          %v4029 = vrsqrt.pop %v3997
          %v4030 = vrsqrt.pop %v3998
          %v4031 = vrsqrt.pop %v3999
          %v4032 = vmul.f32 %v3776, %v4000
          %v4033 = vmul.f32 %v3777, %v4001
          %v4034 = vmul.f32 %v3778, %v4002
          %v4035 = vmul.f32 %v3779, %v4003
          %v4036 = vmul.f32 %v3780, %v4004
          %v4037 = vmul.f32 %v3781, %v4005
          %v4038 = vmul.f32 %v3782, %v4006
          %v4039 = vmul.f32 %v3783, %v4007
          %v4040 = vmul.f32 %v3784, %v4008
          %v4041 = vmul.f32 %v3785, %v4009
          %v4042 = vmul.f32 %v3786, %v4010
          %v4043 = vmul.f32 %v3787, %v4011
          %v4044 = vmul.f32 %v3788, %v4012
          %v4045 = vmul.f32 %v3789, %v4013
          %v4046 = vmul.f32 %v3790, %v4014
          %v4047 = vmul.f32 %v3791, %v4015
          %v4048 = vmul.f32 %v3792, %v4016
          %v4049 = vmul.f32 %v3793, %v4017
          %v4050 = vmul.f32 %v3794, %v4018
          %v4051 = vmul.f32 %v3795, %v4019
          %v4052 = vmul.f32 %v3796, %v4020
          %v4053 = vmul.f32 %v3797, %v4021
          %v4054 = vmul.f32 %v3798, %v4022
          %v4055 = vmul.f32 %v3799, %v4023
          %v4056 = vmul.f32 %v3800, %v4024
          %v4057 = vmul.f32 %v3801, %v4025
          %v4058 = vmul.f32 %v3802, %v4026
          %v4059 = vmul.f32 %v3803, %v4027
          %v4060 = vmul.f32 %v3804, %v4028
          %v4061 = vmul.f32 %v3805, %v4029
          %v4062 = vmul.f32 %v3806, %v4030
          %v4063 = vmul.f32 %v3807, %v4031
          %v4064 = vlaneseq
          %v4065 = vshrl.u32 %v4064, 7
          %v4066 = vsub.s32 2, %v4065
          %v4067 = vrot.slane %v2582, %v4066
          %v4068 = vmul.f32 %v4032, %v4067
          %v4069 = vmul.f32 %v4033, %v4067
          %v4070 = vmul.f32 %v4034, %v4067
          %v4071 = vmul.f32 %v4035, %v4067
          %v4072 = vmul.f32 %v4036, %v4067
          %v4073 = vmul.f32 %v4037, %v4067
          %v4074 = vmul.f32 %v4038, %v4067
          %v4075 = vmul.f32 %v4039, %v4067
          %v4076 = vmul.f32 %v4040, %v4067
          %v4077 = vmul.f32 %v4041, %v4067
          %v4078 = vmul.f32 %v4042, %v4067
          %v4079 = vmul.f32 %v4043, %v4067
          %v4080 = vmul.f32 %v4044, %v4067
          %v4081 = vmul.f32 %v4045, %v4067
          %v4082 = vmul.f32 %v4046, %v4067
          %v4083 = vmul.f32 %v4047, %v4067
          %v4084 = vmul.f32 %v4048, %v4067
          %v4085 = vmul.f32 %v4049, %v4067
          %v4086 = vmul.f32 %v4050, %v4067
          %v4087 = vmul.f32 %v4051, %v4067
          %v4088 = vmul.f32 %v4052, %v4067
          %v4089 = vmul.f32 %v4053, %v4067
          %v4090 = vmul.f32 %v4054, %v4067
          %v4091 = vmul.f32 %v4055, %v4067
          %v4092 = vmul.f32 %v4056, %v4067
          %v4093 = vmul.f32 %v4057, %v4067
          %v4094 = vmul.f32 %v4058, %v4067
          %v4095 = vmul.f32 %v4059, %v4067
          %v4096 = vmul.f32 %v4060, %v4067
          %v4097 = vmul.f32 %v4061, %v4067
          %v4098 = vmul.f32 %v4062, %v4067
          %v4099 = vmul.f32 %v4063, %v4067
          %v4100 = vlaneseq
          %v4101 = vshrl.u32 %v4100, 7
          %v4102 = vsub.s32 3, %v4101
          %v4103 = vrot.slane %v2582, %v4102
          %v4104 = vadd.f32 %v4068, %v4103
          %v4105 = vadd.f32 %v4069, %v4103
          %v4106 = vadd.f32 %v4070, %v4103
          %v4107 = vadd.f32 %v4071, %v4103
          %v4108 = vadd.f32 %v4072, %v4103
          %v4109 = vadd.f32 %v4073, %v4103
          %v4110 = vadd.f32 %v4074, %v4103
          %v4111 = vadd.f32 %v4075, %v4103
          %v4112 = vadd.f32 %v4076, %v4103
          %v4113 = vadd.f32 %v4077, %v4103
          %v4114 = vadd.f32 %v4078, %v4103
          %v4115 = vadd.f32 %v4079, %v4103
          %v4116 = vadd.f32 %v4080, %v4103
          %v4117 = vadd.f32 %v4081, %v4103
          %v4118 = vadd.f32 %v4082, %v4103
          %v4119 = vadd.f32 %v4083, %v4103
          %v4120 = vadd.f32 %v4084, %v4103
          %v4121 = vadd.f32 %v4085, %v4103
          %v4122 = vadd.f32 %v4086, %v4103
          %v4123 = vadd.f32 %v4087, %v4103
          %v4124 = vadd.f32 %v4088, %v4103
          %v4125 = vadd.f32 %v4089, %v4103
          %v4126 = vadd.f32 %v4090, %v4103
          %v4127 = vadd.f32 %v4091, %v4103
          %v4128 = vadd.f32 %v4092, %v4103
          %v4129 = vadd.f32 %v4093, %v4103
          %v4130 = vadd.f32 %v4094, %v4103
          %v4131 = vadd.f32 %v4095, %v4103
          %v4132 = vadd.f32 %v4096, %v4103
          %v4133 = vadd.f32 %v4097, %v4103
          %v4134 = vadd.f32 %v4098, %v4103
          %v4135 = vadd.f32 %v4099, %v4103
          %v4136 = vmax.f32 %v4104, 0.0
          %v4137 = vmax.f32 %v4105, 0.0
          %v4138 = vmax.f32 %v4106, 0.0
          %v4139 = vmax.f32 %v4107, 0.0
          %v4140 = vmax.f32 %v4108, 0.0
          %v4141 = vmax.f32 %v4109, 0.0
          %v4142 = vmax.f32 %v4110, 0.0
          %v4143 = vmax.f32 %v4111, 0.0
          %v4144 = vmax.f32 %v4112, 0.0
          %v4145 = vmax.f32 %v4113, 0.0
          %v4146 = vmax.f32 %v4114, 0.0
          %v4147 = vmax.f32 %v4115, 0.0
          %v4148 = vmax.f32 %v4116, 0.0
          %v4149 = vmax.f32 %v4117, 0.0
          %v4150 = vmax.f32 %v4118, 0.0
          %v4151 = vmax.f32 %v4119, 0.0
          %v4152 = vmax.f32 %v4120, 0.0
          %v4153 = vmax.f32 %v4121, 0.0
          %v4154 = vmax.f32 %v4122, 0.0
          %v4155 = vmax.f32 %v4123, 0.0
          %v4156 = vmax.f32 %v4124, 0.0
          %v4157 = vmax.f32 %v4125, 0.0
          %v4158 = vmax.f32 %v4126, 0.0
          %v4159 = vmax.f32 %v4127, 0.0
          %v4160 = vmax.f32 %v4128, 0.0
          %v4161 = vmax.f32 %v4129, 0.0
          %v4162 = vmax.f32 %v4130, 0.0
          %v4163 = vmax.f32 %v4131, 0.0
          %v4164 = vmax.f32 %v4132, 0.0
          %v4165 = vmax.f32 %v4133, 0.0
          %v4166 = vmax.f32 %v4134, 0.0
          %v4167 = vmax.f32 %v4135, 0.0
          %s4168 = scalar_lea.vmem %s2, 896
          %v4169 = vld [vmem:[%s4168] sm:$0xff]
          %v4170 = vld [vmem:[%s4168 + $0x8] sm:$0xff]
          %v4171 = vld [vmem:[%s4168 + $0x10] sm:$0xff]
          %v4172 = vld [vmem:[%s4168 + $0x18] sm:$0xff]
          %v4173 = vld [vmem:[%s4168 + $0x20] sm:$0xff]
          %v4174 = vld [vmem:[%s4168 + $0x28] sm:$0xff]
          %v4175 = vld [vmem:[%s4168 + $0x30] sm:$0xff]
          %v4176 = vld [vmem:[%s4168 + $0x38] sm:$0xff]
          %v4177 = vld [vmem:[%s4168 + $0x40] sm:$0xff]
          %v4178 = vld [vmem:[%s4168 + $0x48] sm:$0xff]
          %v4179 = vld [vmem:[%s4168 + $0x50] sm:$0xff]
          %v4180 = vld [vmem:[%s4168 + $0x58] sm:$0xff]
          %v4181 = vld [vmem:[%s4168 + $0x60] sm:$0xff]
          %v4182 = vld [vmem:[%s4168 + $0x68] sm:$0xff]
          %v4183 = vld [vmem:[%s4168 + $0x70] sm:$0xff]
          %v4184 = vld [vmem:[%s4168 + $0x78] sm:$0xff]
          %v4185 = vlaneseq
          %v4186 = vshrl.u32 %v4185, 7
          %v4187 = vsub.s32 4, %v4186
          %v4188 = vrot.slane %v2582, %v4187
          %4189 = vmatprep.subr.mxu0 0.0
          %4190 = vmatpush1.msra.mxu0 %v4184
          %4191 = vmatprep.subr.mxu0 0.0
          %4192 = vmatpush1.msra.mxu0 %v4183
          %4193 = vmatprep.subr.mxu0 0.0
          %4194 = vmatpush1.msra.mxu0 %v4182
          %4195 = vmatprep.subr.mxu0 0.0
          %4196 = vmatpush1.msra.mxu0 %v4181
          %4197 = vmatprep.subr.mxu0 0.0
          %4198 = vmatpush1.msra.mxu0 %v4180
          %4199 = vmatprep.subr.mxu0 0.0
          %4200 = vmatpush1.msra.mxu0 %v4179
          %4201 = vmatprep.subr.mxu0 0.0
          %4202 = vmatpush1.msra.mxu0 %v4178
          %4203 = vmatprep.subr.mxu0 0.0
          %4204 = vmatpush1.msra.mxu0 %v4177
          %4205 = vmatprep.subr.mxu0 0.0
          %4206 = vmatpush1.msra.mxu0 %v4176
          %4207 = vmatprep.subr.mxu0 0.0
          %4208 = vmatpush1.msra.mxu0 %v4175
          %4209 = vmatprep.subr.mxu0 0.0
          %4210 = vmatpush1.msra.mxu0 %v4174
          %4211 = vmatprep.subr.mxu0 0.0
          %4212 = vmatpush1.msra.mxu0 %v4173
          %4213 = vmatprep.subr.mxu0 0.0
          %4214 = vmatpush1.msra.mxu0 %v4172
          %4215 = vmatprep.subr.mxu0 0.0
          %4216 = vmatpush1.msra.mxu0 %v4171
          %4217 = vmatprep.subr.mxu0 0.0
          %4218 = vmatpush1.msra.mxu0 %v4170
          %4219 = vmatprep.subr.mxu0 0.0
          %4220 = vmatpush1.msra.mxu0 %v4169
          %4221 = vmatprep.subr.mxu0 0.0
          %4222 = vmatpush2.msra.mxu0 0.0
          %4223 = vmatprep.subr.mxu0 0.0
          %4224 = vmatpush2.msra.mxu0 0.0
          %4225 = vmatprep.subr.mxu0 0.0
          %4226 = vmatpush2.msra.mxu0 0.0
          %4227 = vmatprep.subr.mxu0 0.0
          %4228 = vmatpush2.msra.mxu0 0.0
          %4229 = vmatprep.subr.mxu0 0.0
          %4230 = vmatpush2.msra.mxu0 0.0
          %4231 = vmatprep.subr.mxu0 0.0
          %4232 = vmatpush2.msra.mxu0 0.0
          %4233 = vmatprep.subr.mxu0 0.0
          %4234 = vmatpush2.msra.mxu0 0.0
          %4235 = vmatprep.subr.mxu0 0.0
          %4236 = vmatpush2.msra.mxu0 0.0
          %4237 = vmatprep.subr.mxu0 0.0
          %4238 = vmatpush2.msra.mxu0 0.0
          %4239 = vmatprep.subr.mxu0 0.0
          %4240 = vmatpush2.msra.mxu0 0.0
          %4241 = vmatprep.subr.mxu0 0.0
          %4242 = vmatpush2.msra.mxu0 0.0
          %4243 = vmatprep.subr.mxu0 0.0
          %4244 = vmatpush2.msra.mxu0 0.0
          %4245 = vmatprep.subr.mxu0 0.0
          %4246 = vmatpush2.msra.mxu0 0.0
          %4247 = vmatprep.subr.mxu0 0.0
          %4248 = vmatpush2.msra.mxu0 0.0
          %4249 = vmatprep.subr.mxu0 0.0
          %4250 = vmatpush2.msra.mxu0 0.0
          %4251 = vmatprep.subr.mxu0 0.0
          %4252 = vmatpush2.msra.mxu0 0.0
          %4253 = vmatprep.mubr.f32.mxu0 0.0
          %4254 = vmatmul.mubr.f32.gmra.mxu0 %v4136
          %v4255 = vpop.f32.mrf.mxu0
          %v4256 = vadd.f32 %v4188, %v4255
          %v4257 = vpop.f32.mrf.mxu0
          %4258 = vmatprep.mubr.f32.mxu0 0.0
          %4259 = vmatmul.mubr.f32.gmra.mxu0 %v4137
          %v4260 = vpop.f32.mrf.mxu0
          %v4261 = vadd.f32 %v4188, %v4260
          %v4262 = vpop.f32.mrf.mxu0
          %4263 = vmatprep.mubr.f32.mxu0 0.0
          %4264 = vmatmul.mubr.f32.gmra.mxu0 %v4138
          %v4265 = vpop.f32.mrf.mxu0
          %v4266 = vadd.f32 %v4188, %v4265
          %v4267 = vpop.f32.mrf.mxu0
          %4268 = vmatprep.mubr.f32.mxu0 0.0
          %4269 = vmatmul.mubr.f32.gmra.mxu0 %v4139
          %v4270 = vpop.f32.mrf.mxu0
          %v4271 = vadd.f32 %v4188, %v4270
          %v4272 = vpop.f32.mrf.mxu0
          %4273 = vmatprep.mubr.f32.mxu0 0.0
          %4274 = vmatmul.mubr.f32.gmra.mxu0 %v4140
          %v4275 = vpop.f32.mrf.mxu0
          %v4276 = vadd.f32 %v4188, %v4275
          %v4277 = vpop.f32.mrf.mxu0
          %4278 = vmatprep.mubr.f32.mxu0 0.0
          %4279 = vmatmul.mubr.f32.gmra.mxu0 %v4141
          %v4280 = vpop.f32.mrf.mxu0
          %v4281 = vadd.f32 %v4188, %v4280
          %v4282 = vpop.f32.mrf.mxu0
          %4283 = vmatprep.mubr.f32.mxu0 0.0
          %4284 = vmatmul.mubr.f32.gmra.mxu0 %v4142
          %v4285 = vpop.f32.mrf.mxu0
          %v4286 = vadd.f32 %v4188, %v4285
          %v4287 = vpop.f32.mrf.mxu0
          %4288 = vmatprep.mubr.f32.mxu0 0.0
          %4289 = vmatmul.mubr.f32.gmra.mxu0 %v4143
          %v4290 = vpop.f32.mrf.mxu0
          %v4291 = vadd.f32 %v4188, %v4290
          %v4292 = vpop.f32.mrf.mxu0
          %4293 = vmatprep.mubr.f32.mxu0 0.0
          %4294 = vmatmul.mubr.f32.gmra.mxu0 %v4144
          %v4295 = vpop.f32.mrf.mxu0
          %v4296 = vadd.f32 %v4188, %v4295
          %v4297 = vpop.f32.mrf.mxu0
          %4298 = vmatprep.mubr.f32.mxu0 0.0
          %4299 = vmatmul.mubr.f32.gmra.mxu0 %v4145
          %v4300 = vpop.f32.mrf.mxu0
          %v4301 = vadd.f32 %v4188, %v4300
          %v4302 = vpop.f32.mrf.mxu0
          %4303 = vmatprep.mubr.f32.mxu0 0.0
          %4304 = vmatmul.mubr.f32.gmra.mxu0 %v4146
          %v4305 = vpop.f32.mrf.mxu0
          %v4306 = vadd.f32 %v4188, %v4305
          %v4307 = vpop.f32.mrf.mxu0
          %4308 = vmatprep.mubr.f32.mxu0 0.0
          %4309 = vmatmul.mubr.f32.gmra.mxu0 %v4147
          %v4310 = vpop.f32.mrf.mxu0
          %v4311 = vadd.f32 %v4188, %v4310
          %v4312 = vpop.f32.mrf.mxu0
          %4313 = vmatprep.mubr.f32.mxu0 0.0
          %4314 = vmatmul.mubr.f32.gmra.mxu0 %v4148
          %v4315 = vpop.f32.mrf.mxu0
          %v4316 = vadd.f32 %v4188, %v4315
          %v4317 = vpop.f32.mrf.mxu0
          %4318 = vmatprep.mubr.f32.mxu0 0.0
          %4319 = vmatmul.mubr.f32.gmra.mxu0 %v4149
          %v4320 = vpop.f32.mrf.mxu0
          %v4321 = vadd.f32 %v4188, %v4320
          %v4322 = vpop.f32.mrf.mxu0
          %4323 = vmatprep.mubr.f32.mxu0 0.0
          %4324 = vmatmul.mubr.f32.gmra.mxu0 %v4150
          %v4325 = vpop.f32.mrf.mxu0
          %v4326 = vadd.f32 %v4188, %v4325
          %v4327 = vpop.f32.mrf.mxu0
          %4328 = vmatprep.mubr.f32.mxu0 0.0
          %4329 = vmatmul.mubr.f32.gmra.mxu0 %v4151
          %v4330 = vpop.f32.mrf.mxu0
          %v4331 = vadd.f32 %v4188, %v4330
          %v4332 = vpop.f32.mrf.mxu0
          %4333 = vmatprep.mubr.f32.mxu0 0.0
          %4334 = vmatmul.mubr.f32.gmra.mxu0 %v4152
          %v4335 = vpop.f32.mrf.mxu0
          %v4336 = vadd.f32 %v4188, %v4335
          %v4337 = vpop.f32.mrf.mxu0
          %4338 = vmatprep.mubr.f32.mxu0 0.0
          %4339 = vmatmul.mubr.f32.gmra.mxu0 %v4153
          %v4340 = vpop.f32.mrf.mxu0
          %v4341 = vadd.f32 %v4188, %v4340
          %v4342 = vpop.f32.mrf.mxu0
          %4343 = vmatprep.mubr.f32.mxu0 0.0
          %4344 = vmatmul.mubr.f32.gmra.mxu0 %v4154
          %v4345 = vpop.f32.mrf.mxu0
          %v4346 = vadd.f32 %v4188, %v4345
          %v4347 = vpop.f32.mrf.mxu0
          %4348 = vmatprep.mubr.f32.mxu0 0.0
          %4349 = vmatmul.mubr.f32.gmra.mxu0 %v4155
          %v4350 = vpop.f32.mrf.mxu0
          %v4351 = vadd.f32 %v4188, %v4350
          %v4352 = vpop.f32.mrf.mxu0
          %4353 = vmatprep.mubr.f32.mxu0 0.0
          %4354 = vmatmul.mubr.f32.gmra.mxu0 %v4156
          %v4355 = vpop.f32.mrf.mxu0
          %v4356 = vadd.f32 %v4188, %v4355
          %v4357 = vpop.f32.mrf.mxu0
          %4358 = vmatprep.mubr.f32.mxu0 0.0
          %4359 = vmatmul.mubr.f32.gmra.mxu0 %v4157
          %v4360 = vpop.f32.mrf.mxu0
          %v4361 = vadd.f32 %v4188, %v4360
          %v4362 = vpop.f32.mrf.mxu0
          %4363 = vmatprep.mubr.f32.mxu0 0.0
          %4364 = vmatmul.mubr.f32.gmra.mxu0 %v4158
          %v4365 = vpop.f32.mrf.mxu0
          %v4366 = vadd.f32 %v4188, %v4365
          %v4367 = vpop.f32.mrf.mxu0
          %4368 = vmatprep.mubr.f32.mxu0 0.0
          %4369 = vmatmul.mubr.f32.gmra.mxu0 %v4159
          %v4370 = vpop.f32.mrf.mxu0
          %v4371 = vadd.f32 %v4188, %v4370
          %v4372 = vpop.f32.mrf.mxu0
          %4373 = vmatprep.mubr.f32.mxu0 0.0
          %4374 = vmatmul.mubr.f32.gmra.mxu0 %v4160
          %v4375 = vpop.f32.mrf.mxu0
          %v4376 = vadd.f32 %v4188, %v4375
          %v4377 = vpop.f32.mrf.mxu0
          %4378 = vmatprep.mubr.f32.mxu0 0.0
          %4379 = vmatmul.mubr.f32.gmra.mxu0 %v4161
          %v4380 = vpop.f32.mrf.mxu0
          %v4381 = vadd.f32 %v4188, %v4380
          %v4382 = vpop.f32.mrf.mxu0
          %4383 = vmatprep.mubr.f32.mxu0 0.0
          %4384 = vmatmul.mubr.f32.gmra.mxu0 %v4162
          %v4385 = vpop.f32.mrf.mxu0
          %v4386 = vadd.f32 %v4188, %v4385
          %v4387 = vpop.f32.mrf.mxu0
          %4388 = vmatprep.mubr.f32.mxu0 0.0
          %4389 = vmatmul.mubr.f32.gmra.mxu0 %v4163
          %v4390 = vpop.f32.mrf.mxu0
          %v4391 = vadd.f32 %v4188, %v4390
          %v4392 = vpop.f32.mrf.mxu0
          %4393 = vmatprep.mubr.f32.mxu0 0.0
          %4394 = vmatmul.mubr.f32.gmra.mxu0 %v4164
          %v4395 = vpop.f32.mrf.mxu0
          %v4396 = vadd.f32 %v4188, %v4395
          %v4397 = vpop.f32.mrf.mxu0
          %4398 = vmatprep.mubr.f32.mxu0 0.0
          %4399 = vmatmul.mubr.f32.gmra.mxu0 %v4165
          %v4400 = vpop.f32.mrf.mxu0
          %v4401 = vadd.f32 %v4188, %v4400
          %v4402 = vpop.f32.mrf.mxu0
          %4403 = vmatprep.mubr.f32.mxu0 0.0
          %4404 = vmatmul.mubr.f32.gmra.mxu0 %v4166
          %v4405 = vpop.f32.mrf.mxu0
          %v4406 = vadd.f32 %v4188, %v4405
          %v4407 = vpop.f32.mrf.mxu0
          %4408 = vmatprep.mubr.f32.mxu0 0.0
          %4409 = vmatmul.mubr.f32.gmra.mxu0 %v4167
          %v4410 = vpop.f32.mrf.mxu0
          %v4411 = vadd.f32 %v4188, %v4410
          %v4412 = vpop.f32.mrf.mxu0
          %4413 = vdwg.mxu0
          %vm4414 = vcmask 23552
          %4415 = vst.msk [vmem:[%s241] sm:$0xff] %vm4414, %v4256
          %4416 = vst.msk [vmem:[%s241 + $0x8] sm:$0xff] %vm4414, %v4261
          %4417 = vst.msk [vmem:[%s241 + $0x10] sm:$0xff] %vm4414, %v4266
          %4418 = vst.msk [vmem:[%s241 + $0x18] sm:$0xff] %vm4414, %v4271
          %4419 = vst.msk [vmem:[%s241 + $0x20] sm:$0xff] %vm4414, %v4276
          %4420 = vst.msk [vmem:[%s241 + $0x28] sm:$0xff] %vm4414, %v4281
          %4421 = vst.msk [vmem:[%s241 + $0x30] sm:$0xff] %vm4414, %v4286
          %4422 = vst.msk [vmem:[%s241 + $0x38] sm:$0xff] %vm4414, %v4291
          %4423 = vst.msk [vmem:[%s241 + $0x40] sm:$0xff] %vm4414, %v4296
          %4424 = vst.msk [vmem:[%s241 + $0x48] sm:$0xff] %vm4414, %v4301
          %4425 = vst.msk [vmem:[%s241 + $0x50] sm:$0xff] %vm4414, %v4306
          %4426 = vst.msk [vmem:[%s241 + $0x58] sm:$0xff] %vm4414, %v4311
          %4427 = vst.msk [vmem:[%s241 + $0x60] sm:$0xff] %vm4414, %v4316
          %4428 = vst.msk [vmem:[%s241 + $0x68] sm:$0xff] %vm4414, %v4321
          %4429 = vst.msk [vmem:[%s241 + $0x70] sm:$0xff] %vm4414, %v4326
          %4430 = vst.msk [vmem:[%s241 + $0x78] sm:$0xff] %vm4414, %v4331
          %4431 = vst.msk [vmem:[%s241 + $0x80] sm:$0xff] %vm4414, %v4336
          %4432 = vst.msk [vmem:[%s241 + $0x88] sm:$0xff] %vm4414, %v4341
          %4433 = vst.msk [vmem:[%s241 + $0x90] sm:$0xff] %vm4414, %v4346
          %4434 = vst.msk [vmem:[%s241 + $0x98] sm:$0xff] %vm4414, %v4351
          %4435 = vst.msk [vmem:[%s241 + $0xa0] sm:$0xff] %vm4414, %v4356
          %4436 = vst.msk [vmem:[%s241 + $0xa8] sm:$0xff] %vm4414, %v4361
          %4437 = vst.msk [vmem:[%s241 + $0xb0] sm:$0xff] %vm4414, %v4366
          %4438 = vst.msk [vmem:[%s241 + $0xb8] sm:$0xff] %vm4414, %v4371
          %4439 = vst.msk [vmem:[%s241 + $0xc0] sm:$0xff] %vm4414, %v4376
          %4440 = vst.msk [vmem:[%s241 + $0xc8] sm:$0xff] %vm4414, %v4381
          %4441 = vst.msk [vmem:[%s241 + $0xd0] sm:$0xff] %vm4414, %v4386
          %4442 = vst.msk [vmem:[%s241 + $0xd8] sm:$0xff] %vm4414, %v4391
          %4443 = vst.msk [vmem:[%s241 + $0xe0] sm:$0xff] %vm4414, %v4396
          %4444 = vst.msk [vmem:[%s241 + $0xe8] sm:$0xff] %vm4414, %v4401
          %4445 = vst.msk [vmem:[%s241 + $0xf0] sm:$0xff] %vm4414, %v4406
          %4446 = vst.msk [vmem:[%s241 + $0xf8] sm:$0xff] %vm4414, %v4411
        $region52: #{autoencoder_forward.1} parent=35 // pred_fallthru
          _
        %s4447 = smul.u32 %s23, %s22
        %s4448 = smul.u32 32, %s4447
        %p4449 = scmp.lt.s32.totalorder %s4448, 95
        %s4450 = scalar_select %p4449, %s4448, 95
        %s4451 = smul.addr %s4450, 8
        %s4452 = scalar_lea.vmem %s4, %s4451
        // Predicated region
        $region53: #{autoencoder_forward.1} parent=35 // pred_check
          %p4453 = pneg %p139
        $region54: #{autoencoder_forward.1} parent=35 // pred_check_branch
          %4455 = sbr.rel (%p4453) target = $region56
        $region55: #{autoencoder_forward.1} parent=35 // pred_region
          %s4456 = smul.u32 %s23, %s22
          %s4457 = smul.u32 32, %s4456
        $region56: #{autoencoder_forward.1} parent=35 // pred_fallthru
          _
        // Predicated region
        $region57: #{autoencoder_forward.1} parent=35 // pred_check
          %p4458 = pneg %p160
        $region58: #{autoencoder_forward.1} parent=35 // pred_check_branch
          %4460 = sbr.rel (%p4458) target = $region60
        $region59: #{autoencoder_forward.1} parent=35 // pred_region
          %s4462 = ssub.s32 16, 16
          %4463 = vsyncadd [#allocation5], %s4462
          %s4465 = sshll.u32 [#allocation4], 4
          %s4466 = int_to_ptr.vmem [resolvable:$true] %s4465
          %4468 = dma.vmem_to_hbm [thread:$0]  %s4466, 16, %s5, [#allocation5]
        $region60: #{autoencoder_forward.1} parent=35 // pred_fallthru
          _
        // Predicated region
        $region61: #{autoencoder_forward.1} parent=35 // pred_check
          %p4469 = pneg %p160
        $region62: #{autoencoder_forward.1} parent=35 // pred_check_branch
          %4471 = sbr.rel (%p4469) target = $region64
        $region63: #{autoencoder_forward.1} parent=35 // pred_region
          %4472 = dma.done [#allocation5], 16
        $region64: #{autoencoder_forward.1} parent=35 // pred_fallthru
          _
      $region36: #{autoencoder_forward.1} parent=5 // pred_fallthru
        _
      %p4473 = scmp.le.s32.totalorder 2, %s13
      // Predicated region
      $region65: #{autoencoder_forward.1} parent=5 // pred_check
        %p4474 = pneg %p4473
      $region66: #{autoencoder_forward.1} parent=5 // pred_check_branch
        %4476 = sbr.rel (%p4474) target = $region68
      $region67: #{autoencoder_forward.1} parent=5 // pred_region
        %s4477 = ssub.s32 %s13, 2
        // Predicated region
        $region69: #{autoencoder_forward.1} parent=67 // pred_check
          %p4478 = pneg %p145
        $region70: #{autoencoder_forward.1} parent=67 // pred_check_branch
          %4480 = sbr.rel (%p4478) target = $region72
        $region71: #{autoencoder_forward.1} parent=67 // pred_region
          %s4481 = smul.u32 %s25, %s24
          %s4482 = smul.u32 32, %s4481
          %p4483 = scmp.lt.s32.totalorder %s4482, 95
          %s4484 = scalar_select %p4483, %s4482, 95
          %s4485 = smul.addr %s4484, 8
          %s4486 = scalar_lea.vmem %s4, %s4485
        $region72: #{autoencoder_forward.1} parent=67 // pred_fallthru
          _
      $region68: #{autoencoder_forward.1} parent=5 // pred_fallthru
        _
    $region6: #{autoencoder_forward.1} parent=1 // loop_footer
      %s17 = sadd.s32 1, %s13
    $region7: #{autoencoder_forward.1} parent=1 // loop_footer_branch
      %12 = sbr.rel target = $region3
    $region8: #{autoencoder_forward.1} parent=1 // loop_exit
      _
    %4487 = vsyncpa [#allocation5], 1
    %s4488 = scalar_lea.sflag [#allocation5], 1
    %4489 = vsyncpa %s4488, 1

</llo_original>
